<compile_context>
chip_gen: v5e
topology: v5e:2x2
jax: 0.10.0
libtpu: 0.0.40
codegen_flags: <defaults>
</compile_context>

<pallas_src>
import functools

import numpy as np
import jax
import jax.numpy as jnp
from jax import lax
from jax.experimental import pallas as pl
from jax.experimental.pallas import tpu as pltpu


# ------------------------------ Pallas kernel --------------------------------

def _dot(a, b):
    # Single-pass bf16 MXU matmul with f32 accumulation (DEFAULT precision).
    return jnp.dot(a, b, preferred_element_type=jnp.float32)


def _lenet_kernel(xe_ref, xo_ref,
                  w1_ref, b1_ref, cp1e_ref, cp1o_ref,
                  w2_ref, b2_ref, cp2e_ref, cp2o_ref,
                  rf_ref, w1p_ref, bf1_ref, wf2_ref, bf2_ref, wf3_ref, bf3_ref,
                  o_ref):
    """Fused LeNet forward for one batch tile of TB samples.

    Activation rows are blocks of 14 rows per sample (the pool-1 grid).  The
    conv2 / pool2 stages keep that height and simply leave the tail rows of
    each sample's block as don't-care values which the final flatten gather
    never reads.
    """
    # conv1 (stacked-K im2row, one matmul per output-row parity) + ReLU.
    c1e = jnp.maximum(_dot(xe_ref[...], w1_ref[...]) + b1_ref[...], 0.0)
    c1o = jnp.maximum(_dot(xo_ref[...], w1_ref[...]) + b1_ref[...], 0.0)
    # 2x2 max-pool: rows are a pure elementwise max, columns are tiny 0/1
    # matmuls (not batch-scaled).  s2 lanes = ic*14 + w2, padded to 128.
    rp1 = jnp.maximum(c1e, c1o)                                    # [H, 168]
    s2 = jnp.maximum(_dot(rp1, cp1e_ref[...]),
                     _dot(rp1, cp1o_ref[...]))                     # [H, 128]

    h = s2.shape[0]                                                # H = TB*14
    # conv2: the 5 kernel-row windows are static sublane slices of s2,
    # concatenated on 128-aligned lanes -> ONE K=640 matmul (MXU-internal
    # accumulation instead of 4 full-width VPU adds).
    s2k = jnp.concatenate([s2[i:i + h - 4, :] for i in range(5)], axis=1)
    c3 = jnp.maximum(_dot(s2k, w2_ref[...]) + b2_ref[...], 0.0)    # [H-4, 160]
    # 2x2 max-pool: row pairs via a shift-by-one max, columns via 0/1 matmuls.
    rp2 = jnp.maximum(c3[0:h - 5, :], c3[1:h - 4, :])              # [H-5, 160]
    s4 = jnp.maximum(_dot(rp2, cp2e_ref[...]),
                     _dot(rp2, cp2o_ref[...]))                     # [H-5, 128]

    # flatten: gather pooled row r of every sample (small selector matmuls at
    # the narrowest point), lane-concatenate, then fc1 as one stacked-K matmul.
    g = jnp.concatenate([_dot(rf_ref[r], s4) for r in range(5)], axis=1)  # [TB, 640]
    f5 = jnp.maximum(_dot(g, w1p_ref[...]) + bf1_ref[...], 0.0)           # [TB, 120]
    f6 = jnp.maximum(_dot(f5, wf2_ref[...]) + bf2_ref[...], 0.0)          # [TB, 84]
    o_ref[...] = _dot(f6, wf3_ref[...]) + bf3_ref[...]                    # [TB, 128]


# -------------------- static 0/1 selection / band helpers --------------------

@functools.lru_cache(maxsize=None)
def _selection_constants(tb):
    """Static f32 constants for a batch tile of `tb` samples."""
    f32 = np.float32

    def pad_cols(a, lanes=128):
        return np.pad(a, ((0, 0), (0, lanes - a.shape[1])))

    # Column (width) 2x2-pool selectors, block diagonal per channel, padded to
    # 128 lanes so activations stay one lane-vreg wide.
    row_e28 = np.eye(28, dtype=f32)[0::2]             # [14, 28]
    row_o28 = np.eye(28, dtype=f32)[1::2]
    row_e10 = np.eye(10, dtype=f32)[0::2]             # [5, 10]
    row_o10 = np.eye(10, dtype=f32)[1::2]
    cp1e = pad_cols(np.kron(np.eye(6, dtype=f32), row_e28.T))    # [168, 128]
    cp1o = pad_cols(np.kron(np.eye(6, dtype=f32), row_o28.T))
    cp2e = pad_cols(np.kron(np.eye(16, dtype=f32), row_e10.T))   # [160, 128]
    cp2o = pad_cols(np.kron(np.eye(16, dtype=f32), row_o10.T))

    # Flatten gather: RF[r][n, n*14 + 2r] = 1 (pooled row r of sample n).
    h5 = tb * 14 - 5
    rf = np.zeros((5, tb, h5), dtype=f32)
    for r in range(5):
        for n in range(tb):
            rf[r, n, n * 14 + 2 * r] = 1.0

    # Band matrices used to Toeplitz-expand conv weights along the width axis.
    e1 = np.stack([np.eye(32, 28, k=-j, dtype=f32) for j in range(5)])   # [5, 32, 28]
    e2 = np.stack([np.eye(14, 10, k=-j, dtype=f32) for j in range(5)])   # [5, 14, 10]
    return dict(cp1e=cp1e, cp1o=cp1o, cp2e=cp2e, cp2o=cp2o, rf=rf, e1=e1, e2=e2)


def _prepare_weights(params, consts):
    """Expand PyTorch-layout weights into the stacked-K slabs the kernel uses."""
    hi = lax.Precision.HIGHEST   # exact one-time Toeplitz expansion (tiny)
    # conv1 -> [160, 168]:  W1[i*32 + w, oc*28 + ow] = conv1_w[oc, 0, i, w - ow]
    w1 = jnp.einsum('cij,jwo->iwco', params["conv1_w"][:, 0], consts["e1"],
                    precision=hi).reshape(5 * 32, 6 * 28)
    b1 = jnp.repeat(params["conv1_b"], 28)[None, :]
    # conv2 -> [640, 160]: W2[i*128 + ic*14 + w, oc*10 + ow] = conv2_w[oc, ic, i, w - ow]
    w2 = jnp.einsum('ocij,jwk->icwok', params["conv2_w"], consts["e2"],
                    precision=hi).reshape(5, 6 * 14, 16 * 10)
    w2 = jnp.pad(w2, ((0, 0), (0, 128 - 84), (0, 0))).reshape(5 * 128, 160)
    b2 = jnp.repeat(params["conv2_b"], 10)[None, :]
    # fc1 -> [640, 120]: row r*128 + oc*5 + c multiplies s4[n, oc, r, c]
    # (== torch.flatten(NCHW, 1) index oc*25 + r*5 + c).
    w1p = jnp.transpose(params["fc1_w"].reshape(120, 16, 5, 5),
                        (2, 1, 3, 0)).reshape(5, 80, 120)
    w1p = jnp.pad(w1p, ((0, 0), (0, 128 - 80), (0, 0))).reshape(5 * 128, 120)
    # fc3 padded to 128 output lanes -> unmasked lane-dense store.
    wf3 = jnp.pad(params["fc3_w"].T, ((0, 0), (0, 128 - 10)))
    bf3 = jnp.pad(params["fc3_b"], (0, 128 - 10))[None, :]
    return dict(w1=w1, b1=b1, w2=w2, b2=b2, w1p=w1p,
                bf1=params["fc1_b"][None, :],
                wf2=params["fc2_w"].T, bf2=params["fc2_b"][None, :],
                wf3=wf3, bf3=bf3)


# --------------------------------- wrapper ------------------------------------

def lenet_forward(x_nchw, params, *, block_batch=32):
    n = x_nchw.shape[0]
    assert x_nchw.shape[1:] == (1, 32, 32), x_nchw.shape
    # Batch tile: multiples of 8 keep every block dim (8,128)-friendly.
    tb = int(min(block_batch, max(8, -(-n // 8) * 8)))
    assert tb % 8 == 0
    npad = -(-n // tb) * tb

    consts = _selection_constants(tb)
    w = _prepare_weights(params, consts)

    x = x_nchw.reshape(n, 32, 32).astype(jnp.float32)
    if npad != n:
        x = jnp.pad(x, ((0, npad - n), (0, 0), (0, 0)))

    # Lane-dense im2row for conv1, split by conv-output-row parity:
    #   xe[n*14 + r, i*32 + w] = x[n, 2r + i, w]      (even output rows)
    #   xo[n*14 + r, i*32 + w] = x[n, 2r + 1 + i, w]  (odd  output rows)
    xs = jnp.stack([x[:, i:i + 28, :] for i in range(5)], axis=2)  # [npad,28,5,32]
    xe = xs[:, 0::2].reshape(npad * 14, 160)
    xo = xs[:, 1::2].reshape(npad * 14, 160)

    # Order must match the kernel signature (after xe_ref/xo_ref).
    ordered = [w["w1"], w["b1"], consts["cp1e"], consts["cp1o"],
               w["w2"], w["b2"], consts["cp2e"], consts["cp2o"],
               consts["rf"], w["w1p"], w["bf1"], w["wf2"], w["bf2"],
               w["wf3"], w["bf3"]]

    def const_spec(a):
        nd = np.ndim(a)
        # Constant index_map -> DMA'd once, VMEM-resident across the grid.
        return pl.BlockSpec(tuple(np.shape(a)), lambda *_, _nd=nd: (0,) * _nd)

    in_specs = [pl.BlockSpec((tb * 14, 160), lambda b: (b, 0)),
                pl.BlockSpec((tb * 14, 160), lambda b: (b, 0))]
    in_specs += [const_spec(a) for a in ordered]

    steps = npad // tb
    h = tb * 14
    mm = lambda m, k, o: 2 * m * k * o
    flops = steps * (
        2 * mm(h, 160, 168) + 2 * mm(h, 168, 128)
        + mm(h - 4, 640, 160) + 2 * mm(h - 5, 160, 128)
        + 5 * mm(tb, h - 5, 128) + mm(tb, 640, 120)
        + mm(tb, 120, 84) + mm(tb, 84, 128))
    bytes_accessed = 4 * (xe.size + xo.size + npad * 128
                          + sum(int(np.size(a)) for a in ordered))

    out = pl.pallas_call(
        _lenet_kernel,
        out_shape=jax.ShapeDtypeStruct((npad, 128), jnp.float32),
        grid=(steps,),
        in_specs=in_specs,
        out_specs=pl.BlockSpec((tb, 128), lambda b: (b, 0)),
        compiler_params=pltpu.CompilerParams(
            dimension_semantics=("parallel",),
            vmem_limit_bytes=32 * 1024 * 1024),
        cost_estimate=pl.CostEstimate(flops=int(flops), transcendentals=0,
                                      bytes_accessed=int(bytes_accessed)),
    )(xe, xo, *ordered)
    return out[:n, :10]


# -------------------------- plain-JAX reference -------------------------------

def lenet_reference(x_nchw, params):
    hi = lax.Precision.HIGHEST
    n = x_nchw.shape[0]
    c1 = lax.conv_general_dilated(x_nchw, params["conv1_w"], (1, 1), 'VALID',
                                  dimension_numbers=('NCHW', 'OIHW', 'NCHW'),
                                  precision=hi)
    c1 = jax.nn.relu(c1 + params["conv1_b"][None, :, None, None])
    s2 = c1.reshape(n, 6, 14, 2, 14, 2).max(axis=(3, 5))
    c3 = lax.conv_general_dilated(s2, params["conv2_w"], (1, 1), 'VALID',
                                  dimension_numbers=('NCHW', 'OIHW', 'NCHW'),
                                  precision=hi)
    c3 = jax.nn.relu(c3 + params["conv2_b"][None, :, None, None])
    s4 = c3.reshape(n, 16, 5, 2, 5, 2).max(axis=(3, 5))
    flat = s4.reshape(n, 400)
    h = jax.nn.relu(jnp.dot(flat, params["fc1_w"].T, precision=hi) + params["fc1_b"])
    h = jax.nn.relu(jnp.dot(h, params["fc2_w"].T, precision=hi) + params["fc2_b"])
    return jnp.dot(h, params["fc3_w"].T, precision=hi) + params["fc3_b"]


# --------------------------- deterministic params ------------------------------

def init_params(key):
    def uni(k, shape, fan_in):
        bound = 1.0 / jnp.sqrt(float(fan_in))
        return jax.random.uniform(k, shape, jnp.float32, -bound, bound)

    ks = jax.random.split(key, 10)
    return {
        "conv1_w": uni(ks[0], (6, 1, 5, 5), 1 * 5 * 5),
        "conv1_b": uni(ks[1], (6,), 1 * 5 * 5),
        "conv2_w": uni(ks[2], (16, 6, 5, 5), 6 * 5 * 5),
        "conv2_b": uni(ks[3], (16,), 6 * 5 * 5),
        "fc1_w":   uni(ks[4], (120, 400), 400),
        "fc1_b":   uni(ks[5], (120,), 400),
        "fc2_w":   uni(ks[6], (84, 120), 120),
        "fc2_b":   uni(ks[7], (84,), 120),
        "fc3_w":   uni(ks[8], (10, 84), 84),
        "fc3_b":   uni(ks[9], (10,), 84),
    }


# ----------------------------------- main --------------------------------------

if __name__ == "__main__":
    # LeNet's fc1 (16*5*5 inputs) implies a 1x32x32 input image.
    x = jax.random.normal(jax.random.PRNGKey(0), (2, 1, 32, 32), dtype=jnp.float32)
    params = init_params(jax.random.PRNGKey(42))

    out = jax.block_until_ready(jax.jit(lenet_forward)(x, params))
    assert out.shape == (2, 10) and out.dtype == jnp.float32

    ref = jax.block_until_ready(jax.jit(lenet_reference)(x, params))
    np.testing.assert_allclose(np.asarray(out), np.asarray(ref),
                               atol=2e-2, rtol=2e-2)
    print("KERNEL_OK")
</pallas_src>

<mosaic_0001>
module attributes {stable_mosaic.version = 11 : i64} {
  func.func @_lenet_kernel(%arg0: i32, %arg1: memref<112x160xf32, #tpu.memory_space<vmem>>, %arg2: memref<112x160xf32, #tpu.memory_space<vmem>>, %arg3: memref<160x168xf32, #tpu.memory_space<vmem>>, %arg4: memref<1x168xf32, #tpu.memory_space<vmem>>, %arg5: memref<168x128xf32, #tpu.memory_space<vmem>>, %arg6: memref<168x128xf32, #tpu.memory_space<vmem>>, %arg7: memref<640x160xf32, #tpu.memory_space<vmem>>, %arg8: memref<1x160xf32, #tpu.memory_space<vmem>>, %arg9: memref<160x128xf32, #tpu.memory_space<vmem>>, %arg10: memref<160x128xf32, #tpu.memory_space<vmem>>, %arg11: memref<5x8x107xf32, #tpu.memory_space<vmem>>, %arg12: memref<640x120xf32, #tpu.memory_space<vmem>>, %arg13: memref<1x120xf32, #tpu.memory_space<vmem>>, %arg14: memref<120x84xf32, #tpu.memory_space<vmem>>, %arg15: memref<1x84xf32, #tpu.memory_space<vmem>>, %arg16: memref<84x128xf32, #tpu.memory_space<vmem>>, %arg17: memref<1x128xf32, #tpu.memory_space<vmem>>, %arg18: memref<8x128xf32, #tpu.memory_space<vmem>>) attributes {dimension_semantics = [#tpu.dimension_semantics<parallel>], iteration_bounds = array<i64: 1>, scalar_prefetch = 0 : i64, scratch_operands = 0 : i64, tpu.core_type = #tpu.core_type<tc>, window_params = [{transform_indices = @transform_0, window_bounds = array<i64: 112, 160>}, {transform_indices = @transform_1, window_bounds = array<i64: 112, 160>}, {pipeline_mode = #tpu.pipeline_mode<synchronous>, transform_indices = @transform_2, window_bounds = array<i64: 160, 168>}, {pipeline_mode = #tpu.pipeline_mode<synchronous>, transform_indices = @transform_3, window_bounds = array<i64: 1, 168>}, {pipeline_mode = #tpu.pipeline_mode<synchronous>, transform_indices = @transform_4, window_bounds = array<i64: 168, 128>}, {pipeline_mode = #tpu.pipeline_mode<synchronous>, transform_indices = @transform_5, window_bounds = array<i64: 168, 128>}, {pipeline_mode = #tpu.pipeline_mode<synchronous>, transform_indices = @transform_6, window_bounds = array<i64: 640, 160>}, {pipeline_mode = #tpu.pipeline_mode<synchronous>, transform_indices = @transform_7, window_bounds = array<i64: 1, 160>}, {pipeline_mode = #tpu.pipeline_mode<synchronous>, transform_indices = @transform_8, window_bounds = array<i64: 160, 128>}, {pipeline_mode = #tpu.pipeline_mode<synchronous>, transform_indices = @transform_9, window_bounds = array<i64: 160, 128>}, {pipeline_mode = #tpu.pipeline_mode<synchronous>, transform_indices = @transform_10, window_bounds = array<i64: 5, 8, 107>}, {pipeline_mode = #tpu.pipeline_mode<synchronous>, transform_indices = @transform_11, window_bounds = array<i64: 640, 120>}, {pipeline_mode = #tpu.pipeline_mode<synchronous>, transform_indices = @transform_12, window_bounds = array<i64: 1, 120>}, {pipeline_mode = #tpu.pipeline_mode<synchronous>, transform_indices = @transform_13, window_bounds = array<i64: 120, 84>}, {pipeline_mode = #tpu.pipeline_mode<synchronous>, transform_indices = @transform_14, window_bounds = array<i64: 1, 84>}, {pipeline_mode = #tpu.pipeline_mode<synchronous>, transform_indices = @transform_15, window_bounds = array<i64: 84, 128>}, {pipeline_mode = #tpu.pipeline_mode<synchronous>, transform_indices = @transform_16, window_bounds = array<i64: 1, 128>}, {transform_indices = @transform_17, window_bounds = array<i64: 8, 128>}]} {
    %c0 = arith.constant 0 : index
    %c0_0 = arith.constant 0 : index
    %0 = vector.load %arg1[%c0, %c0_0] : memref<112x160xf32, #tpu.memory_space<vmem>>, vector<112x160xf32>
    %c0_1 = arith.constant 0 : index
    %c0_2 = arith.constant 0 : index
    %1 = vector.load %arg3[%c0_1, %c0_2] : memref<160x168xf32, #tpu.memory_space<vmem>>, vector<160x168xf32>
    %cst = arith.constant dense<0.000000e+00> : vector<112x168xf32>
    %2 = tpu.matmul %0, %1, %cst {dimension_numbers = #tpu.dot_dimension_numbers<[1], [0], [0], [1], [0, 0, 1, 1], [], []>} : vector<112x160xf32>, vector<160x168xf32>, vector<112x168xf32> -> vector<112x168xf32>
    %c0_3 = arith.constant 0 : index
    %c0_4 = arith.constant 0 : index
    %3 = vector.load %arg4[%c0_3, %c0_4] : memref<1x168xf32, #tpu.memory_space<vmem>>, vector<1x168xf32>
    %4 = vector.broadcast %3 : vector<1x168xf32> to vector<112x168xf32>
    %5 = arith.addf %2, %4 : vector<112x168xf32>
    %cst_5 = arith.constant 0.000000e+00 : f32
    %6 = vector.broadcast %cst_5 : f32 to vector<112x168xf32>
    %7 = arith.maximumf %5, %6 : vector<112x168xf32>
    %c0_6 = arith.constant 0 : index
    %c0_7 = arith.constant 0 : index
    %8 = vector.load %arg2[%c0_6, %c0_7] : memref<112x160xf32, #tpu.memory_space<vmem>>, vector<112x160xf32>
    %c0_8 = arith.constant 0 : index
    %c0_9 = arith.constant 0 : index
    %9 = vector.load %arg3[%c0_8, %c0_9] : memref<160x168xf32, #tpu.memory_space<vmem>>, vector<160x168xf32>
    %cst_10 = arith.constant dense<0.000000e+00> : vector<112x168xf32>
    %10 = tpu.matmul %8, %9, %cst_10 {dimension_numbers = #tpu.dot_dimension_numbers<[1], [0], [0], [1], [0, 0, 1, 1], [], []>} : vector<112x160xf32>, vector<160x168xf32>, vector<112x168xf32> -> vector<112x168xf32>
    %c0_11 = arith.constant 0 : index
    %c0_12 = arith.constant 0 : index
    %11 = vector.load %arg4[%c0_11, %c0_12] : memref<1x168xf32, #tpu.memory_space<vmem>>, vector<1x168xf32>
    %12 = vector.broadcast %11 : vector<1x168xf32> to vector<112x168xf32>
    %13 = arith.addf %10, %12 : vector<112x168xf32>
    %cst_13 = arith.constant 0.000000e+00 : f32
    %14 = vector.broadcast %cst_13 : f32 to vector<112x168xf32>
    %15 = arith.maximumf %13, %14 : vector<112x168xf32>
    %16 = arith.maximumf %7, %15 : vector<112x168xf32>
    %c0_14 = arith.constant 0 : index
    %c0_15 = arith.constant 0 : index
    %17 = vector.load %arg5[%c0_14, %c0_15] : memref<168x128xf32, #tpu.memory_space<vmem>>, vector<168x128xf32>
    %cst_16 = arith.constant dense<0.000000e+00> : vector<112x128xf32>
    %18 = tpu.matmul %16, %17, %cst_16 {dimension_numbers = #tpu.dot_dimension_numbers<[1], [0], [0], [1], [0, 0, 1, 1], [], []>} : vector<112x168xf32>, vector<168x128xf32>, vector<112x128xf32> -> vector<112x128xf32>
    %c0_17 = arith.constant 0 : index
    %c0_18 = arith.constant 0 : index
    %19 = vector.load %arg6[%c0_17, %c0_18] : memref<168x128xf32, #tpu.memory_space<vmem>>, vector<168x128xf32>
    %cst_19 = arith.constant dense<0.000000e+00> : vector<112x128xf32>
    %20 = tpu.matmul %16, %19, %cst_19 {dimension_numbers = #tpu.dot_dimension_numbers<[1], [0], [0], [1], [0, 0, 1, 1], [], []>} : vector<112x168xf32>, vector<168x128xf32>, vector<112x128xf32> -> vector<112x128xf32>
    %21 = arith.maximumf %18, %20 : vector<112x128xf32>
    %22 = vector.extract_strided_slice %21 {offsets = [0, 0], sizes = [108, 128], strides = [1, 1]} : vector<112x128xf32> to vector<108x128xf32>
    %23 = vector.extract_strided_slice %21 {offsets = [1, 0], sizes = [108, 128], strides = [1, 1]} : vector<112x128xf32> to vector<108x128xf32>
    %24 = vector.extract_strided_slice %21 {offsets = [2, 0], sizes = [108, 128], strides = [1, 1]} : vector<112x128xf32> to vector<108x128xf32>
    %25 = vector.extract_strided_slice %21 {offsets = [3, 0], sizes = [108, 128], strides = [1, 1]} : vector<112x128xf32> to vector<108x128xf32>
    %26 = vector.extract_strided_slice %21 {offsets = [4, 0], sizes = [108, 128], strides = [1, 1]} : vector<112x128xf32> to vector<108x128xf32>
    %27 = tpu.concatenate %22, %23, %24, %25, %26 in 1 : vector<108x128xf32>, vector<108x128xf32>, vector<108x128xf32>, vector<108x128xf32>, vector<108x128xf32> -> vector<108x640xf32>
    %c0_20 = arith.constant 0 : index
    %c0_21 = arith.constant 0 : index
    %28 = vector.load %arg7[%c0_20, %c0_21] : memref<640x160xf32, #tpu.memory_space<vmem>>, vector<640x160xf32>
    %cst_22 = arith.constant dense<0.000000e+00> : vector<108x160xf32>
    %29 = tpu.matmul %27, %28, %cst_22 {dimension_numbers = #tpu.dot_dimension_numbers<[1], [0], [0], [1], [0, 0, 1, 1], [], []>} : vector<108x640xf32>, vector<640x160xf32>, vector<108x160xf32> -> vector<108x160xf32>
    %c0_23 = arith.constant 0 : index
    %c0_24 = arith.constant 0 : index
    %30 = vector.load %arg8[%c0_23, %c0_24] : memref<1x160xf32, #tpu.memory_space<vmem>>, vector<1x160xf32>
    %31 = vector.broadcast %30 : vector<1x160xf32> to vector<108x160xf32>
    %32 = arith.addf %29, %31 : vector<108x160xf32>
    %cst_25 = arith.constant 0.000000e+00 : f32
    %33 = vector.broadcast %cst_25 : f32 to vector<108x160xf32>
    %34 = arith.maximumf %32, %33 : vector<108x160xf32>
    %35 = vector.extract_strided_slice %34 {offsets = [0, 0], sizes = [107, 160], strides = [1, 1]} : vector<108x160xf32> to vector<107x160xf32>
    %36 = vector.extract_strided_slice %34 {offsets = [1, 0], sizes = [107, 160], strides = [1, 1]} : vector<108x160xf32> to vector<107x160xf32>
    %37 = arith.maximumf %35, %36 : vector<107x160xf32>
    %c0_26 = arith.constant 0 : index
    %c0_27 = arith.constant 0 : index
    %38 = vector.load %arg9[%c0_26, %c0_27] : memref<160x128xf32, #tpu.memory_space<vmem>>, vector<160x128xf32>
    %cst_28 = arith.constant dense<0.000000e+00> : vector<107x128xf32>
    %39 = tpu.matmul %37, %38, %cst_28 {dimension_numbers = #tpu.dot_dimension_numbers<[1], [0], [0], [1], [0, 0, 1, 1], [], []>} : vector<107x160xf32>, vector<160x128xf32>, vector<107x128xf32> -> vector<107x128xf32>
    %c0_29 = arith.constant 0 : index
    %c0_30 = arith.constant 0 : index
    %40 = vector.load %arg10[%c0_29, %c0_30] : memref<160x128xf32, #tpu.memory_space<vmem>>, vector<160x128xf32>
    %cst_31 = arith.constant dense<0.000000e+00> : vector<107x128xf32>
    %41 = tpu.matmul %37, %40, %cst_31 {dimension_numbers = #tpu.dot_dimension_numbers<[1], [0], [0], [1], [0, 0, 1, 1], [], []>} : vector<107x160xf32>, vector<160x128xf32>, vector<107x128xf32> -> vector<107x128xf32>
    %42 = arith.maximumf %39, %41 : vector<107x128xf32>
    %c0_32 = arith.constant 0 : index
    %c0_33 = arith.constant 0 : index
    %c0_34 = arith.constant 0 : index
    %43 = vector.load %arg11[%c0_32, %c0_33, %c0_34] : memref<5x8x107xf32, #tpu.memory_space<vmem>>, vector<1x8x107xf32>
    %44 = vector.shape_cast %43 : vector<1x8x107xf32> to vector<8x107xf32>
    %cst_35 = arith.constant dense<0.000000e+00> : vector<8x128xf32>
    %45 = tpu.matmul %44, %42, %cst_35 {dimension_numbers = #tpu.dot_dimension_numbers<[1], [0], [0], [1], [0, 0, 1, 1], [], []>} : vector<8x107xf32>, vector<107x128xf32>, vector<8x128xf32> -> vector<8x128xf32>
    %c1 = arith.constant 1 : index
    %c0_36 = arith.constant 0 : index
    %c0_37 = arith.constant 0 : index
    %46 = vector.load %arg11[%c1, %c0_36, %c0_37] : memref<5x8x107xf32, #tpu.memory_space<vmem>>, vector<1x8x107xf32>
    %47 = vector.shape_cast %46 : vector<1x8x107xf32> to vector<8x107xf32>
    %cst_38 = arith.constant dense<0.000000e+00> : vector<8x128xf32>
    %48 = tpu.matmul %47, %42, %cst_38 {dimension_numbers = #tpu.dot_dimension_numbers<[1], [0], [0], [1], [0, 0, 1, 1], [], []>} : vector<8x107xf32>, vector<107x128xf32>, vector<8x128xf32> -> vector<8x128xf32>
    %c2 = arith.constant 2 : index
    %c0_39 = arith.constant 0 : index
    %c0_40 = arith.constant 0 : index
    %49 = vector.load %arg11[%c2, %c0_39, %c0_40] : memref<5x8x107xf32, #tpu.memory_space<vmem>>, vector<1x8x107xf32>
    %50 = vector.shape_cast %49 : vector<1x8x107xf32> to vector<8x107xf32>
    %cst_41 = arith.constant dense<0.000000e+00> : vector<8x128xf32>
    %51 = tpu.matmul %50, %42, %cst_41 {dimension_numbers = #tpu.dot_dimension_numbers<[1], [0], [0], [1], [0, 0, 1, 1], [], []>} : vector<8x107xf32>, vector<107x128xf32>, vector<8x128xf32> -> vector<8x128xf32>
    %c3 = arith.constant 3 : index
    %c0_42 = arith.constant 0 : index
    %c0_43 = arith.constant 0 : index
    %52 = vector.load %arg11[%c3, %c0_42, %c0_43] : memref<5x8x107xf32, #tpu.memory_space<vmem>>, vector<1x8x107xf32>
    %53 = vector.shape_cast %52 : vector<1x8x107xf32> to vector<8x107xf32>
    %cst_44 = arith.constant dense<0.000000e+00> : vector<8x128xf32>
    %54 = tpu.matmul %53, %42, %cst_44 {dimension_numbers = #tpu.dot_dimension_numbers<[1], [0], [0], [1], [0, 0, 1, 1], [], []>} : vector<8x107xf32>, vector<107x128xf32>, vector<8x128xf32> -> vector<8x128xf32>
    %c4 = arith.constant 4 : index
    %c0_45 = arith.constant 0 : index
    %c0_46 = arith.constant 0 : index
    %55 = vector.load %arg11[%c4, %c0_45, %c0_46] : memref<5x8x107xf32, #tpu.memory_space<vmem>>, vector<1x8x107xf32>
    %56 = vector.shape_cast %55 : vector<1x8x107xf32> to vector<8x107xf32>
    %cst_47 = arith.constant dense<0.000000e+00> : vector<8x128xf32>
    %57 = tpu.matmul %56, %42, %cst_47 {dimension_numbers = #tpu.dot_dimension_numbers<[1], [0], [0], [1], [0, 0, 1, 1], [], []>} : vector<8x107xf32>, vector<107x128xf32>, vector<8x128xf32> -> vector<8x128xf32>
    %58 = tpu.concatenate %45, %48, %51, %54, %57 in 1 : vector<8x128xf32>, vector<8x128xf32>, vector<8x128xf32>, vector<8x128xf32>, vector<8x128xf32> -> vector<8x640xf32>
    %c0_48 = arith.constant 0 : index
    %c0_49 = arith.constant 0 : index
    %59 = vector.load %arg12[%c0_48, %c0_49] : memref<640x120xf32, #tpu.memory_space<vmem>>, vector<640x120xf32>
    %cst_50 = arith.constant dense<0.000000e+00> : vector<8x120xf32>
    %60 = tpu.matmul %58, %59, %cst_50 {dimension_numbers = #tpu.dot_dimension_numbers<[1], [0], [0], [1], [0, 0, 1, 1], [], []>} : vector<8x640xf32>, vector<640x120xf32>, vector<8x120xf32> -> vector<8x120xf32>
    %c0_51 = arith.constant 0 : index
    %c0_52 = arith.constant 0 : index
    %61 = vector.load %arg13[%c0_51, %c0_52] : memref<1x120xf32, #tpu.memory_space<vmem>>, vector<1x120xf32>
    %62 = vector.broadcast %61 : vector<1x120xf32> to vector<8x120xf32>
    %63 = arith.addf %60, %62 : vector<8x120xf32>
    %cst_53 = arith.constant 0.000000e+00 : f32
    %64 = vector.broadcast %cst_53 : f32 to vector<8x120xf32>
    %65 = arith.maximumf %63, %64 : vector<8x120xf32>
    %c0_54 = arith.constant 0 : index
    %c0_55 = arith.constant 0 : index
    %66 = vector.load %arg14[%c0_54, %c0_55] : memref<120x84xf32, #tpu.memory_space<vmem>>, vector<120x84xf32>
    %cst_56 = arith.constant dense<0.000000e+00> : vector<8x84xf32>
    %67 = tpu.matmul %65, %66, %cst_56 {dimension_numbers = #tpu.dot_dimension_numbers<[1], [0], [0], [1], [0, 0, 1, 1], [], []>} : vector<8x120xf32>, vector<120x84xf32>, vector<8x84xf32> -> vector<8x84xf32>
    %c0_57 = arith.constant 0 : index
    %c0_58 = arith.constant 0 : index
    %68 = vector.load %arg15[%c0_57, %c0_58] : memref<1x84xf32, #tpu.memory_space<vmem>>, vector<1x84xf32>
    %69 = vector.broadcast %68 : vector<1x84xf32> to vector<8x84xf32>
    %70 = arith.addf %67, %69 : vector<8x84xf32>
    %cst_59 = arith.constant 0.000000e+00 : f32
    %71 = vector.broadcast %cst_59 : f32 to vector<8x84xf32>
    %72 = arith.maximumf %70, %71 : vector<8x84xf32>
    %c0_60 = arith.constant 0 : index
    %c0_61 = arith.constant 0 : index
    %73 = vector.load %arg16[%c0_60, %c0_61] : memref<84x128xf32, #tpu.memory_space<vmem>>, vector<84x128xf32>
    %cst_62 = arith.constant dense<0.000000e+00> : vector<8x128xf32>
    %74 = tpu.matmul %72, %73, %cst_62 {dimension_numbers = #tpu.dot_dimension_numbers<[1], [0], [0], [1], [0, 0, 1, 1], [], []>} : vector<8x84xf32>, vector<84x128xf32>, vector<8x128xf32> -> vector<8x128xf32>
    %c0_63 = arith.constant 0 : index
    %c0_64 = arith.constant 0 : index
    %75 = vector.load %arg17[%c0_63, %c0_64] : memref<1x128xf32, #tpu.memory_space<vmem>>, vector<1x128xf32>
    %76 = vector.broadcast %75 : vector<1x128xf32> to vector<8x128xf32>
    %77 = arith.addf %74, %76 : vector<8x128xf32>
    %c0_65 = arith.constant 0 : index
    %c0_66 = arith.constant 0 : index
    %78 = vector.load %arg18[%c0_65, %c0_66] : memref<8x128xf32, #tpu.memory_space<vmem>>, vector<8x128xf32>
    tpu.vector_store %arg18[%c0_65, %c0_66], %77 {strides = array<i32>} : memref<8x128xf32, #tpu.memory_space<vmem>>, vector<8x128xf32>,
    return
  }
  func.func @transform_0(%arg0: i32) -> (i32, i32) {
    %c0_i32 = arith.constant 0 : i32
    %c0_i32_0 = arith.constant 0 : i32
    return %arg0, %c0_i32 : i32, i32
  }
  func.func @transform_1(%arg0: i32) -> (i32, i32) {
    %c0_i32 = arith.constant 0 : i32
    %c0_i32_0 = arith.constant 0 : i32
    return %arg0, %c0_i32 : i32, i32
  }
  func.func @transform_2(%arg0: i32) -> (i32, i32) {
    %c0_i32 = arith.constant 0 : i32
    %c0_i32_0 = arith.constant 0 : i32
    %c0_i32_1 = arith.constant 0 : i32
    return %c0_i32, %c0_i32_0 : i32, i32
  }
  func.func @transform_3(%arg0: i32) -> (i32, i32) {
    %c0_i32 = arith.constant 0 : i32
    %c0_i32_0 = arith.constant 0 : i32
    %c0_i32_1 = arith.constant 0 : i32
    return %c0_i32, %c0_i32_0 : i32, i32
  }
  func.func @transform_4(%arg0: i32) -> (i32, i32) {
    %c0_i32 = arith.constant 0 : i32
    %c0_i32_0 = arith.constant 0 : i32
    %c0_i32_1 = arith.constant 0 : i32
    return %c0_i32, %c0_i32_0 : i32, i32
  }
  func.func @transform_5(%arg0: i32) -> (i32, i32) {
    %c0_i32 = arith.constant 0 : i32
    %c0_i32_0 = arith.constant 0 : i32
    %c0_i32_1 = arith.constant 0 : i32
    return %c0_i32, %c0_i32_0 : i32, i32
  }
  func.func @transform_6(%arg0: i32) -> (i32, i32) {
    %c0_i32 = arith.constant 0 : i32
    %c0_i32_0 = arith.constant 0 : i32
    %c0_i32_1 = arith.constant 0 : i32
    return %c0_i32, %c0_i32_0 : i32, i32
  }
  func.func @transform_7(%arg0: i32) -> (i32, i32) {
    %c0_i32 = arith.constant 0 : i32
    %c0_i32_0 = arith.constant 0 : i32
    %c0_i32_1 = arith.constant 0 : i32
    return %c0_i32, %c0_i32_0 : i32, i32
  }
  func.func @transform_8(%arg0: i32) -> (i32, i32) {
    %c0_i32 = arith.constant 0 : i32
    %c0_i32_0 = arith.constant 0 : i32
    %c0_i32_1 = arith.constant 0 : i32
    return %c0_i32, %c0_i32_0 : i32, i32
  }
  func.func @transform_9(%arg0: i32) -> (i32, i32) {
    %c0_i32 = arith.constant 0 : i32
    %c0_i32_0 = arith.constant 0 : i32
    %c0_i32_1 = arith.constant 0 : i32
    return %c0_i32, %c0_i32_0 : i32, i32
  }
  func.func @transform_10(%arg0: i32) -> (i32, i32, i32) {
    %c0_i32 = arith.constant 0 : i32
    %c0_i32_0 = arith.constant 0 : i32
    %c0_i32_1 = arith.constant 0 : i32
    %c0_i32_2 = arith.constant 0 : i32
    return %c0_i32, %c0_i32_0, %c0_i32_1 : i32, i32, i32
  }
  func.func @transform_11(%arg0: i32) -> (i32, i32) {
    %c0_i32 = arith.constant 0 : i32
    %c0_i32_0 = arith.constant 0 : i32
    %c0_i32_1 = arith.constant 0 : i32
    return %c0_i32, %c0_i32_0 : i32, i32
  }
  func.func @transform_12(%arg0: i32) -> (i32, i32) {
    %c0_i32 = arith.constant 0 : i32
    %c0_i32_0 = arith.constant 0 : i32
    %c0_i32_1 = arith.constant 0 : i32
    return %c0_i32, %c0_i32_0 : i32, i32
  }
  func.func @transform_13(%arg0: i32) -> (i32, i32) {
    %c0_i32 = arith.constant 0 : i32
    %c0_i32_0 = arith.constant 0 : i32
    %c0_i32_1 = arith.constant 0 : i32
    return %c0_i32, %c0_i32_0 : i32, i32
  }
  func.func @transform_14(%arg0: i32) -> (i32, i32) {
    %c0_i32 = arith.constant 0 : i32
    %c0_i32_0 = arith.constant 0 : i32
    %c0_i32_1 = arith.constant 0 : i32
    return %c0_i32, %c0_i32_0 : i32, i32
  }
  func.func @transform_15(%arg0: i32) -> (i32, i32) {
    %c0_i32 = arith.constant 0 : i32
    %c0_i32_0 = arith.constant 0 : i32
    %c0_i32_1 = arith.constant 0 : i32
    return %c0_i32, %c0_i32_0 : i32, i32
  }
  func.func @transform_16(%arg0: i32) -> (i32, i32) {
    %c0_i32 = arith.constant 0 : i32
    %c0_i32_0 = arith.constant 0 : i32
    %c0_i32_1 = arith.constant 0 : i32
    return %c0_i32, %c0_i32_0 : i32, i32
  }
  func.func @transform_17(%arg0: i32) -> (i32, i32) {
    %c0_i32 = arith.constant 0 : i32
    %c0_i32_0 = arith.constant 0 : i32
    return %arg0, %c0_i32 : i32, i32
  }
}

</mosaic_0001>

<llo_original>
// kernel: lenet_forward.1
$region0: #{lenet_forward.1}
  #allocation0 [shape = 'u32[]', space=smem, size = 0x4, offset = 0x4, fixed_abs, tag = 'smem constant byte address 0x4 - core index']
  #allocation1 [shape = 'u32[72,128]{1,0:T(1,128)}', space=vmem, size = 0x9000, scoped, tag = 'internal scratch']
  %s0 = inlined_call_operand.vmem [shape: f32[112,160], index: 0, kind: input, shape index: {}]
  %s1 = inlined_call_operand.vmem [shape: f32[112,160], index: 1, kind: input, shape index: {}]
  %s2 = inlined_call_operand.vmem [shape: f32[160,168], index: 2, kind: input, shape index: {}]
  %s3 = inlined_call_operand.vmem [shape: f32[1,168], index: 3, kind: input, shape index: {}]
  %s4 = inlined_call_operand.vmem [shape: f32[168,128], index: 4, kind: input, shape index: {}]
  %s5 = inlined_call_operand.vmem [shape: f32[168,128], index: 5, kind: input, shape index: {}]
  %s6 = inlined_call_operand.vmem [shape: f32[640,160], index: 6, kind: input, shape index: {}]
  %s7 = inlined_call_operand.vmem [shape: f32[1,160], index: 7, kind: input, shape index: {}]
  %s8 = inlined_call_operand.vmem [shape: f32[160,128], index: 8, kind: input, shape index: {}]
  %s9 = inlined_call_operand.vmem [shape: f32[160,128], index: 9, kind: input, shape index: {}]
  %s10 = inlined_call_operand.vmem [shape: f32[5,8,107], index: 10, kind: input, shape index: {}]
  %s11 = inlined_call_operand.vmem [shape: f32[640,120], index: 11, kind: input, shape index: {}]
  %s12 = inlined_call_operand.vmem [shape: f32[1,120], index: 12, kind: input, shape index: {}]
  %s13 = inlined_call_operand.vmem [shape: f32[120,84], index: 13, kind: input, shape index: {}]
  %s14 = inlined_call_operand.vmem [shape: f32[1,84], index: 14, kind: input, shape index: {}]
  %s15 = inlined_call_operand.vmem [shape: f32[84,128], index: 15, kind: input, shape index: {}]
  %s16 = inlined_call_operand.vmem [shape: f32[1,128], index: 16, kind: input, shape index: {}]
  %s17 = inlined_call_operand.vmem [shape: f32[8,128], index: 17, kind: output, shape index: {}]
  %s18 = sld [smem:[#allocation0]]
  $region78: #{lenet_forward.1} parent=0
    _
  %s20 = ssub.s32 1, %s18
  %s21 = scalar_select 0, %s20, %s18
  // Predicated region
  $region2: #{lenet_forward.1} parent=0 // pred_check
    _
  $region3: #{lenet_forward.1} parent=0 // pred_check_branch
    %23 = sbr.rel (0) target = $region5
  $region4: #{lenet_forward.1} parent=0 // pred_region
    _
  $region5: #{lenet_forward.1} parent=0 // pred_fallthru
    _
  // Predicated region
  $region6: #{lenet_forward.1} parent=0 // pred_check
    _
  $region7: #{lenet_forward.1} parent=0 // pred_check_branch
    %25 = sbr.rel (0) target = $region9
  $region8: #{lenet_forward.1} parent=0 // pred_region
    _
  $region9: #{lenet_forward.1} parent=0 // pred_fallthru
    _
  // Predicated region
  $region10: #{lenet_forward.1} parent=0 // pred_check
    _
  $region11: #{lenet_forward.1} parent=0 // pred_check_branch
    %27 = sbr.rel (0) target = $region13
  $region12: #{lenet_forward.1} parent=0 // pred_region
    _
  $region13: #{lenet_forward.1} parent=0 // pred_fallthru
    _
  // Predicated region
  $region14: #{lenet_forward.1} parent=0 // pred_check
    _
  $region15: #{lenet_forward.1} parent=0 // pred_check_branch
    %29 = sbr.rel (0) target = $region17
  $region16: #{lenet_forward.1} parent=0 // pred_region
    _
  $region17: #{lenet_forward.1} parent=0 // pred_fallthru
    _
  // Predicated region
  $region18: #{lenet_forward.1} parent=0 // pred_check
    _
  $region19: #{lenet_forward.1} parent=0 // pred_check_branch
    %31 = sbr.rel (0) target = $region21
  $region20: #{lenet_forward.1} parent=0 // pred_region
    _
  $region21: #{lenet_forward.1} parent=0 // pred_fallthru
    _
  // Predicated region
  $region22: #{lenet_forward.1} parent=0 // pred_check
    _
  $region23: #{lenet_forward.1} parent=0 // pred_check_branch
    %33 = sbr.rel (0) target = $region25
  $region24: #{lenet_forward.1} parent=0 // pred_region
    _
  $region25: #{lenet_forward.1} parent=0 // pred_fallthru
    _
  // Predicated region
  $region26: #{lenet_forward.1} parent=0 // pred_check
    _
  $region27: #{lenet_forward.1} parent=0 // pred_check_branch
    %35 = sbr.rel (0) target = $region29
  $region28: #{lenet_forward.1} parent=0 // pred_region
    _
  $region29: #{lenet_forward.1} parent=0 // pred_fallthru
    _
  // Predicated region
  $region30: #{lenet_forward.1} parent=0 // pred_check
    _
  $region31: #{lenet_forward.1} parent=0 // pred_check_branch
    %37 = sbr.rel (0) target = $region33
  $region32: #{lenet_forward.1} parent=0 // pred_region
    _
  $region33: #{lenet_forward.1} parent=0 // pred_fallthru
    _
  // Predicated region
  $region34: #{lenet_forward.1} parent=0 // pred_check
    _
  $region35: #{lenet_forward.1} parent=0 // pred_check_branch
    %39 = sbr.rel (0) target = $region37
  $region36: #{lenet_forward.1} parent=0 // pred_region
    _
  $region37: #{lenet_forward.1} parent=0 // pred_fallthru
    _
  // Predicated region
  $region38: #{lenet_forward.1} parent=0 // pred_check
    _
  $region39: #{lenet_forward.1} parent=0 // pred_check_branch
    %41 = sbr.rel (0) target = $region41
  $region40: #{lenet_forward.1} parent=0 // pred_region
    _
  $region41: #{lenet_forward.1} parent=0 // pred_fallthru
    _
  // Predicated region
  $region42: #{lenet_forward.1} parent=0 // pred_check
    _
  $region43: #{lenet_forward.1} parent=0 // pred_check_branch
    %43 = sbr.rel (0) target = $region45
  $region44: #{lenet_forward.1} parent=0 // pred_region
    _
  $region45: #{lenet_forward.1} parent=0 // pred_fallthru
    _
  // Predicated region
  $region46: #{lenet_forward.1} parent=0 // pred_check
    _
  $region47: #{lenet_forward.1} parent=0 // pred_check_branch
    %45 = sbr.rel (0) target = $region49
  $region48: #{lenet_forward.1} parent=0 // pred_region
    _
  $region49: #{lenet_forward.1} parent=0 // pred_fallthru
    _
  // Predicated region
  $region50: #{lenet_forward.1} parent=0 // pred_check
    _
  $region51: #{lenet_forward.1} parent=0 // pred_check_branch
    %47 = sbr.rel (0) target = $region53
  $region52: #{lenet_forward.1} parent=0 // pred_region
    _
  $region53: #{lenet_forward.1} parent=0 // pred_fallthru
    _
  // Predicated region
  $region54: #{lenet_forward.1} parent=0 // pred_check
    _
  $region55: #{lenet_forward.1} parent=0 // pred_check_branch
    %49 = sbr.rel (0) target = $region57
  $region56: #{lenet_forward.1} parent=0 // pred_region
    _
  $region57: #{lenet_forward.1} parent=0 // pred_fallthru
    _
  // Predicated region
  $region58: #{lenet_forward.1} parent=0 // pred_check
    _
  $region59: #{lenet_forward.1} parent=0 // pred_check_branch
    %51 = sbr.rel (0) target = $region61
  $region60: #{lenet_forward.1} parent=0 // pred_region
    _
  $region61: #{lenet_forward.1} parent=0 // pred_fallthru
    _
  // Predicated region
  $region62: #{lenet_forward.1} parent=0 // pred_check
    _
  $region63: #{lenet_forward.1} parent=0 // pred_check_branch
    %53 = sbr.rel (0) target = $region65
  $region64: #{lenet_forward.1} parent=0 // pred_region
    _
  $region65: #{lenet_forward.1} parent=0 // pred_fallthru
    _
  // Predicated region
  $region66: #{lenet_forward.1} parent=0 // pred_check
    _
  $region67: #{lenet_forward.1} parent=0 // pred_check_branch
    %55 = sbr.rel (0) target = $region69
  $region68: #{lenet_forward.1} parent=0 // pred_region
    _
  $region69: #{lenet_forward.1} parent=0 // pred_fallthru
    _
  %v56 = vld [vmem:[%s0] sm:$0xff]
  %v57 = vld [vmem:[%s0 + $0x8] sm:$0xff]
  %v58 = vld [vmem:[%s0 + $0x10] sm:$0xff]
  %v59 = vld [vmem:[%s0 + $0x18] sm:$0xff]
  %v60 = vld [vmem:[%s0 + $0x20] sm:$0xff]
  %v61 = vld [vmem:[%s0 + $0x28] sm:$0xff]
  %v62 = vld [vmem:[%s0 + $0x30] sm:$0xff]
  %v63 = vld [vmem:[%s0 + $0x38] sm:$0xff]
  %v64 = vld [vmem:[%s0 + $0x40] sm:$0xff]
  %v65 = vld [vmem:[%s0 + $0x48] sm:$0xff]
  %v66 = vld [vmem:[%s0 + $0x50] sm:$0xff]
  %v67 = vld [vmem:[%s0 + $0x58] sm:$0xff]
  %v68 = vld [vmem:[%s0 + $0x60] sm:$0xff]
  %v69 = vld [vmem:[%s0 + $0x68] sm:$0xff]
  %v70 = vld [vmem:[%s0 + $0x70] sm:$0xff]
  %v71 = vld [vmem:[%s0 + $0x78] sm:$0xff]
  %v72 = vld [vmem:[%s0 + $0x80] sm:$0xff]
  %v73 = vld [vmem:[%s0 + $0x88] sm:$0xff]
  %v74 = vld [vmem:[%s0 + $0x90] sm:$0xff]
  %v75 = vld [vmem:[%s0 + $0x98] sm:$0xff]
  %v76 = vld [vmem:[%s0 + $0xa0] sm:$0xff]
  %v77 = vld [vmem:[%s0 + $0xa8] sm:$0xff]
  %v78 = vld [vmem:[%s0 + $0xb0] sm:$0xff]
  %v79 = vld [vmem:[%s0 + $0xb8] sm:$0xff]
  %v80 = vld [vmem:[%s0 + $0xc0] sm:$0xff]
  %v81 = vld [vmem:[%s0 + $0xc8] sm:$0xff]
  %v82 = vld [vmem:[%s0 + $0xd0] sm:$0xff]
  %v83 = vld [vmem:[%s0 + $0xd8] sm:$0xff]
  %v84 = vld [vmem:[%s2] sm:$0xff]
  %v85 = vld [vmem:[%s2 + $0x8] sm:$0xff]
  %v86 = vld [vmem:[%s2 + $0x10] sm:$0xff]
  %v87 = vld [vmem:[%s2 + $0x18] sm:$0xff]
  %v88 = vld [vmem:[%s2 + $0x20] sm:$0xff]
  %v89 = vld [vmem:[%s2 + $0x28] sm:$0xff]
  %v90 = vld [vmem:[%s2 + $0x30] sm:$0xff]
  %v91 = vld [vmem:[%s2 + $0x38] sm:$0xff]
  %v92 = vld [vmem:[%s2 + $0x40] sm:$0xff]
  %v93 = vld [vmem:[%s2 + $0x48] sm:$0xff]
  %v94 = vld [vmem:[%s2 + $0x50] sm:$0xff]
  %v95 = vld [vmem:[%s2 + $0x58] sm:$0xff]
  %v96 = vld [vmem:[%s2 + $0x60] sm:$0xff]
  %v97 = vld [vmem:[%s2 + $0x68] sm:$0xff]
  %v98 = vld [vmem:[%s2 + $0x70] sm:$0xff]
  %v99 = vld [vmem:[%s2 + $0x78] sm:$0xff]
  %v100 = vld [vmem:[%s2 + $0x80] sm:$0xff]
  %v101 = vld [vmem:[%s2 + $0x88] sm:$0xff]
  %v102 = vld [vmem:[%s2 + $0x90] sm:$0xff]
  %v103 = vld [vmem:[%s2 + $0x98] sm:$0xff]
  %v104 = vld [vmem:[%s2 + $0xa0] sm:$0xff]
  %v105 = vld [vmem:[%s2 + $0xa8] sm:$0xff]
  %v106 = vld [vmem:[%s2 + $0xb0] sm:$0xff]
  %v107 = vld [vmem:[%s2 + $0xb8] sm:$0xff]
  %v108 = vld [vmem:[%s2 + $0xc0] sm:$0xff]
  %v109 = vld [vmem:[%s2 + $0xc8] sm:$0xff]
  %v110 = vld [vmem:[%s2 + $0xd0] sm:$0xff]
  %v111 = vld [vmem:[%s2 + $0xd8] sm:$0xff]
  %v112 = vld [vmem:[%s2 + $0xe0] sm:$0xff]
  %v113 = vld [vmem:[%s2 + $0xe8] sm:$0xff]
  %v114 = vld [vmem:[%s2 + $0xf0] sm:$0xff]
  %v115 = vld [vmem:[%s2 + $0xf8] sm:$0xff]
  %v116 = vld [vmem:[%s2 + $0x100] sm:$0xff]
  %v117 = vld [vmem:[%s2 + $0x108] sm:$0xff]
  %v118 = vld [vmem:[%s2 + $0x110] sm:$0xff]
  %v119 = vld [vmem:[%s2 + $0x118] sm:$0xff]
  %v120 = vld [vmem:[%s2 + $0x120] sm:$0xff]
  %v121 = vld [vmem:[%s2 + $0x128] sm:$0xff]
  %v122 = vld [vmem:[%s2 + $0x130] sm:$0xff]
  %v123 = vld [vmem:[%s2 + $0x138] sm:$0xff]
  %v124 = vld [vmem:[%s3] sm:$0x3]
  %v126 = vperm.slane %v124, 0
  %v127 = vperm.slane %v124, 1
  %vm130 = vcmask 261120
  %v132 = vsel %vm130, %v57, 0
  %v135 = vsel %vm130, %v59, 0
  %v138 = vsel %vm130, %v61, 0
  %v141 = vsel %vm130, %v63, 0
  %v144 = vsel %vm130, %v65, 0
  %v147 = vsel %vm130, %v67, 0
  %v150 = vsel %vm130, %v69, 0
  %v153 = vsel %vm130, %v71, 0
  %v156 = vsel %vm130, %v73, 0
  %v159 = vsel %vm130, %v75, 0
  %v162 = vsel %vm130, %v77, 0
  %v165 = vsel %vm130, %v79, 0
  %v168 = vsel %vm130, %v81, 0
  %v171 = vsel %vm130, %v83, 0
  %173 = vmatpush.msra.mxu0 %v114
  %174 = vmatpush.msra.mxu0 %v112
  %175 = vmatpush.msra.mxu0 %v110
  %176 = vmatpush.msra.mxu0 %v108
  %177 = vmatpush.msra.mxu0 %v106
  %178 = vmatpush.msra.mxu0 %v104
  %179 = vmatpush.msra.mxu0 %v102
  %180 = vmatpush.msra.mxu0 %v100
  %181 = vmatpush.msra.mxu0 %v98
  %182 = vmatpush.msra.mxu0 %v96
  %183 = vmatpush.msra.mxu0 %v94
  %184 = vmatpush.msra.mxu0 %v92
  %185 = vmatpush.msra.mxu0 %v90
  %186 = vmatpush.msra.mxu0 %v88
  %187 = vmatpush.msra.mxu0 %v86
  %188 = vmatpush.msra.mxu0 %v84
  %189 = vmatmul.f32.gmra.mxu0 %v56
  %v190 = vpop.f32.mrf.mxu0
  %v191 = vadd.f32 %v126, %v190
  %192 = vmatmul.f32.gmra.mxu0 %v58
  %v193 = vpop.f32.mrf.mxu0
  %v194 = vadd.f32 %v126, %v193
  %195 = vmatmul.f32.gmra.mxu0 %v60
  %v196 = vpop.f32.mrf.mxu0
  %v197 = vadd.f32 %v126, %v196
  %198 = vmatmul.f32.gmra.mxu0 %v62
  %v199 = vpop.f32.mrf.mxu0
  %v200 = vadd.f32 %v126, %v199
  %201 = vmatmul.f32.gmra.mxu0 %v64
  %v202 = vpop.f32.mrf.mxu0
  %v203 = vadd.f32 %v126, %v202
  %204 = vmatmul.f32.gmra.mxu0 %v66
  %v205 = vpop.f32.mrf.mxu0
  %v206 = vadd.f32 %v126, %v205
  %207 = vmatmul.f32.gmra.mxu0 %v68
  %v208 = vpop.f32.mrf.mxu0
  %v209 = vadd.f32 %v126, %v208
  %210 = vmatmul.f32.gmra.mxu0 %v70
  %v211 = vpop.f32.mrf.mxu0
  %v212 = vadd.f32 %v126, %v211
  %213 = vmatmul.f32.gmra.mxu0 %v72
  %v214 = vpop.f32.mrf.mxu0
  %v215 = vadd.f32 %v126, %v214
  %216 = vmatmul.f32.gmra.mxu0 %v74
  %v217 = vpop.f32.mrf.mxu0
  %v218 = vadd.f32 %v126, %v217
  %219 = vmatmul.f32.gmra.mxu0 %v76
  %v220 = vpop.f32.mrf.mxu0
  %v221 = vadd.f32 %v126, %v220
  %222 = vmatmul.f32.gmra.mxu0 %v78
  %v223 = vpop.f32.mrf.mxu0
  %v224 = vadd.f32 %v126, %v223
  %225 = vmatmul.f32.gmra.mxu0 %v80
  %v226 = vpop.f32.mrf.mxu0
  %v227 = vadd.f32 %v126, %v226
  %228 = vmatmul.f32.gmra.mxu0 %v82
  %v229 = vpop.f32.mrf.mxu0
  %v230 = vadd.f32 %v126, %v229
  %231 = vdwg.mxu0
  %232 = vmatpush.msra.mxu0 0.0
  %233 = vmatpush.msra.mxu0 0.0
  %234 = vmatpush.msra.mxu0 0.0
  %235 = vmatpush.msra.mxu0 0.0
  %236 = vmatpush.msra.mxu0 0.0
  %237 = vmatpush.msra.mxu0 0.0
  %238 = vmatpush.msra.mxu0 0.0
  %239 = vmatpush.msra.mxu0 0.0
  %240 = vmatpush.msra.mxu0 0.0
  %241 = vmatpush.msra.mxu0 0.0
  %242 = vmatpush.msra.mxu0 0.0
  %243 = vmatpush.msra.mxu0 0.0
  %244 = vmatpush.msra.mxu0 %v122
  %245 = vmatpush.msra.mxu0 %v120
  %246 = vmatpush.msra.mxu0 %v118
  %247 = vmatpush.msra.mxu0 %v116
  %248 = vmatmul.f32.gmra.mxu0 %v132
  %v249 = vpop.f32.mrf.mxu0
  %v250 = vadd.f32 %v191, %v249
  %251 = vmatmul.f32.gmra.mxu0 %v135
  %v252 = vpop.f32.mrf.mxu0
  %v253 = vadd.f32 %v194, %v252
  %254 = vmatmul.f32.gmra.mxu0 %v138
  %v255 = vpop.f32.mrf.mxu0
  %v256 = vadd.f32 %v197, %v255
  %257 = vmatmul.f32.gmra.mxu0 %v141
  %v258 = vpop.f32.mrf.mxu0
  %v259 = vadd.f32 %v200, %v258
  %260 = vmatmul.f32.gmra.mxu0 %v144
  %v261 = vpop.f32.mrf.mxu0
  %v262 = vadd.f32 %v203, %v261
  %263 = vmatmul.f32.gmra.mxu0 %v147
  %v264 = vpop.f32.mrf.mxu0
  %v265 = vadd.f32 %v206, %v264
  %266 = vmatmul.f32.gmra.mxu0 %v150
  %v267 = vpop.f32.mrf.mxu0
  %v268 = vadd.f32 %v209, %v267
  %269 = vmatmul.f32.gmra.mxu0 %v153
  %v270 = vpop.f32.mrf.mxu0
  %v271 = vadd.f32 %v212, %v270
  %272 = vmatmul.f32.gmra.mxu0 %v156
  %v273 = vpop.f32.mrf.mxu0
  %v274 = vadd.f32 %v215, %v273
  %275 = vmatmul.f32.gmra.mxu0 %v159
  %v276 = vpop.f32.mrf.mxu0
  %v277 = vadd.f32 %v218, %v276
  %278 = vmatmul.f32.gmra.mxu0 %v162
  %v279 = vpop.f32.mrf.mxu0
  %v280 = vadd.f32 %v221, %v279
  %281 = vmatmul.f32.gmra.mxu0 %v165
  %v282 = vpop.f32.mrf.mxu0
  %v283 = vadd.f32 %v224, %v282
  %284 = vmatmul.f32.gmra.mxu0 %v168
  %v285 = vpop.f32.mrf.mxu0
  %v286 = vadd.f32 %v227, %v285
  %287 = vmatmul.f32.gmra.mxu0 %v171
  %v288 = vpop.f32.mrf.mxu0
  %v289 = vadd.f32 %v230, %v288
  %290 = vdwg.mxu0
  %291 = vmatpush.msra.mxu0 %v115
  %292 = vmatpush.msra.mxu0 %v113
  %293 = vmatpush.msra.mxu0 %v111
  %294 = vmatpush.msra.mxu0 %v109
  %295 = vmatpush.msra.mxu0 %v107
  %296 = vmatpush.msra.mxu0 %v105
  %297 = vmatpush.msra.mxu0 %v103
  %298 = vmatpush.msra.mxu0 %v101
  %299 = vmatpush.msra.mxu0 %v99
  %300 = vmatpush.msra.mxu0 %v97
  %301 = vmatpush.msra.mxu0 %v95
  %302 = vmatpush.msra.mxu0 %v93
  %303 = vmatpush.msra.mxu0 %v91
  %304 = vmatpush.msra.mxu0 %v89
  %305 = vmatpush.msra.mxu0 %v87
  %306 = vmatpush.msra.mxu0 %v85
  %307 = vmatmul.f32.gmra.mxu0 %v56
  %v308 = vpop.f32.mrf.mxu0
  %v309 = vadd.f32 %v127, %v308
  %310 = vmatmul.f32.gmra.mxu0 %v58
  %v311 = vpop.f32.mrf.mxu0
  %v312 = vadd.f32 %v127, %v311
  %313 = vmatmul.f32.gmra.mxu0 %v60
  %v314 = vpop.f32.mrf.mxu0
  %v315 = vadd.f32 %v127, %v314
  %316 = vmatmul.f32.gmra.mxu0 %v62
  %v317 = vpop.f32.mrf.mxu0
  %v318 = vadd.f32 %v127, %v317
  %319 = vmatmul.f32.gmra.mxu0 %v64
  %v320 = vpop.f32.mrf.mxu0
  %v321 = vadd.f32 %v127, %v320
  %322 = vmatmul.f32.gmra.mxu0 %v66
  %v323 = vpop.f32.mrf.mxu0
  %v324 = vadd.f32 %v127, %v323
  %325 = vmatmul.f32.gmra.mxu0 %v68
  %v326 = vpop.f32.mrf.mxu0
  %v327 = vadd.f32 %v127, %v326
  %328 = vmatmul.f32.gmra.mxu0 %v70
  %v329 = vpop.f32.mrf.mxu0
  %v330 = vadd.f32 %v127, %v329
  %331 = vmatmul.f32.gmra.mxu0 %v72
  %v332 = vpop.f32.mrf.mxu0
  %v333 = vadd.f32 %v127, %v332
  %334 = vmatmul.f32.gmra.mxu0 %v74
  %v335 = vpop.f32.mrf.mxu0
  %v336 = vadd.f32 %v127, %v335
  %337 = vmatmul.f32.gmra.mxu0 %v76
  %v338 = vpop.f32.mrf.mxu0
  %v339 = vadd.f32 %v127, %v338
  %340 = vmatmul.f32.gmra.mxu0 %v78
  %v341 = vpop.f32.mrf.mxu0
  %v342 = vadd.f32 %v127, %v341
  %343 = vmatmul.f32.gmra.mxu0 %v80
  %v344 = vpop.f32.mrf.mxu0
  %v345 = vadd.f32 %v127, %v344
  %346 = vmatmul.f32.gmra.mxu0 %v82
  %v347 = vpop.f32.mrf.mxu0
  %v348 = vadd.f32 %v127, %v347
  %349 = vdwg.mxu0
  %350 = vmatpush.msra.mxu0 0.0
  %351 = vmatpush.msra.mxu0 0.0
  %352 = vmatpush.msra.mxu0 0.0
  %353 = vmatpush.msra.mxu0 0.0
  %354 = vmatpush.msra.mxu0 0.0
  %355 = vmatpush.msra.mxu0 0.0
  %356 = vmatpush.msra.mxu0 0.0
  %357 = vmatpush.msra.mxu0 0.0
  %358 = vmatpush.msra.mxu0 0.0
  %359 = vmatpush.msra.mxu0 0.0
  %360 = vmatpush.msra.mxu0 0.0
  %361 = vmatpush.msra.mxu0 0.0
  %362 = vmatpush.msra.mxu0 %v123
  %363 = vmatpush.msra.mxu0 %v121
  %364 = vmatpush.msra.mxu0 %v119
  %365 = vmatpush.msra.mxu0 %v117
  %366 = vmatmul.f32.gmra.mxu0 %v132
  %v367 = vpop.f32.mrf.mxu0
  %v368 = vadd.f32 %v309, %v367
  %369 = vmatmul.f32.gmra.mxu0 %v135
  %v370 = vpop.f32.mrf.mxu0
  %v371 = vadd.f32 %v312, %v370
  %372 = vmatmul.f32.gmra.mxu0 %v138
  %v373 = vpop.f32.mrf.mxu0
  %v374 = vadd.f32 %v315, %v373
  %375 = vmatmul.f32.gmra.mxu0 %v141
  %v376 = vpop.f32.mrf.mxu0
  %v377 = vadd.f32 %v318, %v376
  %378 = vmatmul.f32.gmra.mxu0 %v144
  %v379 = vpop.f32.mrf.mxu0
  %v380 = vadd.f32 %v321, %v379
  %381 = vmatmul.f32.gmra.mxu0 %v147
  %v382 = vpop.f32.mrf.mxu0
  %v383 = vadd.f32 %v324, %v382
  %384 = vmatmul.f32.gmra.mxu0 %v150
  %v385 = vpop.f32.mrf.mxu0
  %v386 = vadd.f32 %v327, %v385
  %387 = vmatmul.f32.gmra.mxu0 %v153
  %v388 = vpop.f32.mrf.mxu0
  %v389 = vadd.f32 %v330, %v388
  %390 = vmatmul.f32.gmra.mxu0 %v156
  %v391 = vpop.f32.mrf.mxu0
  %v392 = vadd.f32 %v333, %v391
  %393 = vmatmul.f32.gmra.mxu0 %v159
  %v394 = vpop.f32.mrf.mxu0
  %v395 = vadd.f32 %v336, %v394
  %396 = vmatmul.f32.gmra.mxu0 %v162
  %v397 = vpop.f32.mrf.mxu0
  %v398 = vadd.f32 %v339, %v397
  %399 = vmatmul.f32.gmra.mxu0 %v165
  %v400 = vpop.f32.mrf.mxu0
  %v401 = vadd.f32 %v342, %v400
  %402 = vmatmul.f32.gmra.mxu0 %v168
  %v403 = vpop.f32.mrf.mxu0
  %v404 = vadd.f32 %v345, %v403
  %405 = vmatmul.f32.gmra.mxu0 %v171
  %v406 = vpop.f32.mrf.mxu0
  %v407 = vadd.f32 %v348, %v406
  %408 = vdwg.mxu0
  %v409 = vmax.f32 %v250, 0.0
  %v410 = vmax.f32 %v368, 0.0
  %v411 = vmax.f32 %v253, 0.0
  %v412 = vmax.f32 %v371, 0.0
  %v413 = vmax.f32 %v256, 0.0
  %v414 = vmax.f32 %v374, 0.0
  %v415 = vmax.f32 %v259, 0.0
  %v416 = vmax.f32 %v377, 0.0
  %v417 = vmax.f32 %v262, 0.0
  %v418 = vmax.f32 %v380, 0.0
  %v419 = vmax.f32 %v265, 0.0
  %v420 = vmax.f32 %v383, 0.0
  %v421 = vmax.f32 %v268, 0.0
  %v422 = vmax.f32 %v386, 0.0
  %v423 = vmax.f32 %v271, 0.0
  %v424 = vmax.f32 %v389, 0.0
  %v425 = vmax.f32 %v274, 0.0
  %v426 = vmax.f32 %v392, 0.0
  %v427 = vmax.f32 %v277, 0.0
  %v428 = vmax.f32 %v395, 0.0
  %v429 = vmax.f32 %v280, 0.0
  %v430 = vmax.f32 %v398, 0.0
  %v431 = vmax.f32 %v283, 0.0
  %v432 = vmax.f32 %v401, 0.0
  %v433 = vmax.f32 %v286, 0.0
  %v434 = vmax.f32 %v404, 0.0
  %v435 = vmax.f32 %v289, 0.0
  %v436 = vmax.f32 %v407, 0.0
  %v437 = vld [vmem:[%s1] sm:$0xff]
  %v438 = vld [vmem:[%s1 + $0x8] sm:$0xff]
  %v439 = vld [vmem:[%s1 + $0x10] sm:$0xff]
  %v440 = vld [vmem:[%s1 + $0x18] sm:$0xff]
  %v441 = vld [vmem:[%s1 + $0x20] sm:$0xff]
  %v442 = vld [vmem:[%s1 + $0x28] sm:$0xff]
  %v443 = vld [vmem:[%s1 + $0x30] sm:$0xff]
  %v444 = vld [vmem:[%s1 + $0x38] sm:$0xff]
  %v445 = vld [vmem:[%s1 + $0x40] sm:$0xff]
  %v446 = vld [vmem:[%s1 + $0x48] sm:$0xff]
  %v447 = vld [vmem:[%s1 + $0x50] sm:$0xff]
  %v448 = vld [vmem:[%s1 + $0x58] sm:$0xff]
  %v449 = vld [vmem:[%s1 + $0x60] sm:$0xff]
  %v450 = vld [vmem:[%s1 + $0x68] sm:$0xff]
  %v451 = vld [vmem:[%s1 + $0x70] sm:$0xff]
  %v452 = vld [vmem:[%s1 + $0x78] sm:$0xff]
  %v453 = vld [vmem:[%s1 + $0x80] sm:$0xff]
  %v454 = vld [vmem:[%s1 + $0x88] sm:$0xff]
  %v455 = vld [vmem:[%s1 + $0x90] sm:$0xff]
  %v456 = vld [vmem:[%s1 + $0x98] sm:$0xff]
  %v457 = vld [vmem:[%s1 + $0xa0] sm:$0xff]
  %v458 = vld [vmem:[%s1 + $0xa8] sm:$0xff]
  %v459 = vld [vmem:[%s1 + $0xb0] sm:$0xff]
  %v460 = vld [vmem:[%s1 + $0xb8] sm:$0xff]
  %v461 = vld [vmem:[%s1 + $0xc0] sm:$0xff]
  %v462 = vld [vmem:[%s1 + $0xc8] sm:$0xff]
  %v463 = vld [vmem:[%s1 + $0xd0] sm:$0xff]
  %v464 = vld [vmem:[%s1 + $0xd8] sm:$0xff]
  %v466 = vsel %vm130, %v438, 0
  %v469 = vsel %vm130, %v440, 0
  %v472 = vsel %vm130, %v442, 0
  %v475 = vsel %vm130, %v444, 0
  %v478 = vsel %vm130, %v446, 0
  %v481 = vsel %vm130, %v448, 0
  %v484 = vsel %vm130, %v450, 0
  %v487 = vsel %vm130, %v452, 0
  %v490 = vsel %vm130, %v454, 0
  %v493 = vsel %vm130, %v456, 0
  %v496 = vsel %vm130, %v458, 0
  %v499 = vsel %vm130, %v460, 0
  %v502 = vsel %vm130, %v462, 0
  %v505 = vsel %vm130, %v464, 0
  %507 = vmatpush.msra.mxu0 %v114
  %508 = vmatpush.msra.mxu0 %v112
  %509 = vmatpush.msra.mxu0 %v110
  %510 = vmatpush.msra.mxu0 %v108
  %511 = vmatpush.msra.mxu0 %v106
  %512 = vmatpush.msra.mxu0 %v104
  %513 = vmatpush.msra.mxu0 %v102
  %514 = vmatpush.msra.mxu0 %v100
  %515 = vmatpush.msra.mxu0 %v98
  %516 = vmatpush.msra.mxu0 %v96
  %517 = vmatpush.msra.mxu0 %v94
  %518 = vmatpush.msra.mxu0 %v92
  %519 = vmatpush.msra.mxu0 %v90
  %520 = vmatpush.msra.mxu0 %v88
  %521 = vmatpush.msra.mxu0 %v86
  %522 = vmatpush.msra.mxu0 %v84
  %523 = vmatmul.f32.gmra.mxu0 %v437
  %v524 = vpop.f32.mrf.mxu0
  %v525 = vadd.f32 %v126, %v524
  %526 = vmatmul.f32.gmra.mxu0 %v439
  %v527 = vpop.f32.mrf.mxu0
  %v528 = vadd.f32 %v126, %v527
  %529 = vmatmul.f32.gmra.mxu0 %v441
  %v530 = vpop.f32.mrf.mxu0
  %v531 = vadd.f32 %v126, %v530
  %532 = vmatmul.f32.gmra.mxu0 %v443
  %v533 = vpop.f32.mrf.mxu0
  %v534 = vadd.f32 %v126, %v533
  %535 = vmatmul.f32.gmra.mxu0 %v445
  %v536 = vpop.f32.mrf.mxu0
  %v537 = vadd.f32 %v126, %v536
  %538 = vmatmul.f32.gmra.mxu0 %v447
  %v539 = vpop.f32.mrf.mxu0
  %v540 = vadd.f32 %v126, %v539
  %541 = vmatmul.f32.gmra.mxu0 %v449
  %v542 = vpop.f32.mrf.mxu0
  %v543 = vadd.f32 %v126, %v542
  %544 = vmatmul.f32.gmra.mxu0 %v451
  %v545 = vpop.f32.mrf.mxu0
  %v546 = vadd.f32 %v126, %v545
  %547 = vmatmul.f32.gmra.mxu0 %v453
  %v548 = vpop.f32.mrf.mxu0
  %v549 = vadd.f32 %v126, %v548
  %550 = vmatmul.f32.gmra.mxu0 %v455
  %v551 = vpop.f32.mrf.mxu0
  %v552 = vadd.f32 %v126, %v551
  %553 = vmatmul.f32.gmra.mxu0 %v457
  %v554 = vpop.f32.mrf.mxu0
  %v555 = vadd.f32 %v126, %v554
  %556 = vmatmul.f32.gmra.mxu0 %v459
  %v557 = vpop.f32.mrf.mxu0
  %v558 = vadd.f32 %v126, %v557
  %559 = vmatmul.f32.gmra.mxu0 %v461
  %v560 = vpop.f32.mrf.mxu0
  %v561 = vadd.f32 %v126, %v560
  %562 = vmatmul.f32.gmra.mxu0 %v463
  %v563 = vpop.f32.mrf.mxu0
  %v564 = vadd.f32 %v126, %v563
  %565 = vdwg.mxu0
  %566 = vmatpush.msra.mxu0 0.0
  %567 = vmatpush.msra.mxu0 0.0
  %568 = vmatpush.msra.mxu0 0.0
  %569 = vmatpush.msra.mxu0 0.0
  %570 = vmatpush.msra.mxu0 0.0
  %571 = vmatpush.msra.mxu0 0.0
  %572 = vmatpush.msra.mxu0 0.0
  %573 = vmatpush.msra.mxu0 0.0
  %574 = vmatpush.msra.mxu0 0.0
  %575 = vmatpush.msra.mxu0 0.0
  %576 = vmatpush.msra.mxu0 0.0
  %577 = vmatpush.msra.mxu0 0.0
  %578 = vmatpush.msra.mxu0 %v122
  %579 = vmatpush.msra.mxu0 %v120
  %580 = vmatpush.msra.mxu0 %v118
  %581 = vmatpush.msra.mxu0 %v116
  %582 = vmatmul.f32.gmra.mxu0 %v466
  %v583 = vpop.f32.mrf.mxu0
  %v584 = vadd.f32 %v525, %v583
  %585 = vmatmul.f32.gmra.mxu0 %v469
  %v586 = vpop.f32.mrf.mxu0
  %v587 = vadd.f32 %v528, %v586
  %588 = vmatmul.f32.gmra.mxu0 %v472
  %v589 = vpop.f32.mrf.mxu0
  %v590 = vadd.f32 %v531, %v589
  %591 = vmatmul.f32.gmra.mxu0 %v475
  %v592 = vpop.f32.mrf.mxu0
  %v593 = vadd.f32 %v534, %v592
  %594 = vmatmul.f32.gmra.mxu0 %v478
  %v595 = vpop.f32.mrf.mxu0
  %v596 = vadd.f32 %v537, %v595
  %597 = vmatmul.f32.gmra.mxu0 %v481
  %v598 = vpop.f32.mrf.mxu0
  %v599 = vadd.f32 %v540, %v598
  %600 = vmatmul.f32.gmra.mxu0 %v484
  %v601 = vpop.f32.mrf.mxu0
  %v602 = vadd.f32 %v543, %v601
  %603 = vmatmul.f32.gmra.mxu0 %v487
  %v604 = vpop.f32.mrf.mxu0
  %v605 = vadd.f32 %v546, %v604
  %606 = vmatmul.f32.gmra.mxu0 %v490
  %v607 = vpop.f32.mrf.mxu0
  %v608 = vadd.f32 %v549, %v607
  %609 = vmatmul.f32.gmra.mxu0 %v493
  %v610 = vpop.f32.mrf.mxu0
  %v611 = vadd.f32 %v552, %v610
  %612 = vmatmul.f32.gmra.mxu0 %v496
  %v613 = vpop.f32.mrf.mxu0
  %v614 = vadd.f32 %v555, %v613
  %615 = vmatmul.f32.gmra.mxu0 %v499
  %v616 = vpop.f32.mrf.mxu0
  %v617 = vadd.f32 %v558, %v616
  %618 = vmatmul.f32.gmra.mxu0 %v502
  %v619 = vpop.f32.mrf.mxu0
  %v620 = vadd.f32 %v561, %v619
  %621 = vmatmul.f32.gmra.mxu0 %v505
  %v622 = vpop.f32.mrf.mxu0
  %v623 = vadd.f32 %v564, %v622
  %624 = vdwg.mxu0
  %625 = vmatpush.msra.mxu0 %v115
  %626 = vmatpush.msra.mxu0 %v113
  %627 = vmatpush.msra.mxu0 %v111
  %628 = vmatpush.msra.mxu0 %v109
  %629 = vmatpush.msra.mxu0 %v107
  %630 = vmatpush.msra.mxu0 %v105
  %631 = vmatpush.msra.mxu0 %v103
  %632 = vmatpush.msra.mxu0 %v101
  %633 = vmatpush.msra.mxu0 %v99
  %634 = vmatpush.msra.mxu0 %v97
  %635 = vmatpush.msra.mxu0 %v95
  %636 = vmatpush.msra.mxu0 %v93
  %637 = vmatpush.msra.mxu0 %v91
  %638 = vmatpush.msra.mxu0 %v89
  %639 = vmatpush.msra.mxu0 %v87
  %640 = vmatpush.msra.mxu0 %v85
  %641 = vmatmul.f32.gmra.mxu0 %v437
  %v642 = vpop.f32.mrf.mxu0
  %v643 = vadd.f32 %v127, %v642
  %644 = vmatmul.f32.gmra.mxu0 %v439
  %v645 = vpop.f32.mrf.mxu0
  %v646 = vadd.f32 %v127, %v645
  %647 = vmatmul.f32.gmra.mxu0 %v441
  %v648 = vpop.f32.mrf.mxu0
  %v649 = vadd.f32 %v127, %v648
  %650 = vmatmul.f32.gmra.mxu0 %v443
  %v651 = vpop.f32.mrf.mxu0
  %v652 = vadd.f32 %v127, %v651
  %653 = vmatmul.f32.gmra.mxu0 %v445
  %v654 = vpop.f32.mrf.mxu0
  %v655 = vadd.f32 %v127, %v654
  %656 = vmatmul.f32.gmra.mxu0 %v447
  %v657 = vpop.f32.mrf.mxu0
  %v658 = vadd.f32 %v127, %v657
  %659 = vmatmul.f32.gmra.mxu0 %v449
  %v660 = vpop.f32.mrf.mxu0
  %v661 = vadd.f32 %v127, %v660
  %662 = vmatmul.f32.gmra.mxu0 %v451
  %v663 = vpop.f32.mrf.mxu0
  %v664 = vadd.f32 %v127, %v663
  %665 = vmatmul.f32.gmra.mxu0 %v453
  %v666 = vpop.f32.mrf.mxu0
  %v667 = vadd.f32 %v127, %v666
  %668 = vmatmul.f32.gmra.mxu0 %v455
  %v669 = vpop.f32.mrf.mxu0
  %v670 = vadd.f32 %v127, %v669
  %671 = vmatmul.f32.gmra.mxu0 %v457
  %v672 = vpop.f32.mrf.mxu0
  %v673 = vadd.f32 %v127, %v672
  %674 = vmatmul.f32.gmra.mxu0 %v459
  %v675 = vpop.f32.mrf.mxu0
  %v676 = vadd.f32 %v127, %v675
  %677 = vmatmul.f32.gmra.mxu0 %v461
  %v678 = vpop.f32.mrf.mxu0
  %v679 = vadd.f32 %v127, %v678
  %680 = vmatmul.f32.gmra.mxu0 %v463
  %v681 = vpop.f32.mrf.mxu0
  %v682 = vadd.f32 %v127, %v681
  %683 = vdwg.mxu0
  %684 = vmatpush.msra.mxu0 0.0
  %685 = vmatpush.msra.mxu0 0.0
  %686 = vmatpush.msra.mxu0 0.0
  %687 = vmatpush.msra.mxu0 0.0
  %688 = vmatpush.msra.mxu0 0.0
  %689 = vmatpush.msra.mxu0 0.0
  %690 = vmatpush.msra.mxu0 0.0
  %691 = vmatpush.msra.mxu0 0.0
  %692 = vmatpush.msra.mxu0 0.0
  %693 = vmatpush.msra.mxu0 0.0
  %694 = vmatpush.msra.mxu0 0.0
  %695 = vmatpush.msra.mxu0 0.0
  %696 = vmatpush.msra.mxu0 %v123
  %697 = vmatpush.msra.mxu0 %v121
  %698 = vmatpush.msra.mxu0 %v119
  %699 = vmatpush.msra.mxu0 %v117
  %700 = vmatmul.f32.gmra.mxu0 %v466
  %v701 = vpop.f32.mrf.mxu0
  %v702 = vadd.f32 %v643, %v701
  %703 = vmatmul.f32.gmra.mxu0 %v469
  %v704 = vpop.f32.mrf.mxu0
  %v705 = vadd.f32 %v646, %v704
  %706 = vmatmul.f32.gmra.mxu0 %v472
  %v707 = vpop.f32.mrf.mxu0
  %v708 = vadd.f32 %v649, %v707
  %709 = vmatmul.f32.gmra.mxu0 %v475
  %v710 = vpop.f32.mrf.mxu0
  %v711 = vadd.f32 %v652, %v710
  %712 = vmatmul.f32.gmra.mxu0 %v478
  %v713 = vpop.f32.mrf.mxu0
  %v714 = vadd.f32 %v655, %v713
  %715 = vmatmul.f32.gmra.mxu0 %v481
  %v716 = vpop.f32.mrf.mxu0
  %v717 = vadd.f32 %v658, %v716
  %718 = vmatmul.f32.gmra.mxu0 %v484
  %v719 = vpop.f32.mrf.mxu0
  %v720 = vadd.f32 %v661, %v719
  %721 = vmatmul.f32.gmra.mxu0 %v487
  %v722 = vpop.f32.mrf.mxu0
  %v723 = vadd.f32 %v664, %v722
  %724 = vmatmul.f32.gmra.mxu0 %v490
  %v725 = vpop.f32.mrf.mxu0
  %v726 = vadd.f32 %v667, %v725
  %727 = vmatmul.f32.gmra.mxu0 %v493
  %v728 = vpop.f32.mrf.mxu0
  %v729 = vadd.f32 %v670, %v728
  %730 = vmatmul.f32.gmra.mxu0 %v496
  %v731 = vpop.f32.mrf.mxu0
  %v732 = vadd.f32 %v673, %v731
  %733 = vmatmul.f32.gmra.mxu0 %v499
  %v734 = vpop.f32.mrf.mxu0
  %v735 = vadd.f32 %v676, %v734
  %736 = vmatmul.f32.gmra.mxu0 %v502
  %v737 = vpop.f32.mrf.mxu0
  %v738 = vadd.f32 %v679, %v737
  %739 = vmatmul.f32.gmra.mxu0 %v505
  %v740 = vpop.f32.mrf.mxu0
  %v741 = vadd.f32 %v682, %v740
  %742 = vdwg.mxu0
  %v743 = vmax.f32 %v584, 0.0
  %v744 = vmax.f32 %v702, 0.0
  %v745 = vmax.f32 %v587, 0.0
  %v746 = vmax.f32 %v705, 0.0
  %v747 = vmax.f32 %v590, 0.0
  %v748 = vmax.f32 %v708, 0.0
  %v749 = vmax.f32 %v593, 0.0
  %v750 = vmax.f32 %v711, 0.0
  %v751 = vmax.f32 %v596, 0.0
  %v752 = vmax.f32 %v714, 0.0
  %v753 = vmax.f32 %v599, 0.0
  %v754 = vmax.f32 %v717, 0.0
  %v755 = vmax.f32 %v602, 0.0
  %v756 = vmax.f32 %v720, 0.0
  %v757 = vmax.f32 %v605, 0.0
  %v758 = vmax.f32 %v723, 0.0
  %v759 = vmax.f32 %v608, 0.0
  %v760 = vmax.f32 %v726, 0.0
  %v761 = vmax.f32 %v611, 0.0
  %v762 = vmax.f32 %v729, 0.0
  %v763 = vmax.f32 %v614, 0.0
  %v764 = vmax.f32 %v732, 0.0
  %v765 = vmax.f32 %v617, 0.0
  %v766 = vmax.f32 %v735, 0.0
  %v767 = vmax.f32 %v620, 0.0
  %v768 = vmax.f32 %v738, 0.0
  %v769 = vmax.f32 %v623, 0.0
  %v770 = vmax.f32 %v741, 0.0
  %v771 = vmax.f32 %v409, %v743
  %v772 = vmax.f32 %v410, %v744
  %v773 = vmax.f32 %v411, %v745
  %v774 = vmax.f32 %v412, %v746
  %v775 = vmax.f32 %v413, %v747
  %v776 = vmax.f32 %v414, %v748
  %v777 = vmax.f32 %v415, %v749
  %v778 = vmax.f32 %v416, %v750
  %v779 = vmax.f32 %v417, %v751
  %v780 = vmax.f32 %v418, %v752
  %v781 = vmax.f32 %v419, %v753
  %v782 = vmax.f32 %v420, %v754
  %v783 = vmax.f32 %v421, %v755
  %v784 = vmax.f32 %v422, %v756
  %v785 = vmax.f32 %v423, %v757
  %v786 = vmax.f32 %v424, %v758
  %v787 = vmax.f32 %v425, %v759
  %v788 = vmax.f32 %v426, %v760
  %v789 = vmax.f32 %v427, %v761
  %v790 = vmax.f32 %v428, %v762
  %v791 = vmax.f32 %v429, %v763
  %v792 = vmax.f32 %v430, %v764
  %v793 = vmax.f32 %v431, %v765
  %v794 = vmax.f32 %v432, %v766
  %v795 = vmax.f32 %v433, %v767
  %v796 = vmax.f32 %v434, %v768
  %v797 = vmax.f32 %v435, %v769
  %v798 = vmax.f32 %v436, %v770
  %v799 = vld [vmem:[%s4] sm:$0xff]
  %v800 = vld [vmem:[%s4 + $0x8] sm:$0xff]
  %v801 = vld [vmem:[%s4 + $0x10] sm:$0xff]
  %v802 = vld [vmem:[%s4 + $0x18] sm:$0xff]
  %v803 = vld [vmem:[%s4 + $0x20] sm:$0xff]
  %v804 = vld [vmem:[%s4 + $0x28] sm:$0xff]
  %v805 = vld [vmem:[%s4 + $0x30] sm:$0xff]
  %v806 = vld [vmem:[%s4 + $0x38] sm:$0xff]
  %v807 = vld [vmem:[%s4 + $0x40] sm:$0xff]
  %v808 = vld [vmem:[%s4 + $0x48] sm:$0xff]
  %v809 = vld [vmem:[%s4 + $0x50] sm:$0xff]
  %v810 = vld [vmem:[%s4 + $0x58] sm:$0xff]
  %v811 = vld [vmem:[%s4 + $0x60] sm:$0xff]
  %v812 = vld [vmem:[%s4 + $0x68] sm:$0xff]
  %v813 = vld [vmem:[%s4 + $0x70] sm:$0xff]
  %v814 = vld [vmem:[%s4 + $0x78] sm:$0xff]
  %v815 = vld [vmem:[%s4 + $0x80] sm:$0xff]
  %v816 = vld [vmem:[%s4 + $0x88] sm:$0xff]
  %v817 = vld [vmem:[%s4 + $0x90] sm:$0xff]
  %v818 = vld [vmem:[%s4 + $0x98] sm:$0xff]
  %v819 = vld [vmem:[%s4 + $0xa0] sm:$0xff]
  %vm820 = vcmask 326656
  %v822 = vsel %vm820, %v772, 0
  %v825 = vsel %vm820, %v774, 0
  %v828 = vsel %vm820, %v776, 0
  %v831 = vsel %vm820, %v778, 0
  %v834 = vsel %vm820, %v780, 0
  %v837 = vsel %vm820, %v782, 0
  %v840 = vsel %vm820, %v784, 0
  %v843 = vsel %vm820, %v786, 0
  %v846 = vsel %vm820, %v788, 0
  %v849 = vsel %vm820, %v790, 0
  %v852 = vsel %vm820, %v792, 0
  %v855 = vsel %vm820, %v794, 0
  %v858 = vsel %vm820, %v796, 0
  %v861 = vsel %vm820, %v798, 0
  %863 = vmatpush.msra.mxu0 %v814
  %864 = vmatpush.msra.mxu0 %v813
  %865 = vmatpush.msra.mxu0 %v812
  %866 = vmatpush.msra.mxu0 %v811
  %867 = vmatpush.msra.mxu0 %v810
  %868 = vmatpush.msra.mxu0 %v809
  %869 = vmatpush.msra.mxu0 %v808
  %870 = vmatpush.msra.mxu0 %v807
  %871 = vmatpush.msra.mxu0 %v806
  %872 = vmatpush.msra.mxu0 %v805
  %873 = vmatpush.msra.mxu0 %v804
  %874 = vmatpush.msra.mxu0 %v803
  %875 = vmatpush.msra.mxu0 %v802
  %876 = vmatpush.msra.mxu0 %v801
  %877 = vmatpush.msra.mxu0 %v800
  %878 = vmatpush.msra.mxu0 %v799
  %879 = vmatmul.f32.gmra.mxu0 %v771
  %v880 = vpop.f32.mrf.mxu0
  %v881 = vadd.f32 0.0, %v880
  %882 = vmatmul.f32.gmra.mxu0 %v773
  %v883 = vpop.f32.mrf.mxu0
  %v884 = vadd.f32 0.0, %v883
  %885 = vmatmul.f32.gmra.mxu0 %v775
  %v886 = vpop.f32.mrf.mxu0
  %v887 = vadd.f32 0.0, %v886
  %888 = vmatmul.f32.gmra.mxu0 %v777
  %v889 = vpop.f32.mrf.mxu0
  %v890 = vadd.f32 0.0, %v889
  %891 = vmatmul.f32.gmra.mxu0 %v779
  %v892 = vpop.f32.mrf.mxu0
  %v893 = vadd.f32 0.0, %v892
  %894 = vmatmul.f32.gmra.mxu0 %v781
  %v895 = vpop.f32.mrf.mxu0
  %v896 = vadd.f32 0.0, %v895
  %897 = vmatmul.f32.gmra.mxu0 %v783
  %v898 = vpop.f32.mrf.mxu0
  %v899 = vadd.f32 0.0, %v898
  %900 = vmatmul.f32.gmra.mxu0 %v785
  %v901 = vpop.f32.mrf.mxu0
  %v902 = vadd.f32 0.0, %v901
  %903 = vmatmul.f32.gmra.mxu0 %v787
  %v904 = vpop.f32.mrf.mxu0
  %v905 = vadd.f32 0.0, %v904
  %906 = vmatmul.f32.gmra.mxu0 %v789
  %v907 = vpop.f32.mrf.mxu0
  %v908 = vadd.f32 0.0, %v907
  %909 = vmatmul.f32.gmra.mxu0 %v791
  %v910 = vpop.f32.mrf.mxu0
  %v911 = vadd.f32 0.0, %v910
  %912 = vmatmul.f32.gmra.mxu0 %v793
  %v913 = vpop.f32.mrf.mxu0
  %v914 = vadd.f32 0.0, %v913
  %915 = vmatmul.f32.gmra.mxu0 %v795
  %v916 = vpop.f32.mrf.mxu0
  %v917 = vadd.f32 0.0, %v916
  %918 = vmatmul.f32.gmra.mxu0 %v797
  %v919 = vpop.f32.mrf.mxu0
  %v920 = vadd.f32 0.0, %v919
  %921 = vdwg.mxu0
  %922 = vmatpush.msra.mxu0 0.0
  %923 = vmatpush.msra.mxu0 0.0
  %924 = vmatpush.msra.mxu0 0.0
  %925 = vmatpush.msra.mxu0 0.0
  %926 = vmatpush.msra.mxu0 0.0
  %927 = vmatpush.msra.mxu0 0.0
  %928 = vmatpush.msra.mxu0 0.0
  %929 = vmatpush.msra.mxu0 0.0
  %930 = vmatpush.msra.mxu0 0.0
  %931 = vmatpush.msra.mxu0 0.0
  %932 = vmatpush.msra.mxu0 0.0
  %933 = vmatpush.msra.mxu0 %v819
  %934 = vmatpush.msra.mxu0 %v818
  %935 = vmatpush.msra.mxu0 %v817
  %936 = vmatpush.msra.mxu0 %v816
  %937 = vmatpush.msra.mxu0 %v815
  %938 = vmatmul.f32.gmra.mxu0 %v822
  %v939 = vpop.f32.mrf.mxu0
  %v940 = vadd.f32 %v881, %v939
  %941 = vmatmul.f32.gmra.mxu0 %v825
  %v942 = vpop.f32.mrf.mxu0
  %v943 = vadd.f32 %v884, %v942
  %944 = vmatmul.f32.gmra.mxu0 %v828
  %v945 = vpop.f32.mrf.mxu0
  %v946 = vadd.f32 %v887, %v945
  %947 = vmatmul.f32.gmra.mxu0 %v831
  %v948 = vpop.f32.mrf.mxu0
  %v949 = vadd.f32 %v890, %v948
  %950 = vmatmul.f32.gmra.mxu0 %v834
  %v951 = vpop.f32.mrf.mxu0
  %v952 = vadd.f32 %v893, %v951
  %953 = vmatmul.f32.gmra.mxu0 %v837
  %v954 = vpop.f32.mrf.mxu0
  %v955 = vadd.f32 %v896, %v954
  %956 = vmatmul.f32.gmra.mxu0 %v840
  %v957 = vpop.f32.mrf.mxu0
  %v958 = vadd.f32 %v899, %v957
  %959 = vmatmul.f32.gmra.mxu0 %v843
  %v960 = vpop.f32.mrf.mxu0
  %v961 = vadd.f32 %v902, %v960
  %962 = vmatmul.f32.gmra.mxu0 %v846
  %v963 = vpop.f32.mrf.mxu0
  %v964 = vadd.f32 %v905, %v963
  %965 = vmatmul.f32.gmra.mxu0 %v849
  %v966 = vpop.f32.mrf.mxu0
  %v967 = vadd.f32 %v908, %v966
  %968 = vmatmul.f32.gmra.mxu0 %v852
  %v969 = vpop.f32.mrf.mxu0
  %v970 = vadd.f32 %v911, %v969
  %971 = vmatmul.f32.gmra.mxu0 %v855
  %v972 = vpop.f32.mrf.mxu0
  %v973 = vadd.f32 %v914, %v972
  %974 = vmatmul.f32.gmra.mxu0 %v858
  %v975 = vpop.f32.mrf.mxu0
  %v976 = vadd.f32 %v917, %v975
  %977 = vmatmul.f32.gmra.mxu0 %v861
  %v978 = vpop.f32.mrf.mxu0
  %v979 = vadd.f32 %v920, %v978
  %980 = vdwg.mxu0
  %v981 = vld [vmem:[%s5] sm:$0xff]
  %v982 = vld [vmem:[%s5 + $0x8] sm:$0xff]
  %v983 = vld [vmem:[%s5 + $0x10] sm:$0xff]
  %v984 = vld [vmem:[%s5 + $0x18] sm:$0xff]
  %v985 = vld [vmem:[%s5 + $0x20] sm:$0xff]
  %v986 = vld [vmem:[%s5 + $0x28] sm:$0xff]
  %v987 = vld [vmem:[%s5 + $0x30] sm:$0xff]
  %v988 = vld [vmem:[%s5 + $0x38] sm:$0xff]
  %v989 = vld [vmem:[%s5 + $0x40] sm:$0xff]
  %v990 = vld [vmem:[%s5 + $0x48] sm:$0xff]
  %v991 = vld [vmem:[%s5 + $0x50] sm:$0xff]
  %v992 = vld [vmem:[%s5 + $0x58] sm:$0xff]
  %v993 = vld [vmem:[%s5 + $0x60] sm:$0xff]
  %v994 = vld [vmem:[%s5 + $0x68] sm:$0xff]
  %v995 = vld [vmem:[%s5 + $0x70] sm:$0xff]
  %v996 = vld [vmem:[%s5 + $0x78] sm:$0xff]
  %v997 = vld [vmem:[%s5 + $0x80] sm:$0xff]
  %v998 = vld [vmem:[%s5 + $0x88] sm:$0xff]
  %v999 = vld [vmem:[%s5 + $0x90] sm:$0xff]
  %v1000 = vld [vmem:[%s5 + $0x98] sm:$0xff]
  %v1001 = vld [vmem:[%s5 + $0xa0] sm:$0xff]
  %1002 = vmatpush.msra.mxu0 %v996
  %1003 = vmatpush.msra.mxu0 %v995
  %1004 = vmatpush.msra.mxu0 %v994
  %1005 = vmatpush.msra.mxu0 %v993
  %1006 = vmatpush.msra.mxu0 %v992
  %1007 = vmatpush.msra.mxu0 %v991
  %1008 = vmatpush.msra.mxu0 %v990
  %1009 = vmatpush.msra.mxu0 %v989
  %1010 = vmatpush.msra.mxu0 %v988
  %1011 = vmatpush.msra.mxu0 %v987
  %1012 = vmatpush.msra.mxu0 %v986
  %1013 = vmatpush.msra.mxu0 %v985
  %1014 = vmatpush.msra.mxu0 %v984
  %1015 = vmatpush.msra.mxu0 %v983
  %1016 = vmatpush.msra.mxu0 %v982
  %1017 = vmatpush.msra.mxu0 %v981
  %1018 = vmatmul.f32.gmra.mxu0 %v771
  %v1019 = vpop.f32.mrf.mxu0
  %v1020 = vadd.f32 0.0, %v1019
  %1021 = vmatmul.f32.gmra.mxu0 %v773
  %v1022 = vpop.f32.mrf.mxu0
  %v1023 = vadd.f32 0.0, %v1022
  %1024 = vmatmul.f32.gmra.mxu0 %v775
  %v1025 = vpop.f32.mrf.mxu0
  %v1026 = vadd.f32 0.0, %v1025
  %1027 = vmatmul.f32.gmra.mxu0 %v777
  %v1028 = vpop.f32.mrf.mxu0
  %v1029 = vadd.f32 0.0, %v1028
  %1030 = vmatmul.f32.gmra.mxu0 %v779
  %v1031 = vpop.f32.mrf.mxu0
  %v1032 = vadd.f32 0.0, %v1031
  %1033 = vmatmul.f32.gmra.mxu0 %v781
  %v1034 = vpop.f32.mrf.mxu0
  %v1035 = vadd.f32 0.0, %v1034
  %1036 = vmatmul.f32.gmra.mxu0 %v783
  %v1037 = vpop.f32.mrf.mxu0
  %v1038 = vadd.f32 0.0, %v1037
  %1039 = vmatmul.f32.gmra.mxu0 %v785
  %v1040 = vpop.f32.mrf.mxu0
  %v1041 = vadd.f32 0.0, %v1040
  %1042 = vmatmul.f32.gmra.mxu0 %v787
  %v1043 = vpop.f32.mrf.mxu0
  %v1044 = vadd.f32 0.0, %v1043
  %1045 = vmatmul.f32.gmra.mxu0 %v789
  %v1046 = vpop.f32.mrf.mxu0
  %v1047 = vadd.f32 0.0, %v1046
  %1048 = vmatmul.f32.gmra.mxu0 %v791
  %v1049 = vpop.f32.mrf.mxu0
  %v1050 = vadd.f32 0.0, %v1049
  %1051 = vmatmul.f32.gmra.mxu0 %v793
  %v1052 = vpop.f32.mrf.mxu0
  %v1053 = vadd.f32 0.0, %v1052
  %1054 = vmatmul.f32.gmra.mxu0 %v795
  %v1055 = vpop.f32.mrf.mxu0
  %v1056 = vadd.f32 0.0, %v1055
  %1057 = vmatmul.f32.gmra.mxu0 %v797
  %v1058 = vpop.f32.mrf.mxu0
  %v1059 = vadd.f32 0.0, %v1058
  %1060 = vdwg.mxu0
  %1061 = vmatpush.msra.mxu0 0.0
  %1062 = vmatpush.msra.mxu0 0.0
  %1063 = vmatpush.msra.mxu0 0.0
  %1064 = vmatpush.msra.mxu0 0.0
  %1065 = vmatpush.msra.mxu0 0.0
  %1066 = vmatpush.msra.mxu0 0.0
  %1067 = vmatpush.msra.mxu0 0.0
  %1068 = vmatpush.msra.mxu0 0.0
  %1069 = vmatpush.msra.mxu0 0.0
  %1070 = vmatpush.msra.mxu0 0.0
  %1071 = vmatpush.msra.mxu0 0.0
  %1072 = vmatpush.msra.mxu0 %v1001
  %1073 = vmatpush.msra.mxu0 %v1000
  %1074 = vmatpush.msra.mxu0 %v999
  %1075 = vmatpush.msra.mxu0 %v998
  %1076 = vmatpush.msra.mxu0 %v997
  %1077 = vmatmul.f32.gmra.mxu0 %v822
  %v1078 = vpop.f32.mrf.mxu0
  %v1079 = vadd.f32 %v1020, %v1078
  %1080 = vmatmul.f32.gmra.mxu0 %v825
  %v1081 = vpop.f32.mrf.mxu0
  %v1082 = vadd.f32 %v1023, %v1081
  %1083 = vmatmul.f32.gmra.mxu0 %v828
  %v1084 = vpop.f32.mrf.mxu0
  %v1085 = vadd.f32 %v1026, %v1084
  %1086 = vmatmul.f32.gmra.mxu0 %v831
  %v1087 = vpop.f32.mrf.mxu0
  %v1088 = vadd.f32 %v1029, %v1087
  %1089 = vmatmul.f32.gmra.mxu0 %v834
  %v1090 = vpop.f32.mrf.mxu0
  %v1091 = vadd.f32 %v1032, %v1090
  %1092 = vmatmul.f32.gmra.mxu0 %v837
  %v1093 = vpop.f32.mrf.mxu0
  %v1094 = vadd.f32 %v1035, %v1093
  %1095 = vmatmul.f32.gmra.mxu0 %v840
  %v1096 = vpop.f32.mrf.mxu0
  %v1097 = vadd.f32 %v1038, %v1096
  %1098 = vmatmul.f32.gmra.mxu0 %v843
  %v1099 = vpop.f32.mrf.mxu0
  %v1100 = vadd.f32 %v1041, %v1099
  %1101 = vmatmul.f32.gmra.mxu0 %v846
  %v1102 = vpop.f32.mrf.mxu0
  %v1103 = vadd.f32 %v1044, %v1102
  %1104 = vmatmul.f32.gmra.mxu0 %v849
  %v1105 = vpop.f32.mrf.mxu0
  %v1106 = vadd.f32 %v1047, %v1105
  %1107 = vmatmul.f32.gmra.mxu0 %v852
  %v1108 = vpop.f32.mrf.mxu0
  %v1109 = vadd.f32 %v1050, %v1108
  %1110 = vmatmul.f32.gmra.mxu0 %v855
  %v1111 = vpop.f32.mrf.mxu0
  %v1112 = vadd.f32 %v1053, %v1111
  %1113 = vmatmul.f32.gmra.mxu0 %v858
  %v1114 = vpop.f32.mrf.mxu0
  %v1115 = vadd.f32 %v1056, %v1114
  %1116 = vmatmul.f32.gmra.mxu0 %v861
  %v1117 = vpop.f32.mrf.mxu0
  %v1118 = vadd.f32 %v1059, %v1117
  %1119 = vdwg.mxu0
  %v1120 = vmax.f32 %v940, %v1079
  %v1121 = vmax.f32 %v943, %v1082
  %v1122 = vmax.f32 %v946, %v1085
  %v1123 = vmax.f32 %v949, %v1088
  %v1124 = vmax.f32 %v952, %v1091
  %v1125 = vmax.f32 %v955, %v1094
  %v1126 = vmax.f32 %v958, %v1097
  %v1127 = vmax.f32 %v961, %v1100
  %v1128 = vmax.f32 %v964, %v1103
  %v1129 = vmax.f32 %v967, %v1106
  %v1130 = vmax.f32 %v970, %v1109
  %v1131 = vmax.f32 %v973, %v1112
  %v1132 = vmax.f32 %v976, %v1115
  %v1133 = vmax.f32 %v979, %v1118
  %vm1148 = vcmask 1046528
  %v1149 = vrot.slane %v1120, 1
  %v1150 = vrot.slane %v1121, 1
  %v1151 = vsel %vm1148, %v1149, %v1150
  %v1152 = vrot.slane %v1122, 1
  %v1153 = vsel %vm1148, %v1150, %v1152
  %v1154 = vrot.slane %v1123, 1
  %v1155 = vsel %vm1148, %v1152, %v1154
  %v1156 = vrot.slane %v1124, 1
  %v1157 = vsel %vm1148, %v1154, %v1156
  %v1158 = vrot.slane %v1125, 1
  %v1159 = vsel %vm1148, %v1156, %v1158
  %v1160 = vrot.slane %v1126, 1
  %v1161 = vsel %vm1148, %v1158, %v1160
  %v1162 = vrot.slane %v1127, 1
  %v1163 = vsel %vm1148, %v1160, %v1162
  %v1164 = vrot.slane %v1128, 1
  %v1165 = vsel %vm1148, %v1162, %v1164
  %v1166 = vrot.slane %v1129, 1
  %v1167 = vsel %vm1148, %v1164, %v1166
  %v1168 = vrot.slane %v1130, 1
  %v1169 = vsel %vm1148, %v1166, %v1168
  %v1170 = vrot.slane %v1131, 1
  %v1171 = vsel %vm1148, %v1168, %v1170
  %v1172 = vrot.slane %v1132, 1
  %v1173 = vsel %vm1148, %v1170, %v1172
  %v1174 = vrot.slane %v1133, 1
  %v1175 = vsel %vm1148, %v1172, %v1174
  %vm1190 = vcmask 1045504
  %v1191 = vrot.slane %v1120, 2
  %v1192 = vrot.slane %v1121, 2
  %v1193 = vsel %vm1190, %v1191, %v1192
  %v1194 = vrot.slane %v1122, 2
  %v1195 = vsel %vm1190, %v1192, %v1194
  %v1196 = vrot.slane %v1123, 2
  %v1197 = vsel %vm1190, %v1194, %v1196
  %v1198 = vrot.slane %v1124, 2
  %v1199 = vsel %vm1190, %v1196, %v1198
  %v1200 = vrot.slane %v1125, 2
  %v1201 = vsel %vm1190, %v1198, %v1200
  %v1202 = vrot.slane %v1126, 2
  %v1203 = vsel %vm1190, %v1200, %v1202
  %v1204 = vrot.slane %v1127, 2
  %v1205 = vsel %vm1190, %v1202, %v1204
  %v1206 = vrot.slane %v1128, 2
  %v1207 = vsel %vm1190, %v1204, %v1206
  %v1208 = vrot.slane %v1129, 2
  %v1209 = vsel %vm1190, %v1206, %v1208
  %v1210 = vrot.slane %v1130, 2
  %v1211 = vsel %vm1190, %v1208, %v1210
  %v1212 = vrot.slane %v1131, 2
  %v1213 = vsel %vm1190, %v1210, %v1212
  %v1214 = vrot.slane %v1132, 2
  %v1215 = vsel %vm1190, %v1212, %v1214
  %v1216 = vrot.slane %v1133, 2
  %v1217 = vsel %vm1190, %v1214, %v1216
  %vm1232 = vcmask 1044480
  %v1233 = vrot.slane %v1120, 3
  %v1234 = vrot.slane %v1121, 3
  %v1235 = vsel %vm1232, %v1233, %v1234
  %v1236 = vrot.slane %v1122, 3
  %v1237 = vsel %vm1232, %v1234, %v1236
  %v1238 = vrot.slane %v1123, 3
  %v1239 = vsel %vm1232, %v1236, %v1238
  %v1240 = vrot.slane %v1124, 3
  %v1241 = vsel %vm1232, %v1238, %v1240
  %v1242 = vrot.slane %v1125, 3
  %v1243 = vsel %vm1232, %v1240, %v1242
  %v1244 = vrot.slane %v1126, 3
  %v1245 = vsel %vm1232, %v1242, %v1244
  %v1246 = vrot.slane %v1127, 3
  %v1247 = vsel %vm1232, %v1244, %v1246
  %v1248 = vrot.slane %v1128, 3
  %v1249 = vsel %vm1232, %v1246, %v1248
  %v1250 = vrot.slane %v1129, 3
  %v1251 = vsel %vm1232, %v1248, %v1250
  %v1252 = vrot.slane %v1130, 3
  %v1253 = vsel %vm1232, %v1250, %v1252
  %v1254 = vrot.slane %v1131, 3
  %v1255 = vsel %vm1232, %v1252, %v1254
  %v1256 = vrot.slane %v1132, 3
  %v1257 = vsel %vm1232, %v1254, %v1256
  %v1258 = vrot.slane %v1133, 3
  %v1259 = vsel %vm1232, %v1256, %v1258
  %vm1274 = vcmask 1043456
  %v1275 = vrot.slane %v1120, 4
  %v1276 = vrot.slane %v1121, 4
  %v1277 = vsel %vm1274, %v1275, %v1276
  %v1278 = vrot.slane %v1122, 4
  %v1279 = vsel %vm1274, %v1276, %v1278
  %v1280 = vrot.slane %v1123, 4
  %v1281 = vsel %vm1274, %v1278, %v1280
  %v1282 = vrot.slane %v1124, 4
  %v1283 = vsel %vm1274, %v1280, %v1282
  %v1284 = vrot.slane %v1125, 4
  %v1285 = vsel %vm1274, %v1282, %v1284
  %v1286 = vrot.slane %v1126, 4
  %v1287 = vsel %vm1274, %v1284, %v1286
  %v1288 = vrot.slane %v1127, 4
  %v1289 = vsel %vm1274, %v1286, %v1288
  %v1290 = vrot.slane %v1128, 4
  %v1291 = vsel %vm1274, %v1288, %v1290
  %v1292 = vrot.slane %v1129, 4
  %v1293 = vsel %vm1274, %v1290, %v1292
  %v1294 = vrot.slane %v1130, 4
  %v1295 = vsel %vm1274, %v1292, %v1294
  %v1296 = vrot.slane %v1131, 4
  %v1297 = vsel %vm1274, %v1294, %v1296
  %v1298 = vrot.slane %v1132, 4
  %v1299 = vsel %vm1274, %v1296, %v1298
  %v1300 = vrot.slane %v1133, 4
  %v1301 = vsel %vm1274, %v1298, %v1300
  %v1316 = vld [vmem:[%s6] sm:$0xff]
  %v1317 = vld [vmem:[%s6 + $0x8] sm:$0xff]
  %v1318 = vld [vmem:[%s6 + $0x10] sm:$0xff]
  %v1319 = vld [vmem:[%s6 + $0x18] sm:$0xff]
  %v1320 = vld [vmem:[%s6 + $0x20] sm:$0xff]
  %v1321 = vld [vmem:[%s6 + $0x28] sm:$0xff]
  %v1322 = vld [vmem:[%s6 + $0x30] sm:$0xff]
  %v1323 = vld [vmem:[%s6 + $0x38] sm:$0xff]
  %v1324 = vld [vmem:[%s6 + $0x40] sm:$0xff]
  %v1325 = vld [vmem:[%s6 + $0x48] sm:$0xff]
  %v1326 = vld [vmem:[%s6 + $0x50] sm:$0xff]
  %v1327 = vld [vmem:[%s6 + $0x58] sm:$0xff]
  %v1328 = vld [vmem:[%s6 + $0x60] sm:$0xff]
  %v1329 = vld [vmem:[%s6 + $0x68] sm:$0xff]
  %v1330 = vld [vmem:[%s6 + $0x70] sm:$0xff]
  %v1331 = vld [vmem:[%s6 + $0x78] sm:$0xff]
  %v1332 = vld [vmem:[%s6 + $0x80] sm:$0xff]
  %v1333 = vld [vmem:[%s6 + $0x88] sm:$0xff]
  %v1334 = vld [vmem:[%s6 + $0x90] sm:$0xff]
  %v1335 = vld [vmem:[%s6 + $0x98] sm:$0xff]
  %v1336 = vld [vmem:[%s6 + $0xa0] sm:$0xff]
  %v1337 = vld [vmem:[%s6 + $0xa8] sm:$0xff]
  %v1338 = vld [vmem:[%s6 + $0xb0] sm:$0xff]
  %v1339 = vld [vmem:[%s6 + $0xb8] sm:$0xff]
  %v1340 = vld [vmem:[%s6 + $0xc0] sm:$0xff]
  %v1341 = vld [vmem:[%s6 + $0xc8] sm:$0xff]
  %v1342 = vld [vmem:[%s6 + $0xd0] sm:$0xff]
  %v1343 = vld [vmem:[%s6 + $0xd8] sm:$0xff]
  %v1344 = vld [vmem:[%s6 + $0xe0] sm:$0xff]
  %v1345 = vld [vmem:[%s6 + $0xe8] sm:$0xff]
  %v1346 = vld [vmem:[%s6 + $0xf0] sm:$0xff]
  %v1347 = vld [vmem:[%s6 + $0xf8] sm:$0xff]
  %v1348 = vld [vmem:[%s6 + $0x100] sm:$0xff]
  %v1349 = vld [vmem:[%s6 + $0x108] sm:$0xff]
  %v1350 = vld [vmem:[%s6 + $0x110] sm:$0xff]
  %v1351 = vld [vmem:[%s6 + $0x118] sm:$0xff]
  %v1352 = vld [vmem:[%s6 + $0x120] sm:$0xff]
  %v1353 = vld [vmem:[%s6 + $0x128] sm:$0xff]
  %v1354 = vld [vmem:[%s6 + $0x130] sm:$0xff]
  %v1355 = vld [vmem:[%s6 + $0x138] sm:$0xff]
  %v1356 = vld [vmem:[%s6 + $0x140] sm:$0xff]
  %v1357 = vld [vmem:[%s6 + $0x148] sm:$0xff]
  %v1358 = vld [vmem:[%s6 + $0x150] sm:$0xff]
  %v1359 = vld [vmem:[%s6 + $0x158] sm:$0xff]
  %v1360 = vld [vmem:[%s6 + $0x160] sm:$0xff]
  %v1361 = vld [vmem:[%s6 + $0x168] sm:$0xff]
  %v1362 = vld [vmem:[%s6 + $0x170] sm:$0xff]
  %v1363 = vld [vmem:[%s6 + $0x178] sm:$0xff]
  %v1364 = vld [vmem:[%s6 + $0x180] sm:$0xff]
  %v1365 = vld [vmem:[%s6 + $0x188] sm:$0xff]
  %v1366 = vld [vmem:[%s6 + $0x190] sm:$0xff]
  %v1367 = vld [vmem:[%s6 + $0x198] sm:$0xff]
  %v1368 = vld [vmem:[%s6 + $0x1a0] sm:$0xff]
  %v1369 = vld [vmem:[%s6 + $0x1a8] sm:$0xff]
  %v1370 = vld [vmem:[%s6 + $0x1b0] sm:$0xff]
  %v1371 = vld [vmem:[%s6 + $0x1b8] sm:$0xff]
  %v1372 = vld [vmem:[%s6 + $0x1c0] sm:$0xff]
  %v1373 = vld [vmem:[%s6 + $0x1c8] sm:$0xff]
  %v1374 = vld [vmem:[%s6 + $0x1d0] sm:$0xff]
  %v1375 = vld [vmem:[%s6 + $0x1d8] sm:$0xff]
  %v1376 = vld [vmem:[%s6 + $0x1e0] sm:$0xff]
  %v1377 = vld [vmem:[%s6 + $0x1e8] sm:$0xff]
  %v1378 = vld [vmem:[%s6 + $0x1f0] sm:$0xff]
  %v1379 = vld [vmem:[%s6 + $0x1f8] sm:$0xff]
  %v1380 = vld [vmem:[%s6 + $0x200] sm:$0xff]
  %v1381 = vld [vmem:[%s6 + $0x208] sm:$0xff]
  %v1382 = vld [vmem:[%s6 + $0x210] sm:$0xff]
  %v1383 = vld [vmem:[%s6 + $0x218] sm:$0xff]
  %v1384 = vld [vmem:[%s6 + $0x220] sm:$0xff]
  %v1385 = vld [vmem:[%s6 + $0x228] sm:$0xff]
  %v1386 = vld [vmem:[%s6 + $0x230] sm:$0xff]
  %v1387 = vld [vmem:[%s6 + $0x238] sm:$0xff]
  %v1388 = vld [vmem:[%s6 + $0x240] sm:$0xff]
  %v1389 = vld [vmem:[%s6 + $0x248] sm:$0xff]
  %v1390 = vld [vmem:[%s6 + $0x250] sm:$0xff]
  %v1391 = vld [vmem:[%s6 + $0x258] sm:$0xff]
  %v1392 = vld [vmem:[%s6 + $0x260] sm:$0xff]
  %v1393 = vld [vmem:[%s6 + $0x268] sm:$0xff]
  %v1394 = vld [vmem:[%s6 + $0x270] sm:$0xff]
  %v1395 = vld [vmem:[%s6 + $0x278] sm:$0xff]
  %v1396 = vld [vmem:[%s6 + $0x280] sm:$0xff]
  %v1397 = vld [vmem:[%s6 + $0x288] sm:$0xff]
  %v1398 = vld [vmem:[%s6 + $0x290] sm:$0xff]
  %v1399 = vld [vmem:[%s6 + $0x298] sm:$0xff]
  %v1400 = vld [vmem:[%s6 + $0x2a0] sm:$0xff]
  %v1401 = vld [vmem:[%s6 + $0x2a8] sm:$0xff]
  %v1402 = vld [vmem:[%s6 + $0x2b0] sm:$0xff]
  %v1403 = vld [vmem:[%s6 + $0x2b8] sm:$0xff]
  %v1404 = vld [vmem:[%s6 + $0x2c0] sm:$0xff]
  %v1405 = vld [vmem:[%s6 + $0x2c8] sm:$0xff]
  %v1406 = vld [vmem:[%s6 + $0x2d0] sm:$0xff]
  %v1407 = vld [vmem:[%s6 + $0x2d8] sm:$0xff]
  %v1408 = vld [vmem:[%s6 + $0x2e0] sm:$0xff]
  %v1409 = vld [vmem:[%s6 + $0x2e8] sm:$0xff]
  %v1410 = vld [vmem:[%s6 + $0x2f0] sm:$0xff]
  %v1411 = vld [vmem:[%s6 + $0x2f8] sm:$0xff]
  %v1412 = vld [vmem:[%s6 + $0x300] sm:$0xff]
  %v1413 = vld [vmem:[%s6 + $0x308] sm:$0xff]
  %v1414 = vld [vmem:[%s6 + $0x310] sm:$0xff]
  %v1415 = vld [vmem:[%s6 + $0x318] sm:$0xff]
  %v1416 = vld [vmem:[%s6 + $0x320] sm:$0xff]
  %v1417 = vld [vmem:[%s6 + $0x328] sm:$0xff]
  %v1418 = vld [vmem:[%s6 + $0x330] sm:$0xff]
  %v1419 = vld [vmem:[%s6 + $0x338] sm:$0xff]
  %v1420 = vld [vmem:[%s6 + $0x340] sm:$0xff]
  %v1421 = vld [vmem:[%s6 + $0x348] sm:$0xff]
  %v1422 = vld [vmem:[%s6 + $0x350] sm:$0xff]
  %v1423 = vld [vmem:[%s6 + $0x358] sm:$0xff]
  %v1424 = vld [vmem:[%s6 + $0x360] sm:$0xff]
  %v1425 = vld [vmem:[%s6 + $0x368] sm:$0xff]
  %v1426 = vld [vmem:[%s6 + $0x370] sm:$0xff]
  %v1427 = vld [vmem:[%s6 + $0x378] sm:$0xff]
  %v1428 = vld [vmem:[%s6 + $0x380] sm:$0xff]
  %v1429 = vld [vmem:[%s6 + $0x388] sm:$0xff]
  %v1430 = vld [vmem:[%s6 + $0x390] sm:$0xff]
  %v1431 = vld [vmem:[%s6 + $0x398] sm:$0xff]
  %v1432 = vld [vmem:[%s6 + $0x3a0] sm:$0xff]
  %v1433 = vld [vmem:[%s6 + $0x3a8] sm:$0xff]
  %v1434 = vld [vmem:[%s6 + $0x3b0] sm:$0xff]
  %v1435 = vld [vmem:[%s6 + $0x3b8] sm:$0xff]
  %v1436 = vld [vmem:[%s6 + $0x3c0] sm:$0xff]
  %v1437 = vld [vmem:[%s6 + $0x3c8] sm:$0xff]
  %v1438 = vld [vmem:[%s6 + $0x3d0] sm:$0xff]
  %v1439 = vld [vmem:[%s6 + $0x3d8] sm:$0xff]
  %v1440 = vld [vmem:[%s6 + $0x3e0] sm:$0xff]
  %v1441 = vld [vmem:[%s6 + $0x3e8] sm:$0xff]
  %v1442 = vld [vmem:[%s6 + $0x3f0] sm:$0xff]
  %v1443 = vld [vmem:[%s6 + $0x3f8] sm:$0xff]
  %v1444 = vld [vmem:[%s6 + $0x400] sm:$0xff]
  %v1445 = vld [vmem:[%s6 + $0x408] sm:$0xff]
  %v1446 = vld [vmem:[%s6 + $0x410] sm:$0xff]
  %v1447 = vld [vmem:[%s6 + $0x418] sm:$0xff]
  %v1448 = vld [vmem:[%s6 + $0x420] sm:$0xff]
  %v1449 = vld [vmem:[%s6 + $0x428] sm:$0xff]
  %v1450 = vld [vmem:[%s6 + $0x430] sm:$0xff]
  %v1451 = vld [vmem:[%s6 + $0x438] sm:$0xff]
  %v1452 = vld [vmem:[%s6 + $0x440] sm:$0xff]
  %v1453 = vld [vmem:[%s6 + $0x448] sm:$0xff]
  %v1454 = vld [vmem:[%s6 + $0x450] sm:$0xff]
  %v1455 = vld [vmem:[%s6 + $0x458] sm:$0xff]
  %v1456 = vld [vmem:[%s6 + $0x460] sm:$0xff]
  %v1457 = vld [vmem:[%s6 + $0x468] sm:$0xff]
  %v1458 = vld [vmem:[%s6 + $0x470] sm:$0xff]
  %v1459 = vld [vmem:[%s6 + $0x478] sm:$0xff]
  %v1460 = vld [vmem:[%s6 + $0x480] sm:$0xff]
  %v1461 = vld [vmem:[%s6 + $0x488] sm:$0xff]
  %v1462 = vld [vmem:[%s6 + $0x490] sm:$0xff]
  %v1463 = vld [vmem:[%s6 + $0x498] sm:$0xff]
  %v1464 = vld [vmem:[%s6 + $0x4a0] sm:$0xff]
  %v1465 = vld [vmem:[%s6 + $0x4a8] sm:$0xff]
  %v1466 = vld [vmem:[%s6 + $0x4b0] sm:$0xff]
  %v1467 = vld [vmem:[%s6 + $0x4b8] sm:$0xff]
  %v1468 = vld [vmem:[%s6 + $0x4c0] sm:$0xff]
  %v1469 = vld [vmem:[%s6 + $0x4c8] sm:$0xff]
  %v1470 = vld [vmem:[%s6 + $0x4d0] sm:$0xff]
  %v1471 = vld [vmem:[%s6 + $0x4d8] sm:$0xff]
  %v1472 = vld [vmem:[%s6 + $0x4e0] sm:$0xff]
  %v1473 = vld [vmem:[%s6 + $0x4e8] sm:$0xff]
  %v1474 = vld [vmem:[%s6 + $0x4f0] sm:$0xff]
  %v1475 = vld [vmem:[%s6 + $0x4f8] sm:$0xff]
  %v1476 = vld [vmem:[%s7] sm:$0x3]
  %v1478 = vperm.slane %v1476, 0
  %v1479 = vperm.slane %v1476, 1
  %1482 = vmatpush.msra.mxu0 %v1346
  %1483 = vmatpush.msra.mxu0 %v1344
  %1484 = vmatpush.msra.mxu0 %v1342
  %1485 = vmatpush.msra.mxu0 %v1340
  %1486 = vmatpush.msra.mxu0 %v1338
  %1487 = vmatpush.msra.mxu0 %v1336
  %1488 = vmatpush.msra.mxu0 %v1334
  %1489 = vmatpush.msra.mxu0 %v1332
  %1490 = vmatpush.msra.mxu0 %v1330
  %1491 = vmatpush.msra.mxu0 %v1328
  %1492 = vmatpush.msra.mxu0 %v1326
  %1493 = vmatpush.msra.mxu0 %v1324
  %1494 = vmatpush.msra.mxu0 %v1322
  %1495 = vmatpush.msra.mxu0 %v1320
  %1496 = vmatpush.msra.mxu0 %v1318
  %1497 = vmatpush.msra.mxu0 %v1316
  %1498 = vmatmul.f32.gmra.mxu0 %v1120
  %v1499 = vpop.f32.mrf.mxu0
  %v1500 = vadd.f32 %v1478, %v1499
  %1501 = vmatmul.f32.gmra.mxu0 %v1121
  %v1502 = vpop.f32.mrf.mxu0
  %v1503 = vadd.f32 %v1478, %v1502
  %1504 = vmatmul.f32.gmra.mxu0 %v1122
  %v1505 = vpop.f32.mrf.mxu0
  %v1506 = vadd.f32 %v1478, %v1505
  %1507 = vmatmul.f32.gmra.mxu0 %v1123
  %v1508 = vpop.f32.mrf.mxu0
  %v1509 = vadd.f32 %v1478, %v1508
  %1510 = vmatmul.f32.gmra.mxu0 %v1124
  %v1511 = vpop.f32.mrf.mxu0
  %v1512 = vadd.f32 %v1478, %v1511
  %1513 = vmatmul.f32.gmra.mxu0 %v1125
  %v1514 = vpop.f32.mrf.mxu0
  %v1515 = vadd.f32 %v1478, %v1514
  %1516 = vmatmul.f32.gmra.mxu0 %v1126
  %v1517 = vpop.f32.mrf.mxu0
  %v1518 = vadd.f32 %v1478, %v1517
  %1519 = vmatmul.f32.gmra.mxu0 %v1127
  %v1520 = vpop.f32.mrf.mxu0
  %v1521 = vadd.f32 %v1478, %v1520
  %1522 = vmatmul.f32.gmra.mxu0 %v1128
  %v1523 = vpop.f32.mrf.mxu0
  %v1524 = vadd.f32 %v1478, %v1523
  %1525 = vmatmul.f32.gmra.mxu0 %v1129
  %v1526 = vpop.f32.mrf.mxu0
  %v1527 = vadd.f32 %v1478, %v1526
  %1528 = vmatmul.f32.gmra.mxu0 %v1130
  %v1529 = vpop.f32.mrf.mxu0
  %v1530 = vadd.f32 %v1478, %v1529
  %1531 = vmatmul.f32.gmra.mxu0 %v1131
  %v1532 = vpop.f32.mrf.mxu0
  %v1533 = vadd.f32 %v1478, %v1532
  %1534 = vmatmul.f32.gmra.mxu0 %v1132
  %v1535 = vpop.f32.mrf.mxu0
  %v1536 = vadd.f32 %v1478, %v1535
  %1537 = vmatmul.f32.gmra.mxu0 %v1133
  %v1538 = vpop.f32.mrf.mxu0
  %v1539 = vadd.f32 %v1478, %v1538
  %1540 = vdwg.mxu0
  %1541 = vmatpush.msra.mxu0 %v1378
  %1542 = vmatpush.msra.mxu0 %v1376
  %1543 = vmatpush.msra.mxu0 %v1374
  %1544 = vmatpush.msra.mxu0 %v1372
  %1545 = vmatpush.msra.mxu0 %v1370
  %1546 = vmatpush.msra.mxu0 %v1368
  %1547 = vmatpush.msra.mxu0 %v1366
  %1548 = vmatpush.msra.mxu0 %v1364
  %1549 = vmatpush.msra.mxu0 %v1362
  %1550 = vmatpush.msra.mxu0 %v1360
  %1551 = vmatpush.msra.mxu0 %v1358
  %1552 = vmatpush.msra.mxu0 %v1356
  %1553 = vmatpush.msra.mxu0 %v1354
  %1554 = vmatpush.msra.mxu0 %v1352
  %1555 = vmatpush.msra.mxu0 %v1350
  %1556 = vmatpush.msra.mxu0 %v1348
  %1557 = vmatmul.f32.gmra.mxu0 %v1151
  %v1558 = vpop.f32.mrf.mxu0
  %v1559 = vadd.f32 %v1500, %v1558
  %1560 = vmatmul.f32.gmra.mxu0 %v1153
  %v1561 = vpop.f32.mrf.mxu0
  %v1562 = vadd.f32 %v1503, %v1561
  %1563 = vmatmul.f32.gmra.mxu0 %v1155
  %v1564 = vpop.f32.mrf.mxu0
  %v1565 = vadd.f32 %v1506, %v1564
  %1566 = vmatmul.f32.gmra.mxu0 %v1157
  %v1567 = vpop.f32.mrf.mxu0
  %v1568 = vadd.f32 %v1509, %v1567
  %1569 = vmatmul.f32.gmra.mxu0 %v1159
  %v1570 = vpop.f32.mrf.mxu0
  %v1571 = vadd.f32 %v1512, %v1570
  %1572 = vmatmul.f32.gmra.mxu0 %v1161
  %v1573 = vpop.f32.mrf.mxu0
  %v1574 = vadd.f32 %v1515, %v1573
  %1575 = vmatmul.f32.gmra.mxu0 %v1163
  %v1576 = vpop.f32.mrf.mxu0
  %v1577 = vadd.f32 %v1518, %v1576
  %1578 = vmatmul.f32.gmra.mxu0 %v1165
  %v1579 = vpop.f32.mrf.mxu0
  %v1580 = vadd.f32 %v1521, %v1579
  %1581 = vmatmul.f32.gmra.mxu0 %v1167
  %v1582 = vpop.f32.mrf.mxu0
  %v1583 = vadd.f32 %v1524, %v1582
  %1584 = vmatmul.f32.gmra.mxu0 %v1169
  %v1585 = vpop.f32.mrf.mxu0
  %v1586 = vadd.f32 %v1527, %v1585
  %1587 = vmatmul.f32.gmra.mxu0 %v1171
  %v1588 = vpop.f32.mrf.mxu0
  %v1589 = vadd.f32 %v1530, %v1588
  %1590 = vmatmul.f32.gmra.mxu0 %v1173
  %v1591 = vpop.f32.mrf.mxu0
  %v1592 = vadd.f32 %v1533, %v1591
  %1593 = vmatmul.f32.gmra.mxu0 %v1175
  %v1594 = vpop.f32.mrf.mxu0
  %v1595 = vadd.f32 %v1536, %v1594
  %1596 = vmatmul.f32.gmra.mxu0 %v1174
  %v1597 = vpop.f32.mrf.mxu0
  %v1598 = vadd.f32 %v1539, %v1597
  %1599 = vdwg.mxu0
  %1600 = vmatpush.msra.mxu0 %v1410
  %1601 = vmatpush.msra.mxu0 %v1408
  %1602 = vmatpush.msra.mxu0 %v1406
  %1603 = vmatpush.msra.mxu0 %v1404
  %1604 = vmatpush.msra.mxu0 %v1402
  %1605 = vmatpush.msra.mxu0 %v1400
  %1606 = vmatpush.msra.mxu0 %v1398
  %1607 = vmatpush.msra.mxu0 %v1396
  %1608 = vmatpush.msra.mxu0 %v1394
  %1609 = vmatpush.msra.mxu0 %v1392
  %1610 = vmatpush.msra.mxu0 %v1390
  %1611 = vmatpush.msra.mxu0 %v1388
  %1612 = vmatpush.msra.mxu0 %v1386
  %1613 = vmatpush.msra.mxu0 %v1384
  %1614 = vmatpush.msra.mxu0 %v1382
  %1615 = vmatpush.msra.mxu0 %v1380
  %1616 = vmatmul.f32.gmra.mxu0 %v1193
  %v1617 = vpop.f32.mrf.mxu0
  %v1618 = vadd.f32 %v1559, %v1617
  %1619 = vmatmul.f32.gmra.mxu0 %v1195
  %v1620 = vpop.f32.mrf.mxu0
  %v1621 = vadd.f32 %v1562, %v1620
  %1622 = vmatmul.f32.gmra.mxu0 %v1197
  %v1623 = vpop.f32.mrf.mxu0
  %v1624 = vadd.f32 %v1565, %v1623
  %1625 = vmatmul.f32.gmra.mxu0 %v1199
  %v1626 = vpop.f32.mrf.mxu0
  %v1627 = vadd.f32 %v1568, %v1626
  %1628 = vmatmul.f32.gmra.mxu0 %v1201
  %v1629 = vpop.f32.mrf.mxu0
  %v1630 = vadd.f32 %v1571, %v1629
  %1631 = vmatmul.f32.gmra.mxu0 %v1203
  %v1632 = vpop.f32.mrf.mxu0
  %v1633 = vadd.f32 %v1574, %v1632
  %1634 = vmatmul.f32.gmra.mxu0 %v1205
  %v1635 = vpop.f32.mrf.mxu0
  %v1636 = vadd.f32 %v1577, %v1635
  %1637 = vmatmul.f32.gmra.mxu0 %v1207
  %v1638 = vpop.f32.mrf.mxu0
  %v1639 = vadd.f32 %v1580, %v1638
  %1640 = vmatmul.f32.gmra.mxu0 %v1209
  %v1641 = vpop.f32.mrf.mxu0
  %v1642 = vadd.f32 %v1583, %v1641
  %1643 = vmatmul.f32.gmra.mxu0 %v1211
  %v1644 = vpop.f32.mrf.mxu0
  %v1645 = vadd.f32 %v1586, %v1644
  %1646 = vmatmul.f32.gmra.mxu0 %v1213
  %v1647 = vpop.f32.mrf.mxu0
  %v1648 = vadd.f32 %v1589, %v1647
  %1649 = vmatmul.f32.gmra.mxu0 %v1215
  %v1650 = vpop.f32.mrf.mxu0
  %v1651 = vadd.f32 %v1592, %v1650
  %1652 = vmatmul.f32.gmra.mxu0 %v1217
  %v1653 = vpop.f32.mrf.mxu0
  %v1654 = vadd.f32 %v1595, %v1653
  %1655 = vmatmul.f32.gmra.mxu0 %v1216
  %v1656 = vpop.f32.mrf.mxu0
  %v1657 = vadd.f32 %v1598, %v1656
  %1658 = vdwg.mxu0
  %1659 = vmatpush.msra.mxu0 %v1442
  %1660 = vmatpush.msra.mxu0 %v1440
  %1661 = vmatpush.msra.mxu0 %v1438
  %1662 = vmatpush.msra.mxu0 %v1436
  %1663 = vmatpush.msra.mxu0 %v1434
  %1664 = vmatpush.msra.mxu0 %v1432
  %1665 = vmatpush.msra.mxu0 %v1430
  %1666 = vmatpush.msra.mxu0 %v1428
  %1667 = vmatpush.msra.mxu0 %v1426
  %1668 = vmatpush.msra.mxu0 %v1424
  %1669 = vmatpush.msra.mxu0 %v1422
  %1670 = vmatpush.msra.mxu0 %v1420
  %1671 = vmatpush.msra.mxu0 %v1418
  %1672 = vmatpush.msra.mxu0 %v1416
  %1673 = vmatpush.msra.mxu0 %v1414
  %1674 = vmatpush.msra.mxu0 %v1412
  %1675 = vmatmul.f32.gmra.mxu0 %v1235
  %v1676 = vpop.f32.mrf.mxu0
  %v1677 = vadd.f32 %v1618, %v1676
  %1678 = vmatmul.f32.gmra.mxu0 %v1237
  %v1679 = vpop.f32.mrf.mxu0
  %v1680 = vadd.f32 %v1621, %v1679
  %1681 = vmatmul.f32.gmra.mxu0 %v1239
  %v1682 = vpop.f32.mrf.mxu0
  %v1683 = vadd.f32 %v1624, %v1682
  %1684 = vmatmul.f32.gmra.mxu0 %v1241
  %v1685 = vpop.f32.mrf.mxu0
  %v1686 = vadd.f32 %v1627, %v1685
  %1687 = vmatmul.f32.gmra.mxu0 %v1243
  %v1688 = vpop.f32.mrf.mxu0
  %v1689 = vadd.f32 %v1630, %v1688
  %1690 = vmatmul.f32.gmra.mxu0 %v1245
  %v1691 = vpop.f32.mrf.mxu0
  %v1692 = vadd.f32 %v1633, %v1691
  %1693 = vmatmul.f32.gmra.mxu0 %v1247
  %v1694 = vpop.f32.mrf.mxu0
  %v1695 = vadd.f32 %v1636, %v1694
  %1696 = vmatmul.f32.gmra.mxu0 %v1249
  %v1697 = vpop.f32.mrf.mxu0
  %v1698 = vadd.f32 %v1639, %v1697
  %1699 = vmatmul.f32.gmra.mxu0 %v1251
  %v1700 = vpop.f32.mrf.mxu0
  %v1701 = vadd.f32 %v1642, %v1700
  %1702 = vmatmul.f32.gmra.mxu0 %v1253
  %v1703 = vpop.f32.mrf.mxu0
  %v1704 = vadd.f32 %v1645, %v1703
  %1705 = vmatmul.f32.gmra.mxu0 %v1255
  %v1706 = vpop.f32.mrf.mxu0
  %v1707 = vadd.f32 %v1648, %v1706
  %1708 = vmatmul.f32.gmra.mxu0 %v1257
  %v1709 = vpop.f32.mrf.mxu0
  %v1710 = vadd.f32 %v1651, %v1709
  %1711 = vmatmul.f32.gmra.mxu0 %v1259
  %v1712 = vpop.f32.mrf.mxu0
  %v1713 = vadd.f32 %v1654, %v1712
  %1714 = vmatmul.f32.gmra.mxu0 %v1258
  %v1715 = vpop.f32.mrf.mxu0
  %v1716 = vadd.f32 %v1657, %v1715
  %1717 = vdwg.mxu0
  %1718 = vmatpush.msra.mxu0 %v1474
  %1719 = vmatpush.msra.mxu0 %v1472
  %1720 = vmatpush.msra.mxu0 %v1470
  %1721 = vmatpush.msra.mxu0 %v1468
  %1722 = vmatpush.msra.mxu0 %v1466
  %1723 = vmatpush.msra.mxu0 %v1464
  %1724 = vmatpush.msra.mxu0 %v1462
  %1725 = vmatpush.msra.mxu0 %v1460
  %1726 = vmatpush.msra.mxu0 %v1458
  %1727 = vmatpush.msra.mxu0 %v1456
  %1728 = vmatpush.msra.mxu0 %v1454
  %1729 = vmatpush.msra.mxu0 %v1452
  %1730 = vmatpush.msra.mxu0 %v1450
  %1731 = vmatpush.msra.mxu0 %v1448
  %1732 = vmatpush.msra.mxu0 %v1446
  %1733 = vmatpush.msra.mxu0 %v1444
  %1734 = vmatmul.f32.gmra.mxu0 %v1277
  %v1735 = vpop.f32.mrf.mxu0
  %v1736 = vadd.f32 %v1677, %v1735
  %1737 = vmatmul.f32.gmra.mxu0 %v1279
  %v1738 = vpop.f32.mrf.mxu0
  %v1739 = vadd.f32 %v1680, %v1738
  %1740 = vmatmul.f32.gmra.mxu0 %v1281
  %v1741 = vpop.f32.mrf.mxu0
  %v1742 = vadd.f32 %v1683, %v1741
  %1743 = vmatmul.f32.gmra.mxu0 %v1283
  %v1744 = vpop.f32.mrf.mxu0
  %v1745 = vadd.f32 %v1686, %v1744
  %1746 = vmatmul.f32.gmra.mxu0 %v1285
  %v1747 = vpop.f32.mrf.mxu0
  %v1748 = vadd.f32 %v1689, %v1747
  %1749 = vmatmul.f32.gmra.mxu0 %v1287
  %v1750 = vpop.f32.mrf.mxu0
  %v1751 = vadd.f32 %v1692, %v1750
  %1752 = vmatmul.f32.gmra.mxu0 %v1289
  %v1753 = vpop.f32.mrf.mxu0
  %v1754 = vadd.f32 %v1695, %v1753
  %1755 = vmatmul.f32.gmra.mxu0 %v1291
  %v1756 = vpop.f32.mrf.mxu0
  %v1757 = vadd.f32 %v1698, %v1756
  %1758 = vmatmul.f32.gmra.mxu0 %v1293
  %v1759 = vpop.f32.mrf.mxu0
  %v1760 = vadd.f32 %v1701, %v1759
  %1761 = vmatmul.f32.gmra.mxu0 %v1295
  %v1762 = vpop.f32.mrf.mxu0
  %v1763 = vadd.f32 %v1704, %v1762
  %1764 = vmatmul.f32.gmra.mxu0 %v1297
  %v1765 = vpop.f32.mrf.mxu0
  %v1766 = vadd.f32 %v1707, %v1765
  %1767 = vmatmul.f32.gmra.mxu0 %v1299
  %v1768 = vpop.f32.mrf.mxu0
  %v1769 = vadd.f32 %v1710, %v1768
  %1770 = vmatmul.f32.gmra.mxu0 %v1301
  %v1771 = vpop.f32.mrf.mxu0
  %v1772 = vadd.f32 %v1713, %v1771
  %1773 = vmatmul.f32.gmra.mxu0 %v1300
  %v1774 = vpop.f32.mrf.mxu0
  %v1775 = vadd.f32 %v1716, %v1774
  %1776 = vdwg.mxu0
  %1777 = vmatpush.msra.mxu0 %v1347
  %1778 = vmatpush.msra.mxu0 %v1345
  %1779 = vmatpush.msra.mxu0 %v1343
  %1780 = vmatpush.msra.mxu0 %v1341
  %1781 = vmatpush.msra.mxu0 %v1339
  %1782 = vmatpush.msra.mxu0 %v1337
  %1783 = vmatpush.msra.mxu0 %v1335
  %1784 = vmatpush.msra.mxu0 %v1333
  %1785 = vmatpush.msra.mxu0 %v1331
  %1786 = vmatpush.msra.mxu0 %v1329
  %1787 = vmatpush.msra.mxu0 %v1327
  %1788 = vmatpush.msra.mxu0 %v1325
  %1789 = vmatpush.msra.mxu0 %v1323
  %1790 = vmatpush.msra.mxu0 %v1321
  %1791 = vmatpush.msra.mxu0 %v1319
  %1792 = vmatpush.msra.mxu0 %v1317
  %1793 = vmatmul.f32.gmra.mxu0 %v1120
  %v1794 = vpop.f32.mrf.mxu0
  %v1795 = vadd.f32 %v1479, %v1794
  %1796 = vmatmul.f32.gmra.mxu0 %v1121
  %v1797 = vpop.f32.mrf.mxu0
  %v1798 = vadd.f32 %v1479, %v1797
  %1799 = vmatmul.f32.gmra.mxu0 %v1122
  %v1800 = vpop.f32.mrf.mxu0
  %v1801 = vadd.f32 %v1479, %v1800
  %1802 = vmatmul.f32.gmra.mxu0 %v1123
  %v1803 = vpop.f32.mrf.mxu0
  %v1804 = vadd.f32 %v1479, %v1803
  %1805 = vmatmul.f32.gmra.mxu0 %v1124
  %v1806 = vpop.f32.mrf.mxu0
  %v1807 = vadd.f32 %v1479, %v1806
  %1808 = vmatmul.f32.gmra.mxu0 %v1125
  %v1809 = vpop.f32.mrf.mxu0
  %v1810 = vadd.f32 %v1479, %v1809
  %1811 = vmatmul.f32.gmra.mxu0 %v1126
  %v1812 = vpop.f32.mrf.mxu0
  %v1813 = vadd.f32 %v1479, %v1812
  %1814 = vmatmul.f32.gmra.mxu0 %v1127
  %v1815 = vpop.f32.mrf.mxu0
  %v1816 = vadd.f32 %v1479, %v1815
  %1817 = vmatmul.f32.gmra.mxu0 %v1128
  %v1818 = vpop.f32.mrf.mxu0
  %v1819 = vadd.f32 %v1479, %v1818
  %1820 = vmatmul.f32.gmra.mxu0 %v1129
  %v1821 = vpop.f32.mrf.mxu0
  %v1822 = vadd.f32 %v1479, %v1821
  %1823 = vmatmul.f32.gmra.mxu0 %v1130
  %v1824 = vpop.f32.mrf.mxu0
  %v1825 = vadd.f32 %v1479, %v1824
  %1826 = vmatmul.f32.gmra.mxu0 %v1131
  %v1827 = vpop.f32.mrf.mxu0
  %v1828 = vadd.f32 %v1479, %v1827
  %1829 = vmatmul.f32.gmra.mxu0 %v1132
  %v1830 = vpop.f32.mrf.mxu0
  %v1831 = vadd.f32 %v1479, %v1830
  %1832 = vmatmul.f32.gmra.mxu0 %v1133
  %v1833 = vpop.f32.mrf.mxu0
  %v1834 = vadd.f32 %v1479, %v1833
  %1835 = vdwg.mxu0
  %1836 = vmatpush.msra.mxu0 %v1379
  %1837 = vmatpush.msra.mxu0 %v1377
  %1838 = vmatpush.msra.mxu0 %v1375
  %1839 = vmatpush.msra.mxu0 %v1373
  %1840 = vmatpush.msra.mxu0 %v1371
  %1841 = vmatpush.msra.mxu0 %v1369
  %1842 = vmatpush.msra.mxu0 %v1367
  %1843 = vmatpush.msra.mxu0 %v1365
  %1844 = vmatpush.msra.mxu0 %v1363
  %1845 = vmatpush.msra.mxu0 %v1361
  %1846 = vmatpush.msra.mxu0 %v1359
  %1847 = vmatpush.msra.mxu0 %v1357
  %1848 = vmatpush.msra.mxu0 %v1355
  %1849 = vmatpush.msra.mxu0 %v1353
  %1850 = vmatpush.msra.mxu0 %v1351
  %1851 = vmatpush.msra.mxu0 %v1349
  %1852 = vmatmul.f32.gmra.mxu0 %v1151
  %v1853 = vpop.f32.mrf.mxu0
  %v1854 = vadd.f32 %v1795, %v1853
  %1855 = vmatmul.f32.gmra.mxu0 %v1153
  %v1856 = vpop.f32.mrf.mxu0
  %v1857 = vadd.f32 %v1798, %v1856
  %1858 = vmatmul.f32.gmra.mxu0 %v1155
  %v1859 = vpop.f32.mrf.mxu0
  %v1860 = vadd.f32 %v1801, %v1859
  %1861 = vmatmul.f32.gmra.mxu0 %v1157
  %v1862 = vpop.f32.mrf.mxu0
  %v1863 = vadd.f32 %v1804, %v1862
  %1864 = vmatmul.f32.gmra.mxu0 %v1159
  %v1865 = vpop.f32.mrf.mxu0
  %v1866 = vadd.f32 %v1807, %v1865
  %1867 = vmatmul.f32.gmra.mxu0 %v1161
  %v1868 = vpop.f32.mrf.mxu0
  %v1869 = vadd.f32 %v1810, %v1868
  %1870 = vmatmul.f32.gmra.mxu0 %v1163
  %v1871 = vpop.f32.mrf.mxu0
  %v1872 = vadd.f32 %v1813, %v1871
  %1873 = vmatmul.f32.gmra.mxu0 %v1165
  %v1874 = vpop.f32.mrf.mxu0
  %v1875 = vadd.f32 %v1816, %v1874
  %1876 = vmatmul.f32.gmra.mxu0 %v1167
  %v1877 = vpop.f32.mrf.mxu0
  %v1878 = vadd.f32 %v1819, %v1877
  %1879 = vmatmul.f32.gmra.mxu0 %v1169
  %v1880 = vpop.f32.mrf.mxu0
  %v1881 = vadd.f32 %v1822, %v1880
  %1882 = vmatmul.f32.gmra.mxu0 %v1171
  %v1883 = vpop.f32.mrf.mxu0
  %v1884 = vadd.f32 %v1825, %v1883
  %1885 = vmatmul.f32.gmra.mxu0 %v1173
  %v1886 = vpop.f32.mrf.mxu0
  %v1887 = vadd.f32 %v1828, %v1886
  %1888 = vmatmul.f32.gmra.mxu0 %v1175
  %v1889 = vpop.f32.mrf.mxu0
  %v1890 = vadd.f32 %v1831, %v1889
  %1891 = vmatmul.f32.gmra.mxu0 %v1174
  %v1892 = vpop.f32.mrf.mxu0
  %v1893 = vadd.f32 %v1834, %v1892
  %1894 = vdwg.mxu0
  %1895 = vmatpush.msra.mxu0 %v1411
  %1896 = vmatpush.msra.mxu0 %v1409
  %1897 = vmatpush.msra.mxu0 %v1407
  %1898 = vmatpush.msra.mxu0 %v1405
  %1899 = vmatpush.msra.mxu0 %v1403
  %1900 = vmatpush.msra.mxu0 %v1401
  %1901 = vmatpush.msra.mxu0 %v1399
  %1902 = vmatpush.msra.mxu0 %v1397
  %1903 = vmatpush.msra.mxu0 %v1395
  %1904 = vmatpush.msra.mxu0 %v1393
  %1905 = vmatpush.msra.mxu0 %v1391
  %1906 = vmatpush.msra.mxu0 %v1389
  %1907 = vmatpush.msra.mxu0 %v1387
  %1908 = vmatpush.msra.mxu0 %v1385
  %1909 = vmatpush.msra.mxu0 %v1383
  %1910 = vmatpush.msra.mxu0 %v1381
  %1911 = vmatmul.f32.gmra.mxu0 %v1193
  %v1912 = vpop.f32.mrf.mxu0
  %v1913 = vadd.f32 %v1854, %v1912
  %1914 = vmatmul.f32.gmra.mxu0 %v1195
  %v1915 = vpop.f32.mrf.mxu0
  %v1916 = vadd.f32 %v1857, %v1915
  %1917 = vmatmul.f32.gmra.mxu0 %v1197
  %v1918 = vpop.f32.mrf.mxu0
  %v1919 = vadd.f32 %v1860, %v1918
  %1920 = vmatmul.f32.gmra.mxu0 %v1199
  %v1921 = vpop.f32.mrf.mxu0
  %v1922 = vadd.f32 %v1863, %v1921
  %1923 = vmatmul.f32.gmra.mxu0 %v1201
  %v1924 = vpop.f32.mrf.mxu0
  %v1925 = vadd.f32 %v1866, %v1924
  %1926 = vmatmul.f32.gmra.mxu0 %v1203
  %v1927 = vpop.f32.mrf.mxu0
  %v1928 = vadd.f32 %v1869, %v1927
  %1929 = vmatmul.f32.gmra.mxu0 %v1205
  %v1930 = vpop.f32.mrf.mxu0
  %v1931 = vadd.f32 %v1872, %v1930
  %1932 = vmatmul.f32.gmra.mxu0 %v1207
  %v1933 = vpop.f32.mrf.mxu0
  %v1934 = vadd.f32 %v1875, %v1933
  %1935 = vmatmul.f32.gmra.mxu0 %v1209
  %v1936 = vpop.f32.mrf.mxu0
  %v1937 = vadd.f32 %v1878, %v1936
  %1938 = vmatmul.f32.gmra.mxu0 %v1211
  %v1939 = vpop.f32.mrf.mxu0
  %v1940 = vadd.f32 %v1881, %v1939
  %1941 = vmatmul.f32.gmra.mxu0 %v1213
  %v1942 = vpop.f32.mrf.mxu0
  %v1943 = vadd.f32 %v1884, %v1942
  %1944 = vmatmul.f32.gmra.mxu0 %v1215
  %v1945 = vpop.f32.mrf.mxu0
  %v1946 = vadd.f32 %v1887, %v1945
  %1947 = vmatmul.f32.gmra.mxu0 %v1217
  %v1948 = vpop.f32.mrf.mxu0
  %v1949 = vadd.f32 %v1890, %v1948
  %1950 = vmatmul.f32.gmra.mxu0 %v1216
  %v1951 = vpop.f32.mrf.mxu0
  %v1952 = vadd.f32 %v1893, %v1951
  %1953 = vdwg.mxu0
  %1954 = vmatpush.msra.mxu0 %v1443
  %1955 = vmatpush.msra.mxu0 %v1441
  %1956 = vmatpush.msra.mxu0 %v1439
  %1957 = vmatpush.msra.mxu0 %v1437
  %1958 = vmatpush.msra.mxu0 %v1435
  %1959 = vmatpush.msra.mxu0 %v1433
  %1960 = vmatpush.msra.mxu0 %v1431
  %1961 = vmatpush.msra.mxu0 %v1429
  %1962 = vmatpush.msra.mxu0 %v1427
  %1963 = vmatpush.msra.mxu0 %v1425
  %1964 = vmatpush.msra.mxu0 %v1423
  %1965 = vmatpush.msra.mxu0 %v1421
  %1966 = vmatpush.msra.mxu0 %v1419
  %1967 = vmatpush.msra.mxu0 %v1417
  %1968 = vmatpush.msra.mxu0 %v1415
  %1969 = vmatpush.msra.mxu0 %v1413
  %1970 = vmatmul.f32.gmra.mxu0 %v1235
  %v1971 = vpop.f32.mrf.mxu0
  %v1972 = vadd.f32 %v1913, %v1971
  %1973 = vmatmul.f32.gmra.mxu0 %v1237
  %v1974 = vpop.f32.mrf.mxu0
  %v1975 = vadd.f32 %v1916, %v1974
  %1976 = vmatmul.f32.gmra.mxu0 %v1239
  %v1977 = vpop.f32.mrf.mxu0
  %v1978 = vadd.f32 %v1919, %v1977
  %1979 = vmatmul.f32.gmra.mxu0 %v1241
  %v1980 = vpop.f32.mrf.mxu0
  %v1981 = vadd.f32 %v1922, %v1980
  %1982 = vmatmul.f32.gmra.mxu0 %v1243
  %v1983 = vpop.f32.mrf.mxu0
  %v1984 = vadd.f32 %v1925, %v1983
  %1985 = vmatmul.f32.gmra.mxu0 %v1245
  %v1986 = vpop.f32.mrf.mxu0
  %v1987 = vadd.f32 %v1928, %v1986
  %1988 = vmatmul.f32.gmra.mxu0 %v1247
  %v1989 = vpop.f32.mrf.mxu0
  %v1990 = vadd.f32 %v1931, %v1989
  %1991 = vmatmul.f32.gmra.mxu0 %v1249
  %v1992 = vpop.f32.mrf.mxu0
  %v1993 = vadd.f32 %v1934, %v1992
  %1994 = vmatmul.f32.gmra.mxu0 %v1251
  %v1995 = vpop.f32.mrf.mxu0
  %v1996 = vadd.f32 %v1937, %v1995
  %1997 = vmatmul.f32.gmra.mxu0 %v1253
  %v1998 = vpop.f32.mrf.mxu0
  %v1999 = vadd.f32 %v1940, %v1998
  %2000 = vmatmul.f32.gmra.mxu0 %v1255
  %v2001 = vpop.f32.mrf.mxu0
  %v2002 = vadd.f32 %v1943, %v2001
  %2003 = vmatmul.f32.gmra.mxu0 %v1257
  %v2004 = vpop.f32.mrf.mxu0
  %v2005 = vadd.f32 %v1946, %v2004
  %2006 = vmatmul.f32.gmra.mxu0 %v1259
  %v2007 = vpop.f32.mrf.mxu0
  %v2008 = vadd.f32 %v1949, %v2007
  %2009 = vmatmul.f32.gmra.mxu0 %v1258
  %v2010 = vpop.f32.mrf.mxu0
  %v2011 = vadd.f32 %v1952, %v2010
  %2012 = vdwg.mxu0
  %2013 = vmatpush.msra.mxu0 %v1475
  %2014 = vmatpush.msra.mxu0 %v1473
  %2015 = vmatpush.msra.mxu0 %v1471
  %2016 = vmatpush.msra.mxu0 %v1469
  %2017 = vmatpush.msra.mxu0 %v1467
  %2018 = vmatpush.msra.mxu0 %v1465
  %2019 = vmatpush.msra.mxu0 %v1463
  %2020 = vmatpush.msra.mxu0 %v1461
  %2021 = vmatpush.msra.mxu0 %v1459
  %2022 = vmatpush.msra.mxu0 %v1457
  %2023 = vmatpush.msra.mxu0 %v1455
  %2024 = vmatpush.msra.mxu0 %v1453
  %2025 = vmatpush.msra.mxu0 %v1451
  %2026 = vmatpush.msra.mxu0 %v1449
  %2027 = vmatpush.msra.mxu0 %v1447
  %2028 = vmatpush.msra.mxu0 %v1445
  %2029 = vmatmul.f32.gmra.mxu0 %v1277
  %v2030 = vpop.f32.mrf.mxu0
  %v2031 = vadd.f32 %v1972, %v2030
  %2032 = vmatmul.f32.gmra.mxu0 %v1279
  %v2033 = vpop.f32.mrf.mxu0
  %v2034 = vadd.f32 %v1975, %v2033
  %2035 = vmatmul.f32.gmra.mxu0 %v1281
  %v2036 = vpop.f32.mrf.mxu0
  %v2037 = vadd.f32 %v1978, %v2036
  %2038 = vmatmul.f32.gmra.mxu0 %v1283
  %v2039 = vpop.f32.mrf.mxu0
  %v2040 = vadd.f32 %v1981, %v2039
  %2041 = vmatmul.f32.gmra.mxu0 %v1285
  %v2042 = vpop.f32.mrf.mxu0
  %v2043 = vadd.f32 %v1984, %v2042
  %2044 = vmatmul.f32.gmra.mxu0 %v1287
  %v2045 = vpop.f32.mrf.mxu0
  %v2046 = vadd.f32 %v1987, %v2045
  %2047 = vmatmul.f32.gmra.mxu0 %v1289
  %v2048 = vpop.f32.mrf.mxu0
  %v2049 = vadd.f32 %v1990, %v2048
  %2050 = vmatmul.f32.gmra.mxu0 %v1291
  %v2051 = vpop.f32.mrf.mxu0
  %v2052 = vadd.f32 %v1993, %v2051
  %2053 = vmatmul.f32.gmra.mxu0 %v1293
  %v2054 = vpop.f32.mrf.mxu0
  %v2055 = vadd.f32 %v1996, %v2054
  %2056 = vmatmul.f32.gmra.mxu0 %v1295
  %v2057 = vpop.f32.mrf.mxu0
  %v2058 = vadd.f32 %v1999, %v2057
  %2059 = vmatmul.f32.gmra.mxu0 %v1297
  %v2060 = vpop.f32.mrf.mxu0
  %v2061 = vadd.f32 %v2002, %v2060
  %2062 = vmatmul.f32.gmra.mxu0 %v1299
  %v2063 = vpop.f32.mrf.mxu0
  %v2064 = vadd.f32 %v2005, %v2063
  %2065 = vmatmul.f32.gmra.mxu0 %v1301
  %v2066 = vpop.f32.mrf.mxu0
  %v2067 = vadd.f32 %v2008, %v2066
  %2068 = vmatmul.f32.gmra.mxu0 %v1300
  %v2069 = vpop.f32.mrf.mxu0
  %v2070 = vadd.f32 %v2011, %v2069
  %2071 = vdwg.mxu0
  %v2072 = vmax.f32 %v1736, 0.0
  %v2073 = vmax.f32 %v2031, 0.0
  %v2074 = vmax.f32 %v1739, 0.0
  %v2075 = vmax.f32 %v2034, 0.0
  %v2076 = vmax.f32 %v1742, 0.0
  %v2077 = vmax.f32 %v2037, 0.0
  %v2078 = vmax.f32 %v1745, 0.0
  %v2079 = vmax.f32 %v2040, 0.0
  %v2080 = vmax.f32 %v1748, 0.0
  %v2081 = vmax.f32 %v2043, 0.0
  %v2082 = vmax.f32 %v1751, 0.0
  %v2083 = vmax.f32 %v2046, 0.0
  %v2084 = vmax.f32 %v1754, 0.0
  %v2085 = vmax.f32 %v2049, 0.0
  %v2086 = vmax.f32 %v1757, 0.0
  %v2087 = vmax.f32 %v2052, 0.0
  %v2088 = vmax.f32 %v1760, 0.0
  %v2089 = vmax.f32 %v2055, 0.0
  %v2090 = vmax.f32 %v1763, 0.0
  %v2091 = vmax.f32 %v2058, 0.0
  %v2092 = vmax.f32 %v1766, 0.0
  %v2093 = vmax.f32 %v2061, 0.0
  %v2094 = vmax.f32 %v1769, 0.0
  %v2095 = vmax.f32 %v2064, 0.0
  %v2096 = vmax.f32 %v1772, 0.0
  %v2097 = vmax.f32 %v2067, 0.0
  %v2098 = vmax.f32 %v1775, 0.0
  %v2099 = vmax.f32 %v2070, 0.0
  %v2128 = vrot.slane %v2072, 1
  %v2129 = vrot.slane %v2074, 1
  %v2130 = vsel %vm1148, %v2128, %v2129
  %v2131 = vrot.slane %v2073, 1
  %v2132 = vrot.slane %v2075, 1
  %v2133 = vsel %vm1148, %v2131, %v2132
  %v2134 = vrot.slane %v2076, 1
  %v2135 = vsel %vm1148, %v2129, %v2134
  %v2136 = vrot.slane %v2077, 1
  %v2137 = vsel %vm1148, %v2132, %v2136
  %v2138 = vrot.slane %v2078, 1
  %v2139 = vsel %vm1148, %v2134, %v2138
  %v2140 = vrot.slane %v2079, 1
  %v2141 = vsel %vm1148, %v2136, %v2140
  %v2142 = vrot.slane %v2080, 1
  %v2143 = vsel %vm1148, %v2138, %v2142
  %v2144 = vrot.slane %v2081, 1
  %v2145 = vsel %vm1148, %v2140, %v2144
  %v2146 = vrot.slane %v2082, 1
  %v2147 = vsel %vm1148, %v2142, %v2146
  %v2148 = vrot.slane %v2083, 1
  %v2149 = vsel %vm1148, %v2144, %v2148
  %v2150 = vrot.slane %v2084, 1
  %v2151 = vsel %vm1148, %v2146, %v2150
  %v2152 = vrot.slane %v2085, 1
  %v2153 = vsel %vm1148, %v2148, %v2152
  %v2154 = vrot.slane %v2086, 1
  %v2155 = vsel %vm1148, %v2150, %v2154
  %v2156 = vrot.slane %v2087, 1
  %v2157 = vsel %vm1148, %v2152, %v2156
  %v2158 = vrot.slane %v2088, 1
  %v2159 = vsel %vm1148, %v2154, %v2158
  %v2160 = vrot.slane %v2089, 1
  %v2161 = vsel %vm1148, %v2156, %v2160
  %v2162 = vrot.slane %v2090, 1
  %v2163 = vsel %vm1148, %v2158, %v2162
  %v2164 = vrot.slane %v2091, 1
  %v2165 = vsel %vm1148, %v2160, %v2164
  %v2166 = vrot.slane %v2092, 1
  %v2167 = vsel %vm1148, %v2162, %v2166
  %v2168 = vrot.slane %v2093, 1
  %v2169 = vsel %vm1148, %v2164, %v2168
  %v2170 = vrot.slane %v2094, 1
  %v2171 = vsel %vm1148, %v2166, %v2170
  %v2172 = vrot.slane %v2095, 1
  %v2173 = vsel %vm1148, %v2168, %v2172
  %v2174 = vrot.slane %v2096, 1
  %v2175 = vsel %vm1148, %v2170, %v2174
  %v2176 = vrot.slane %v2097, 1
  %v2177 = vsel %vm1148, %v2172, %v2176
  %v2178 = vrot.slane %v2098, 1
  %v2179 = vsel %vm1148, %v2174, %v2178
  %v2180 = vrot.slane %v2099, 1
  %v2181 = vsel %vm1148, %v2176, %v2180
  %v2210 = vmax.f32 %v2072, %v2130
  %v2211 = vmax.f32 %v2073, %v2133
  %v2212 = vmax.f32 %v2074, %v2135
  %v2213 = vmax.f32 %v2075, %v2137
  %v2214 = vmax.f32 %v2076, %v2139
  %v2215 = vmax.f32 %v2077, %v2141
  %v2216 = vmax.f32 %v2078, %v2143
  %v2217 = vmax.f32 %v2079, %v2145
  %v2218 = vmax.f32 %v2080, %v2147
  %v2219 = vmax.f32 %v2081, %v2149
  %v2220 = vmax.f32 %v2082, %v2151
  %v2221 = vmax.f32 %v2083, %v2153
  %v2222 = vmax.f32 %v2084, %v2155
  %v2223 = vmax.f32 %v2085, %v2157
  %v2224 = vmax.f32 %v2086, %v2159
  %v2225 = vmax.f32 %v2087, %v2161
  %v2226 = vmax.f32 %v2088, %v2163
  %v2227 = vmax.f32 %v2089, %v2165
  %v2228 = vmax.f32 %v2090, %v2167
  %v2229 = vmax.f32 %v2091, %v2169
  %v2230 = vmax.f32 %v2092, %v2171
  %v2231 = vmax.f32 %v2093, %v2173
  %v2232 = vmax.f32 %v2094, %v2175
  %v2233 = vmax.f32 %v2095, %v2177
  %v2234 = vmax.f32 %v2096, %v2179
  %v2235 = vmax.f32 %v2097, %v2181
  %v2236 = vmax.f32 %v2098, %v2178
  %v2237 = vmax.f32 %v2099, %v2180
  %v2238 = vld [vmem:[%s8] sm:$0xff]
  %v2239 = vld [vmem:[%s8 + $0x8] sm:$0xff]
  %v2240 = vld [vmem:[%s8 + $0x10] sm:$0xff]
  %v2241 = vld [vmem:[%s8 + $0x18] sm:$0xff]
  %v2242 = vld [vmem:[%s8 + $0x20] sm:$0xff]
  %v2243 = vld [vmem:[%s8 + $0x28] sm:$0xff]
  %v2244 = vld [vmem:[%s8 + $0x30] sm:$0xff]
  %v2245 = vld [vmem:[%s8 + $0x38] sm:$0xff]
  %v2246 = vld [vmem:[%s8 + $0x40] sm:$0xff]
  %v2247 = vld [vmem:[%s8 + $0x48] sm:$0xff]
  %v2248 = vld [vmem:[%s8 + $0x50] sm:$0xff]
  %v2249 = vld [vmem:[%s8 + $0x58] sm:$0xff]
  %v2250 = vld [vmem:[%s8 + $0x60] sm:$0xff]
  %v2251 = vld [vmem:[%s8 + $0x68] sm:$0xff]
  %v2252 = vld [vmem:[%s8 + $0x70] sm:$0xff]
  %v2253 = vld [vmem:[%s8 + $0x78] sm:$0xff]
  %v2254 = vld [vmem:[%s8 + $0x80] sm:$0xff]
  %v2255 = vld [vmem:[%s8 + $0x88] sm:$0xff]
  %v2256 = vld [vmem:[%s8 + $0x90] sm:$0xff]
  %v2257 = vld [vmem:[%s8 + $0x98] sm:$0xff]
  %v2259 = vsel %vm130, %v2211, 0
  %v2262 = vsel %vm130, %v2213, 0
  %v2265 = vsel %vm130, %v2215, 0
  %v2268 = vsel %vm130, %v2217, 0
  %v2271 = vsel %vm130, %v2219, 0
  %v2274 = vsel %vm130, %v2221, 0
  %v2277 = vsel %vm130, %v2223, 0
  %v2280 = vsel %vm130, %v2225, 0
  %v2283 = vsel %vm130, %v2227, 0
  %v2286 = vsel %vm130, %v2229, 0
  %v2289 = vsel %vm130, %v2231, 0
  %v2292 = vsel %vm130, %v2233, 0
  %v2295 = vsel %vm130, %v2235, 0
  %v2298 = vsel %vm130, %v2237, 0
  %2300 = vmatpush.msra.mxu0 %v2253
  %2301 = vmatpush.msra.mxu0 %v2252
  %2302 = vmatpush.msra.mxu0 %v2251
  %2303 = vmatpush.msra.mxu0 %v2250
  %2304 = vmatpush.msra.mxu0 %v2249
  %2305 = vmatpush.msra.mxu0 %v2248
  %2306 = vmatpush.msra.mxu0 %v2247
  %2307 = vmatpush.msra.mxu0 %v2246
  %2308 = vmatpush.msra.mxu0 %v2245
  %2309 = vmatpush.msra.mxu0 %v2244
  %2310 = vmatpush.msra.mxu0 %v2243
  %2311 = vmatpush.msra.mxu0 %v2242
  %2312 = vmatpush.msra.mxu0 %v2241
  %2313 = vmatpush.msra.mxu0 %v2240
  %2314 = vmatpush.msra.mxu0 %v2239
  %2315 = vmatpush.msra.mxu0 %v2238
  %2316 = vmatmul.f32.gmra.mxu0 %v2210
  %v2317 = vpop.f32.mrf.mxu0
  %v2318 = vadd.f32 0.0, %v2317
  %2319 = vmatmul.f32.gmra.mxu0 %v2212
  %v2320 = vpop.f32.mrf.mxu0
  %v2321 = vadd.f32 0.0, %v2320
  %2322 = vmatmul.f32.gmra.mxu0 %v2214
  %v2323 = vpop.f32.mrf.mxu0
  %v2324 = vadd.f32 0.0, %v2323
  %2325 = vmatmul.f32.gmra.mxu0 %v2216
  %v2326 = vpop.f32.mrf.mxu0
  %v2327 = vadd.f32 0.0, %v2326
  %2328 = vmatmul.f32.gmra.mxu0 %v2218
  %v2329 = vpop.f32.mrf.mxu0
  %v2330 = vadd.f32 0.0, %v2329
  %2331 = vmatmul.f32.gmra.mxu0 %v2220
  %v2332 = vpop.f32.mrf.mxu0
  %v2333 = vadd.f32 0.0, %v2332
  %2334 = vmatmul.f32.gmra.mxu0 %v2222
  %v2335 = vpop.f32.mrf.mxu0
  %v2336 = vadd.f32 0.0, %v2335
  %2337 = vmatmul.f32.gmra.mxu0 %v2224
  %v2338 = vpop.f32.mrf.mxu0
  %v2339 = vadd.f32 0.0, %v2338
  %2340 = vmatmul.f32.gmra.mxu0 %v2226
  %v2341 = vpop.f32.mrf.mxu0
  %v2342 = vadd.f32 0.0, %v2341
  %2343 = vmatmul.f32.gmra.mxu0 %v2228
  %v2344 = vpop.f32.mrf.mxu0
  %v2345 = vadd.f32 0.0, %v2344
  %2346 = vmatmul.f32.gmra.mxu0 %v2230
  %v2347 = vpop.f32.mrf.mxu0
  %v2348 = vadd.f32 0.0, %v2347
  %2349 = vmatmul.f32.gmra.mxu0 %v2232
  %v2350 = vpop.f32.mrf.mxu0
  %v2351 = vadd.f32 0.0, %v2350
  %2352 = vmatmul.f32.gmra.mxu0 %v2234
  %v2353 = vpop.f32.mrf.mxu0
  %v2354 = vadd.f32 0.0, %v2353
  %2355 = vmatmul.f32.gmra.mxu0 %v2236
  %v2356 = vpop.f32.mrf.mxu0
  %v2357 = vadd.f32 0.0, %v2356
  %2358 = vdwg.mxu0
  %2359 = vmatpush.msra.mxu0 0.0
  %2360 = vmatpush.msra.mxu0 0.0
  %2361 = vmatpush.msra.mxu0 0.0
  %2362 = vmatpush.msra.mxu0 0.0
  %2363 = vmatpush.msra.mxu0 0.0
  %2364 = vmatpush.msra.mxu0 0.0
  %2365 = vmatpush.msra.mxu0 0.0
  %2366 = vmatpush.msra.mxu0 0.0
  %2367 = vmatpush.msra.mxu0 0.0
  %2368 = vmatpush.msra.mxu0 0.0
  %2369 = vmatpush.msra.mxu0 0.0
  %2370 = vmatpush.msra.mxu0 0.0
  %2371 = vmatpush.msra.mxu0 %v2257
  %2372 = vmatpush.msra.mxu0 %v2256
  %2373 = vmatpush.msra.mxu0 %v2255
  %2374 = vmatpush.msra.mxu0 %v2254
  %2375 = vmatmul.f32.gmra.mxu0 %v2259
  %v2376 = vpop.f32.mrf.mxu0
  %v2377 = vadd.f32 %v2318, %v2376
  %2378 = vmatmul.f32.gmra.mxu0 %v2262
  %v2379 = vpop.f32.mrf.mxu0
  %v2380 = vadd.f32 %v2321, %v2379
  %2381 = vmatmul.f32.gmra.mxu0 %v2265
  %v2382 = vpop.f32.mrf.mxu0
  %v2383 = vadd.f32 %v2324, %v2382
  %2384 = vmatmul.f32.gmra.mxu0 %v2268
  %v2385 = vpop.f32.mrf.mxu0
  %v2386 = vadd.f32 %v2327, %v2385
  %2387 = vmatmul.f32.gmra.mxu0 %v2271
  %v2388 = vpop.f32.mrf.mxu0
  %v2389 = vadd.f32 %v2330, %v2388
  %2390 = vmatmul.f32.gmra.mxu0 %v2274
  %v2391 = vpop.f32.mrf.mxu0
  %v2392 = vadd.f32 %v2333, %v2391
  %2393 = vmatmul.f32.gmra.mxu0 %v2277
  %v2394 = vpop.f32.mrf.mxu0
  %v2395 = vadd.f32 %v2336, %v2394
  %2396 = vmatmul.f32.gmra.mxu0 %v2280
  %v2397 = vpop.f32.mrf.mxu0
  %v2398 = vadd.f32 %v2339, %v2397
  %2399 = vmatmul.f32.gmra.mxu0 %v2283
  %v2400 = vpop.f32.mrf.mxu0
  %v2401 = vadd.f32 %v2342, %v2400
  %2402 = vmatmul.f32.gmra.mxu0 %v2286
  %v2403 = vpop.f32.mrf.mxu0
  %v2404 = vadd.f32 %v2345, %v2403
  %2405 = vmatmul.f32.gmra.mxu0 %v2289
  %v2406 = vpop.f32.mrf.mxu0
  %v2407 = vadd.f32 %v2348, %v2406
  %2408 = vmatmul.f32.gmra.mxu0 %v2292
  %v2409 = vpop.f32.mrf.mxu0
  %v2410 = vadd.f32 %v2351, %v2409
  %2411 = vmatmul.f32.gmra.mxu0 %v2295
  %v2412 = vpop.f32.mrf.mxu0
  %v2413 = vadd.f32 %v2354, %v2412
  %2414 = vmatmul.f32.gmra.mxu0 %v2298
  %v2415 = vpop.f32.mrf.mxu0
  %v2416 = vadd.f32 %v2357, %v2415
  %2417 = vdwg.mxu0
  %v2418 = vld [vmem:[%s9] sm:$0xff]
  %v2419 = vld [vmem:[%s9 + $0x8] sm:$0xff]
  %v2420 = vld [vmem:[%s9 + $0x10] sm:$0xff]
  %v2421 = vld [vmem:[%s9 + $0x18] sm:$0xff]
  %v2422 = vld [vmem:[%s9 + $0x20] sm:$0xff]
  %v2423 = vld [vmem:[%s9 + $0x28] sm:$0xff]
  %v2424 = vld [vmem:[%s9 + $0x30] sm:$0xff]
  %v2425 = vld [vmem:[%s9 + $0x38] sm:$0xff]
  %v2426 = vld [vmem:[%s9 + $0x40] sm:$0xff]
  %v2427 = vld [vmem:[%s9 + $0x48] sm:$0xff]
  %v2428 = vld [vmem:[%s9 + $0x50] sm:$0xff]
  %v2429 = vld [vmem:[%s9 + $0x58] sm:$0xff]
  %v2430 = vld [vmem:[%s9 + $0x60] sm:$0xff]
  %v2431 = vld [vmem:[%s9 + $0x68] sm:$0xff]
  %v2432 = vld [vmem:[%s9 + $0x70] sm:$0xff]
  %v2433 = vld [vmem:[%s9 + $0x78] sm:$0xff]
  %v2434 = vld [vmem:[%s9 + $0x80] sm:$0xff]
  %v2435 = vld [vmem:[%s9 + $0x88] sm:$0xff]
  %v2436 = vld [vmem:[%s9 + $0x90] sm:$0xff]
  %v2437 = vld [vmem:[%s9 + $0x98] sm:$0xff]
  %2438 = vmatpush.msra.mxu0 %v2433
  %2439 = vmatpush.msra.mxu0 %v2432
  %2440 = vmatpush.msra.mxu0 %v2431
  %2441 = vmatpush.msra.mxu0 %v2430
  %2442 = vmatpush.msra.mxu0 %v2429
  %2443 = vmatpush.msra.mxu0 %v2428
  %2444 = vmatpush.msra.mxu0 %v2427
  %2445 = vmatpush.msra.mxu0 %v2426
  %2446 = vmatpush.msra.mxu0 %v2425
  %2447 = vmatpush.msra.mxu0 %v2424
  %2448 = vmatpush.msra.mxu0 %v2423
  %2449 = vmatpush.msra.mxu0 %v2422
  %2450 = vmatpush.msra.mxu0 %v2421
  %2451 = vmatpush.msra.mxu0 %v2420
  %2452 = vmatpush.msra.mxu0 %v2419
  %2453 = vmatpush.msra.mxu0 %v2418
  %2454 = vmatmul.f32.gmra.mxu0 %v2210
  %v2455 = vpop.f32.mrf.mxu0
  %v2456 = vadd.f32 0.0, %v2455
  %2457 = vmatmul.f32.gmra.mxu0 %v2212
  %v2458 = vpop.f32.mrf.mxu0
  %v2459 = vadd.f32 0.0, %v2458
  %2460 = vmatmul.f32.gmra.mxu0 %v2214
  %v2461 = vpop.f32.mrf.mxu0
  %v2462 = vadd.f32 0.0, %v2461
  %2463 = vmatmul.f32.gmra.mxu0 %v2216
  %v2464 = vpop.f32.mrf.mxu0
  %v2465 = vadd.f32 0.0, %v2464
  %2466 = vmatmul.f32.gmra.mxu0 %v2218
  %v2467 = vpop.f32.mrf.mxu0
  %v2468 = vadd.f32 0.0, %v2467
  %2469 = vmatmul.f32.gmra.mxu0 %v2220
  %v2470 = vpop.f32.mrf.mxu0
  %v2471 = vadd.f32 0.0, %v2470
  %2472 = vmatmul.f32.gmra.mxu0 %v2222
  %v2473 = vpop.f32.mrf.mxu0
  %v2474 = vadd.f32 0.0, %v2473
  %2475 = vmatmul.f32.gmra.mxu0 %v2224
  %v2476 = vpop.f32.mrf.mxu0
  %v2477 = vadd.f32 0.0, %v2476
  %2478 = vmatmul.f32.gmra.mxu0 %v2226
  %v2479 = vpop.f32.mrf.mxu0
  %v2480 = vadd.f32 0.0, %v2479
  %2481 = vmatmul.f32.gmra.mxu0 %v2228
  %v2482 = vpop.f32.mrf.mxu0
  %v2483 = vadd.f32 0.0, %v2482
  %2484 = vmatmul.f32.gmra.mxu0 %v2230
  %v2485 = vpop.f32.mrf.mxu0
  %v2486 = vadd.f32 0.0, %v2485
  %2487 = vmatmul.f32.gmra.mxu0 %v2232
  %v2488 = vpop.f32.mrf.mxu0
  %v2489 = vadd.f32 0.0, %v2488
  %2490 = vmatmul.f32.gmra.mxu0 %v2234
  %v2491 = vpop.f32.mrf.mxu0
  %v2492 = vadd.f32 0.0, %v2491
  %2493 = vmatmul.f32.gmra.mxu0 %v2236
  %v2494 = vpop.f32.mrf.mxu0
  %v2495 = vadd.f32 0.0, %v2494
  %2496 = vdwg.mxu0
  %2497 = vmatpush.msra.mxu0 0.0
  %2498 = vmatpush.msra.mxu0 0.0
  %2499 = vmatpush.msra.mxu0 0.0
  %2500 = vmatpush.msra.mxu0 0.0
  %2501 = vmatpush.msra.mxu0 0.0
  %2502 = vmatpush.msra.mxu0 0.0
  %2503 = vmatpush.msra.mxu0 0.0
  %2504 = vmatpush.msra.mxu0 0.0
  %2505 = vmatpush.msra.mxu0 0.0
  %2506 = vmatpush.msra.mxu0 0.0
  %2507 = vmatpush.msra.mxu0 0.0
  %2508 = vmatpush.msra.mxu0 0.0
  %2509 = vmatpush.msra.mxu0 %v2437
  %2510 = vmatpush.msra.mxu0 %v2436
  %2511 = vmatpush.msra.mxu0 %v2435
  %2512 = vmatpush.msra.mxu0 %v2434
  %2513 = vmatmul.f32.gmra.mxu0 %v2259
  %v2514 = vpop.f32.mrf.mxu0
  %v2515 = vadd.f32 %v2456, %v2514
  %2516 = vmatmul.f32.gmra.mxu0 %v2262
  %v2517 = vpop.f32.mrf.mxu0
  %v2518 = vadd.f32 %v2459, %v2517
  %2519 = vmatmul.f32.gmra.mxu0 %v2265
  %v2520 = vpop.f32.mrf.mxu0
  %v2521 = vadd.f32 %v2462, %v2520
  %2522 = vmatmul.f32.gmra.mxu0 %v2268
  %v2523 = vpop.f32.mrf.mxu0
  %v2524 = vadd.f32 %v2465, %v2523
  %2525 = vmatmul.f32.gmra.mxu0 %v2271
  %v2526 = vpop.f32.mrf.mxu0
  %v2527 = vadd.f32 %v2468, %v2526
  %2528 = vmatmul.f32.gmra.mxu0 %v2274
  %v2529 = vpop.f32.mrf.mxu0
  %v2530 = vadd.f32 %v2471, %v2529
  %2531 = vmatmul.f32.gmra.mxu0 %v2277
  %v2532 = vpop.f32.mrf.mxu0
  %v2533 = vadd.f32 %v2474, %v2532
  %2534 = vmatmul.f32.gmra.mxu0 %v2280
  %v2535 = vpop.f32.mrf.mxu0
  %v2536 = vadd.f32 %v2477, %v2535
  %2537 = vmatmul.f32.gmra.mxu0 %v2283
  %v2538 = vpop.f32.mrf.mxu0
  %v2539 = vadd.f32 %v2480, %v2538
  %2540 = vmatmul.f32.gmra.mxu0 %v2286
  %v2541 = vpop.f32.mrf.mxu0
  %v2542 = vadd.f32 %v2483, %v2541
  %2543 = vmatmul.f32.gmra.mxu0 %v2289
  %v2544 = vpop.f32.mrf.mxu0
  %v2545 = vadd.f32 %v2486, %v2544
  %2546 = vmatmul.f32.gmra.mxu0 %v2292
  %v2547 = vpop.f32.mrf.mxu0
  %v2548 = vadd.f32 %v2489, %v2547
  %2549 = vmatmul.f32.gmra.mxu0 %v2295
  %v2550 = vpop.f32.mrf.mxu0
  %v2551 = vadd.f32 %v2492, %v2550
  %2552 = vmatmul.f32.gmra.mxu0 %v2298
  %v2553 = vpop.f32.mrf.mxu0
  %v2554 = vadd.f32 %v2495, %v2553
  %2555 = vdwg.mxu0
  %v2556 = vmax.f32 %v2377, %v2515
  %v2557 = vmax.f32 %v2380, %v2518
  %v2558 = vmax.f32 %v2383, %v2521
  %v2559 = vmax.f32 %v2386, %v2524
  %v2560 = vmax.f32 %v2389, %v2527
  %v2561 = vmax.f32 %v2392, %v2530
  %v2562 = vmax.f32 %v2395, %v2533
  %v2563 = vmax.f32 %v2398, %v2536
  %v2564 = vmax.f32 %v2401, %v2539
  %v2565 = vmax.f32 %v2404, %v2542
  %v2566 = vmax.f32 %v2407, %v2545
  %v2567 = vmax.f32 %v2410, %v2548
  %v2568 = vmax.f32 %v2413, %v2551
  %v2569 = vmax.f32 %v2416, %v2554
  %v2570 = vld [vmem:[%s10] sm:$0xff]
  %vm2571 = vcmask 875520
  %v2573 = vsel %vm2571, %v2570, 0
  %vm2575 = vcmask 1042432
  %v2577 = vsel %vm2575, %v2569, 0
  %2579 = vmatpush.msra.mxu0 0.0
  %2580 = vmatpush.msra.mxu0 0.0
  %2581 = vmatpush.msra.mxu0 %v2577
  %2582 = vmatpush.msra.mxu0 %v2568
  %2583 = vmatpush.msra.mxu0 %v2567
  %2584 = vmatpush.msra.mxu0 %v2566
  %2585 = vmatpush.msra.mxu0 %v2565
  %2586 = vmatpush.msra.mxu0 %v2564
  %2587 = vmatpush.msra.mxu0 %v2563
  %2588 = vmatpush.msra.mxu0 %v2562
  %2589 = vmatpush.msra.mxu0 %v2561
  %2590 = vmatpush.msra.mxu0 %v2560
  %2591 = vmatpush.msra.mxu0 %v2559
  %2592 = vmatpush.msra.mxu0 %v2558
  %2593 = vmatpush.msra.mxu0 %v2557
  %2594 = vmatpush.msra.mxu0 %v2556
  %2595 = vmatmul.f32.gmra.mxu0 %v2573
  %v2596 = vpop.f32.mrf.mxu0
  %v2597 = vadd.f32 0.0, %v2596
  %2598 = vdwg.mxu0
  %s2599 = scalar_lea.vmem %s10, 8
  %v2600 = vld [vmem:[%s2599] sm:$0xff]
  %v2602 = vsel %vm2571, %v2600, 0
  %2604 = vmatpush.msra.mxu0 0.0
  %2605 = vmatpush.msra.mxu0 0.0
  %2606 = vmatpush.msra.mxu0 %v2577
  %2607 = vmatpush.msra.mxu0 %v2568
  %2608 = vmatpush.msra.mxu0 %v2567
  %2609 = vmatpush.msra.mxu0 %v2566
  %2610 = vmatpush.msra.mxu0 %v2565
  %2611 = vmatpush.msra.mxu0 %v2564
  %2612 = vmatpush.msra.mxu0 %v2563
  %2613 = vmatpush.msra.mxu0 %v2562
  %2614 = vmatpush.msra.mxu0 %v2561
  %2615 = vmatpush.msra.mxu0 %v2560
  %2616 = vmatpush.msra.mxu0 %v2559
  %2617 = vmatpush.msra.mxu0 %v2558
  %2618 = vmatpush.msra.mxu0 %v2557
  %2619 = vmatpush.msra.mxu0 %v2556
  %2620 = vmatmul.f32.gmra.mxu0 %v2602
  %v2621 = vpop.f32.mrf.mxu0
  %v2622 = vadd.f32 0.0, %v2621
  %2623 = vdwg.mxu0
  %s2624 = scalar_lea.vmem %s10, 16
  %v2625 = vld [vmem:[%s2624] sm:$0xff]
  %v2627 = vsel %vm2571, %v2625, 0
  %2629 = vmatpush.msra.mxu0 0.0
  %2630 = vmatpush.msra.mxu0 0.0
  %2631 = vmatpush.msra.mxu0 %v2577
  %2632 = vmatpush.msra.mxu0 %v2568
  %2633 = vmatpush.msra.mxu0 %v2567
  %2634 = vmatpush.msra.mxu0 %v2566
  %2635 = vmatpush.msra.mxu0 %v2565
  %2636 = vmatpush.msra.mxu0 %v2564
  %2637 = vmatpush.msra.mxu0 %v2563
  %2638 = vmatpush.msra.mxu0 %v2562
  %2639 = vmatpush.msra.mxu0 %v2561
  %2640 = vmatpush.msra.mxu0 %v2560
  %2641 = vmatpush.msra.mxu0 %v2559
  %2642 = vmatpush.msra.mxu0 %v2558
  %2643 = vmatpush.msra.mxu0 %v2557
  %2644 = vmatpush.msra.mxu0 %v2556
  %2645 = vmatmul.f32.gmra.mxu0 %v2627
  %v2646 = vpop.f32.mrf.mxu0
  %v2647 = vadd.f32 0.0, %v2646
  %2648 = vdwg.mxu0
  %s2649 = scalar_lea.vmem %s10, 24
  %v2650 = vld [vmem:[%s2649] sm:$0xff]
  %v2652 = vsel %vm2571, %v2650, 0
  %2654 = vmatpush.msra.mxu0 0.0
  %2655 = vmatpush.msra.mxu0 0.0
  %2656 = vmatpush.msra.mxu0 %v2577
  %2657 = vmatpush.msra.mxu0 %v2568
  %2658 = vmatpush.msra.mxu0 %v2567
  %2659 = vmatpush.msra.mxu0 %v2566
  %2660 = vmatpush.msra.mxu0 %v2565
  %2661 = vmatpush.msra.mxu0 %v2564
  %2662 = vmatpush.msra.mxu0 %v2563
  %2663 = vmatpush.msra.mxu0 %v2562
  %2664 = vmatpush.msra.mxu0 %v2561
  %2665 = vmatpush.msra.mxu0 %v2560
  %2666 = vmatpush.msra.mxu0 %v2559
  %2667 = vmatpush.msra.mxu0 %v2558
  %2668 = vmatpush.msra.mxu0 %v2557
  %2669 = vmatpush.msra.mxu0 %v2556
  %2670 = vmatmul.f32.gmra.mxu0 %v2652
  %v2671 = vpop.f32.mrf.mxu0
  %v2672 = vadd.f32 0.0, %v2671
  %2673 = vdwg.mxu0
  %s2674 = scalar_lea.vmem %s10, 32
  %v2675 = vld [vmem:[%s2674] sm:$0xff]
  %v2677 = vsel %vm2571, %v2675, 0
  %2679 = vmatpush.msra.mxu0 0.0
  %2680 = vmatpush.msra.mxu0 0.0
  %2681 = vmatpush.msra.mxu0 %v2577
  %2682 = vmatpush.msra.mxu0 %v2568
  %2683 = vmatpush.msra.mxu0 %v2567
  %2684 = vmatpush.msra.mxu0 %v2566
  %2685 = vmatpush.msra.mxu0 %v2565
  %2686 = vmatpush.msra.mxu0 %v2564
  %2687 = vmatpush.msra.mxu0 %v2563
  %2688 = vmatpush.msra.mxu0 %v2562
  %2689 = vmatpush.msra.mxu0 %v2561
  %2690 = vmatpush.msra.mxu0 %v2560
  %2691 = vmatpush.msra.mxu0 %v2559
  %2692 = vmatpush.msra.mxu0 %v2558
  %2693 = vmatpush.msra.mxu0 %v2557
  %2694 = vmatpush.msra.mxu0 %v2556
  %2695 = vmatmul.f32.gmra.mxu0 %v2677
  %v2696 = vpop.f32.mrf.mxu0
  %v2697 = vadd.f32 0.0, %v2696
  %2698 = vdwg.mxu0
  %v2699 = vld [vmem:[%s11] sm:$0xff]
  %v2700 = vld [vmem:[%s11 + $0x8] sm:$0xff]
  %v2701 = vld [vmem:[%s11 + $0x10] sm:$0xff]
  %v2702 = vld [vmem:[%s11 + $0x18] sm:$0xff]
  %v2703 = vld [vmem:[%s11 + $0x20] sm:$0xff]
  %v2704 = vld [vmem:[%s11 + $0x28] sm:$0xff]
  %v2705 = vld [vmem:[%s11 + $0x30] sm:$0xff]
  %v2706 = vld [vmem:[%s11 + $0x38] sm:$0xff]
  %v2707 = vld [vmem:[%s11 + $0x40] sm:$0xff]
  %v2708 = vld [vmem:[%s11 + $0x48] sm:$0xff]
  %v2709 = vld [vmem:[%s11 + $0x50] sm:$0xff]
  %v2710 = vld [vmem:[%s11 + $0x58] sm:$0xff]
  %v2711 = vld [vmem:[%s11 + $0x60] sm:$0xff]
  %v2712 = vld [vmem:[%s11 + $0x68] sm:$0xff]
  %v2713 = vld [vmem:[%s11 + $0x70] sm:$0xff]
  %v2714 = vld [vmem:[%s11 + $0x78] sm:$0xff]
  %v2715 = vld [vmem:[%s11 + $0x80] sm:$0xff]
  %v2716 = vld [vmem:[%s11 + $0x88] sm:$0xff]
  %v2717 = vld [vmem:[%s11 + $0x90] sm:$0xff]
  %v2718 = vld [vmem:[%s11 + $0x98] sm:$0xff]
  %v2719 = vld [vmem:[%s11 + $0xa0] sm:$0xff]
  %v2720 = vld [vmem:[%s11 + $0xa8] sm:$0xff]
  %v2721 = vld [vmem:[%s11 + $0xb0] sm:$0xff]
  %v2722 = vld [vmem:[%s11 + $0xb8] sm:$0xff]
  %v2723 = vld [vmem:[%s11 + $0xc0] sm:$0xff]
  %v2724 = vld [vmem:[%s11 + $0xc8] sm:$0xff]
  %v2725 = vld [vmem:[%s11 + $0xd0] sm:$0xff]
  %v2726 = vld [vmem:[%s11 + $0xd8] sm:$0xff]
  %v2727 = vld [vmem:[%s11 + $0xe0] sm:$0xff]
  %v2728 = vld [vmem:[%s11 + $0xe8] sm:$0xff]
  %v2729 = vld [vmem:[%s11 + $0xf0] sm:$0xff]
  %v2730 = vld [vmem:[%s11 + $0xf8] sm:$0xff]
  %v2731 = vld [vmem:[%s11 + $0x100] sm:$0xff]
  %v2732 = vld [vmem:[%s11 + $0x108] sm:$0xff]
  %v2733 = vld [vmem:[%s11 + $0x110] sm:$0xff]
  %v2734 = vld [vmem:[%s11 + $0x118] sm:$0xff]
  %v2735 = vld [vmem:[%s11 + $0x120] sm:$0xff]
  %v2736 = vld [vmem:[%s11 + $0x128] sm:$0xff]
  %v2737 = vld [vmem:[%s11 + $0x130] sm:$0xff]
  %v2738 = vld [vmem:[%s11 + $0x138] sm:$0xff]
  %v2739 = vld [vmem:[%s11 + $0x140] sm:$0xff]
  %v2740 = vld [vmem:[%s11 + $0x148] sm:$0xff]
  %v2741 = vld [vmem:[%s11 + $0x150] sm:$0xff]
  %v2742 = vld [vmem:[%s11 + $0x158] sm:$0xff]
  %v2743 = vld [vmem:[%s11 + $0x160] sm:$0xff]
  %v2744 = vld [vmem:[%s11 + $0x168] sm:$0xff]
  %v2745 = vld [vmem:[%s11 + $0x170] sm:$0xff]
  %v2746 = vld [vmem:[%s11 + $0x178] sm:$0xff]
  %v2747 = vld [vmem:[%s11 + $0x180] sm:$0xff]
  %v2748 = vld [vmem:[%s11 + $0x188] sm:$0xff]
  %v2749 = vld [vmem:[%s11 + $0x190] sm:$0xff]
  %v2750 = vld [vmem:[%s11 + $0x198] sm:$0xff]
  %v2751 = vld [vmem:[%s11 + $0x1a0] sm:$0xff]
  %v2752 = vld [vmem:[%s11 + $0x1a8] sm:$0xff]
  %v2753 = vld [vmem:[%s11 + $0x1b0] sm:$0xff]
  %v2754 = vld [vmem:[%s11 + $0x1b8] sm:$0xff]
  %v2755 = vld [vmem:[%s11 + $0x1c0] sm:$0xff]
  %v2756 = vld [vmem:[%s11 + $0x1c8] sm:$0xff]
  %v2757 = vld [vmem:[%s11 + $0x1d0] sm:$0xff]
  %v2758 = vld [vmem:[%s11 + $0x1d8] sm:$0xff]
  %v2759 = vld [vmem:[%s11 + $0x1e0] sm:$0xff]
  %v2760 = vld [vmem:[%s11 + $0x1e8] sm:$0xff]
  %v2761 = vld [vmem:[%s11 + $0x1f0] sm:$0xff]
  %v2762 = vld [vmem:[%s11 + $0x1f8] sm:$0xff]
  %v2763 = vld [vmem:[%s11 + $0x200] sm:$0xff]
  %v2764 = vld [vmem:[%s11 + $0x208] sm:$0xff]
  %v2765 = vld [vmem:[%s11 + $0x210] sm:$0xff]
  %v2766 = vld [vmem:[%s11 + $0x218] sm:$0xff]
  %v2767 = vld [vmem:[%s11 + $0x220] sm:$0xff]
  %v2768 = vld [vmem:[%s11 + $0x228] sm:$0xff]
  %v2769 = vld [vmem:[%s11 + $0x230] sm:$0xff]
  %v2770 = vld [vmem:[%s11 + $0x238] sm:$0xff]
  %v2771 = vld [vmem:[%s11 + $0x240] sm:$0xff]
  %v2772 = vld [vmem:[%s11 + $0x248] sm:$0xff]
  %v2773 = vld [vmem:[%s11 + $0x250] sm:$0xff]
  %v2774 = vld [vmem:[%s11 + $0x258] sm:$0xff]
  %v2775 = vld [vmem:[%s11 + $0x260] sm:$0xff]
  %v2776 = vld [vmem:[%s11 + $0x268] sm:$0xff]
  %v2777 = vld [vmem:[%s11 + $0x270] sm:$0xff]
  %v2778 = vld [vmem:[%s11 + $0x278] sm:$0xff]
  %v2779 = vld [vmem:[%s12] sm:$0x1]
  %v2781 = vperm.slane %v2779, 0
  %2783 = vmatpush.msra.mxu0 %v2714
  %2784 = vmatpush.msra.mxu0 %v2713
  %2785 = vmatpush.msra.mxu0 %v2712
  %2786 = vmatpush.msra.mxu0 %v2711
  %2787 = vmatpush.msra.mxu0 %v2710
  %2788 = vmatpush.msra.mxu0 %v2709
  %2789 = vmatpush.msra.mxu0 %v2708
  %2790 = vmatpush.msra.mxu0 %v2707
  %2791 = vmatpush.msra.mxu0 %v2706
  %2792 = vmatpush.msra.mxu0 %v2705
  %2793 = vmatpush.msra.mxu0 %v2704
  %2794 = vmatpush.msra.mxu0 %v2703
  %2795 = vmatpush.msra.mxu0 %v2702
  %2796 = vmatpush.msra.mxu0 %v2701
  %2797 = vmatpush.msra.mxu0 %v2700
  %2798 = vmatpush.msra.mxu0 %v2699
  %2799 = vmatmul.f32.gmra.mxu0 %v2597
  %v2800 = vpop.f32.mrf.mxu0
  %v2801 = vadd.f32 %v2781, %v2800
  %2802 = vdwg.mxu0
  %2803 = vmatpush.msra.mxu0 %v2730
  %2804 = vmatpush.msra.mxu0 %v2729
  %2805 = vmatpush.msra.mxu0 %v2728
  %2806 = vmatpush.msra.mxu0 %v2727
  %2807 = vmatpush.msra.mxu0 %v2726
  %2808 = vmatpush.msra.mxu0 %v2725
  %2809 = vmatpush.msra.mxu0 %v2724
  %2810 = vmatpush.msra.mxu0 %v2723
  %2811 = vmatpush.msra.mxu0 %v2722
  %2812 = vmatpush.msra.mxu0 %v2721
  %2813 = vmatpush.msra.mxu0 %v2720
  %2814 = vmatpush.msra.mxu0 %v2719
  %2815 = vmatpush.msra.mxu0 %v2718
  %2816 = vmatpush.msra.mxu0 %v2717
  %2817 = vmatpush.msra.mxu0 %v2716
  %2818 = vmatpush.msra.mxu0 %v2715
  %2819 = vmatmul.f32.gmra.mxu0 %v2622
  %v2820 = vpop.f32.mrf.mxu0
  %v2821 = vadd.f32 %v2801, %v2820
  %2822 = vdwg.mxu0
  %2823 = vmatpush.msra.mxu0 %v2746
  %2824 = vmatpush.msra.mxu0 %v2745
  %2825 = vmatpush.msra.mxu0 %v2744
  %2826 = vmatpush.msra.mxu0 %v2743
  %2827 = vmatpush.msra.mxu0 %v2742
  %2828 = vmatpush.msra.mxu0 %v2741
  %2829 = vmatpush.msra.mxu0 %v2740
  %2830 = vmatpush.msra.mxu0 %v2739
  %2831 = vmatpush.msra.mxu0 %v2738
  %2832 = vmatpush.msra.mxu0 %v2737
  %2833 = vmatpush.msra.mxu0 %v2736
  %2834 = vmatpush.msra.mxu0 %v2735
  %2835 = vmatpush.msra.mxu0 %v2734
  %2836 = vmatpush.msra.mxu0 %v2733
  %2837 = vmatpush.msra.mxu0 %v2732
  %2838 = vmatpush.msra.mxu0 %v2731
  %2839 = vmatmul.f32.gmra.mxu0 %v2647
  %v2840 = vpop.f32.mrf.mxu0
  %v2841 = vadd.f32 %v2821, %v2840
  %2842 = vdwg.mxu0
  %2843 = vmatpush.msra.mxu0 %v2762
  %2844 = vmatpush.msra.mxu0 %v2761
  %2845 = vmatpush.msra.mxu0 %v2760
  %2846 = vmatpush.msra.mxu0 %v2759
  %2847 = vmatpush.msra.mxu0 %v2758
  %2848 = vmatpush.msra.mxu0 %v2757
  %2849 = vmatpush.msra.mxu0 %v2756
  %2850 = vmatpush.msra.mxu0 %v2755
  %2851 = vmatpush.msra.mxu0 %v2754
  %2852 = vmatpush.msra.mxu0 %v2753
  %2853 = vmatpush.msra.mxu0 %v2752
  %2854 = vmatpush.msra.mxu0 %v2751
  %2855 = vmatpush.msra.mxu0 %v2750
  %2856 = vmatpush.msra.mxu0 %v2749
  %2857 = vmatpush.msra.mxu0 %v2748
  %2858 = vmatpush.msra.mxu0 %v2747
  %2859 = vmatmul.f32.gmra.mxu0 %v2672
  %v2860 = vpop.f32.mrf.mxu0
  %v2861 = vadd.f32 %v2841, %v2860
  %2862 = vdwg.mxu0
  %2863 = vmatpush.msra.mxu0 %v2778
  %2864 = vmatpush.msra.mxu0 %v2777
  %2865 = vmatpush.msra.mxu0 %v2776
  %2866 = vmatpush.msra.mxu0 %v2775
  %2867 = vmatpush.msra.mxu0 %v2774
  %2868 = vmatpush.msra.mxu0 %v2773
  %2869 = vmatpush.msra.mxu0 %v2772
  %2870 = vmatpush.msra.mxu0 %v2771
  %2871 = vmatpush.msra.mxu0 %v2770
  %2872 = vmatpush.msra.mxu0 %v2769
  %2873 = vmatpush.msra.mxu0 %v2768
  %2874 = vmatpush.msra.mxu0 %v2767
  %2875 = vmatpush.msra.mxu0 %v2766
  %2876 = vmatpush.msra.mxu0 %v2765
  %2877 = vmatpush.msra.mxu0 %v2764
  %2878 = vmatpush.msra.mxu0 %v2763
  %2879 = vmatmul.f32.gmra.mxu0 %v2697
  %v2880 = vpop.f32.mrf.mxu0
  %v2881 = vadd.f32 %v2861, %v2880
  %2882 = vdwg.mxu0
  %v2883 = vmax.f32 %v2881, 0.0
  %v2884 = vld [vmem:[%s13] sm:$0xff]
  %v2885 = vld [vmem:[%s13 + $0x8] sm:$0xff]
  %v2886 = vld [vmem:[%s13 + $0x10] sm:$0xff]
  %v2887 = vld [vmem:[%s13 + $0x18] sm:$0xff]
  %v2888 = vld [vmem:[%s13 + $0x20] sm:$0xff]
  %v2889 = vld [vmem:[%s13 + $0x28] sm:$0xff]
  %v2890 = vld [vmem:[%s13 + $0x30] sm:$0xff]
  %v2891 = vld [vmem:[%s13 + $0x38] sm:$0xff]
  %v2892 = vld [vmem:[%s13 + $0x40] sm:$0xff]
  %v2893 = vld [vmem:[%s13 + $0x48] sm:$0xff]
  %v2894 = vld [vmem:[%s13 + $0x50] sm:$0xff]
  %v2895 = vld [vmem:[%s13 + $0x58] sm:$0xff]
  %v2896 = vld [vmem:[%s13 + $0x60] sm:$0xff]
  %v2897 = vld [vmem:[%s13 + $0x68] sm:$0xff]
  %v2898 = vld [vmem:[%s13 + $0x70] sm:$0xff]
  %v2899 = vld [vmem:[%s14] sm:$0x1]
  %v2901 = vperm.slane %v2899, 0
  %vm2903 = vcmask 982016
  %v2905 = vsel %vm2903, %v2883, 0
  %2907 = vmatpush.msra.mxu0 0.0
  %2908 = vmatpush.msra.mxu0 %v2898
  %2909 = vmatpush.msra.mxu0 %v2897
  %2910 = vmatpush.msra.mxu0 %v2896
  %2911 = vmatpush.msra.mxu0 %v2895
  %2912 = vmatpush.msra.mxu0 %v2894
  %2913 = vmatpush.msra.mxu0 %v2893
  %2914 = vmatpush.msra.mxu0 %v2892
  %2915 = vmatpush.msra.mxu0 %v2891
  %2916 = vmatpush.msra.mxu0 %v2890
  %2917 = vmatpush.msra.mxu0 %v2889
  %2918 = vmatpush.msra.mxu0 %v2888
  %2919 = vmatpush.msra.mxu0 %v2887
  %2920 = vmatpush.msra.mxu0 %v2886
  %2921 = vmatpush.msra.mxu0 %v2885
  %2922 = vmatpush.msra.mxu0 %v2884
  %2923 = vmatmul.f32.gmra.mxu0 %v2905
  %v2924 = vpop.f32.mrf.mxu0
  %v2925 = vadd.f32 %v2901, %v2924
  %2926 = vdwg.mxu0
  %v2927 = vmax.f32 %v2925, 0.0
  %v2928 = vld [vmem:[%s15] sm:$0xff]
  %v2929 = vld [vmem:[%s15 + $0x8] sm:$0xff]
  %v2930 = vld [vmem:[%s15 + $0x10] sm:$0xff]
  %v2931 = vld [vmem:[%s15 + $0x18] sm:$0xff]
  %v2932 = vld [vmem:[%s15 + $0x20] sm:$0xff]
  %v2933 = vld [vmem:[%s15 + $0x28] sm:$0xff]
  %v2934 = vld [vmem:[%s15 + $0x30] sm:$0xff]
  %v2935 = vld [vmem:[%s15 + $0x38] sm:$0xff]
  %v2936 = vld [vmem:[%s15 + $0x40] sm:$0xff]
  %v2937 = vld [vmem:[%s15 + $0x48] sm:$0xff]
  %v2938 = vld [vmem:[%s15 + $0x50] sm:$0xf]
  %v2939 = vld [vmem:[%s16] sm:$0x1]
  %v2941 = vperm.slane %v2939, 0
  %vm2943 = vcmask 687104
  %v2945 = vsel %vm2943, %v2927, 0
  %v2948 = vsel %vm1274, %v2938, 0
  %2950 = vmatpush.msra.mxu0 0.0
  %2951 = vmatpush.msra.mxu0 0.0
  %2952 = vmatpush.msra.mxu0 0.0
  %2953 = vmatpush.msra.mxu0 0.0
  %2954 = vmatpush.msra.mxu0 0.0
  %2955 = vmatpush.msra.mxu0 %v2948
  %2956 = vmatpush.msra.mxu0 %v2937
  %2957 = vmatpush.msra.mxu0 %v2936
  %2958 = vmatpush.msra.mxu0 %v2935
  %2959 = vmatpush.msra.mxu0 %v2934
  %2960 = vmatpush.msra.mxu0 %v2933
  %2961 = vmatpush.msra.mxu0 %v2932
  %2962 = vmatpush.msra.mxu0 %v2931
  %2963 = vmatpush.msra.mxu0 %v2930
  %2964 = vmatpush.msra.mxu0 %v2929
  %2965 = vmatpush.msra.mxu0 %v2928
  %2966 = vmatmul.f32.gmra.mxu0 %v2945
  %v2967 = vpop.f32.mrf.mxu0
  %v2968 = vadd.f32 %v2941, %v2967
  %2969 = vdwg.mxu0
  %2970 = vst [vmem:[%s17] sm:$0xff] %v2968
  // Predicated region
  $region70: #{lenet_forward.1} parent=0 // pred_check
    _
  $region71: #{lenet_forward.1} parent=0 // pred_check_branch
    %2972 = sbr.rel (0) target = $region73
  $region72: #{lenet_forward.1} parent=0 // pred_region
    _
  $region73: #{lenet_forward.1} parent=0 // pred_fallthru
    _
  // Predicated region
  $region74: #{lenet_forward.1} parent=0 // pred_check
    _
  $region75: #{lenet_forward.1} parent=0 // pred_check_branch
    %2974 = sbr.rel (0) target = $region77
  $region76: #{lenet_forward.1} parent=0 // pred_region
    _
  $region77: #{lenet_forward.1} parent=0 // pred_fallthru
    _

</llo_original>
